<compile_context>
chip_gen: v7x
topology: tpu7x:2x2x1
jax: 0.10.0
libtpu: 0.0.40
codegen_flags: <defaults>
</compile_context>

<pallas_src>
import jax
import jax.numpy as jnp
from jax.experimental import pallas as pl
from jax.experimental.pallas import tpu as pltpu

BN_EPS = 1e-5
LANE = 128


def _round_up(x, m):
    return (x + m - 1) // m * m


# ---------------------------------------------------------------------------
# Generation-aware VMEM budget
# ---------------------------------------------------------------------------
_VMEM_LIMIT_CACHE = [None]


def _vmem_limit_bytes():
    """~3/4 of the physical per-core VMEM (~96 MiB v5e/v6e, ~48 MiB v7x)."""
    if _VMEM_LIMIT_CACHE[0] is None:
        cap = None
        try:
            cap = getattr(pltpu.get_tpu_info(), "vmem_capacity_bytes", None)
        except Exception:
            cap = None
        if not cap:
            cap = 64 * 1024 * 1024          # conservative (v7x-sized) fallback
        _VMEM_LIMIT_CACHE[0] = int(cap) * 3 // 4
    return _VMEM_LIMIT_CACHE[0]


def _pick_tile_rows(rows, w, cpad, coutp, vmem_limit):
    """Spatial rows per grid step, sized from the per-chip VMEM budget."""
    bytes_per_row = (
        2 * 3 * (w + 2) * cpad * 2     # three dy-shifted inputs, bf16, double-buffered
        + 2 * w * coutp * 2            # raw conv output, bf16, double-buffered
        + w * coutp * 4                # f32 accumulator
        + 2 * w * cpad * 2)            # window-load temporaries (approx.)
    fixed = 2 * 9 * cpad * coutp * 2   # 9-tap weights (double-buffered)
    budget = max(vmem_limit // 2 - fixed, 8 * bytes_per_row)
    tile_r = budget // bytes_per_row
    tile_r = min(tile_r, max(2048 // max(w, 1), 8))   # <= ~2048 matmul rows / step
    tile_r = min(tile_r, rows)
    if tile_r >= rows and rows > 1:                   # v7x megacore: >= 2 tiles
        tile_r = -(-rows // 2)
    if tile_r >= 8:
        tile_r = (tile_r // 8) * 8
    tile_r = max(int(tile_r), 1)
    if (tile_r * w) % 8 != 0 and tile_r != rows:
        tile_r = rows          # single full-extent block: no divisibility constraint
    return tile_r


# ---------------------------------------------------------------------------
# Pallas kernels
# ---------------------------------------------------------------------------
def _conv_stats_kernel(x0_ref, x1_ref, x2_ref, w_ref, raw_ref, stats_ref):
    """In-kernel im2col 3x3 conv tile + per-channel partial BN statistics.

    x{dy}_ref: (tile_r, W+2, Cpad)   bf16  dy-shifted, W/channel zero-padded rows
    w_ref    : (9, Cpad, COUTP)      bf16  taps ordered dy*3 + dx
    raw_ref  : (tile_r*W, COUTP)     bf16  raw (pre-BN) conv output
    stats_ref: (1, 2, COUTP)         f32   [sum, sum-of-squares] for this tile
    """
    tile_r, wpad, cpad = x0_ref.shape
    w_out = wpad - 2
    m = tile_r * w_out

    # acc is VMEM-resident; stats must come from the f32 acc (raw is bf16 now).
    acc = jnp.zeros((m, raw_ref.shape[-1]), jnp.float32)
    for dy, xref in enumerate((x0_ref, x1_ref, x2_ref)):
        for dx in range(3):
            win = xref[:, dx:dx + w_out, :].reshape(m, cpad)
            acc = acc + jnp.dot(win, w_ref[dy * 3 + dx],
                                preferred_element_type=jnp.float32)

    raw_ref[...] = acc.astype(raw_ref.dtype)
    # Direct slice stores (no concatenate/relayout).
    stats_ref[0, 0:1, :] = jnp.sum(acc, axis=0, keepdims=True)
    stats_ref[0, 1:2, :] = jnp.sum(acc * acc, axis=0, keepdims=True)


def _bn_relu_kernel(raw_ref, scale_ref, shift_ref, o_ref):
    """y = relu(raw * scale + shift) on a lane-dense (tile_r*W, COUTP) tile."""
    y = raw_ref[...].astype(jnp.float32) * scale_ref[...] + shift_ref[...]
    o_ref[...] = jnp.maximum(y, 0.0).astype(o_ref.dtype)


# ---------------------------------------------------------------------------
# Conv3x3 (padding=1, no bias) + BatchNorm2d (batch stats) + ReLU
# ---------------------------------------------------------------------------
def conv3x3_bn_relu(x, w, gamma, beta, *, out_dtype=jnp.float32):
    """x: (N,H,W,Cin), w: (3,3,Cin,Cout), gamma/beta: (Cout,) -> (N,H,W,Cout)."""
    N, H, W, Cin = x.shape
    Cout = w.shape[-1]
    cpad = _round_up(Cin, LANE)
    coutp = _round_up(Cout, LANE)
    rows = N * H
    vmem_limit = _vmem_limit_bytes()
    tile_r = _pick_tile_rows(rows, W, cpad, coutp, vmem_limit)
    num_tiles = -(-rows // tile_r)
    rows_p = num_tiles * tile_r
    m_valid = N * H * W
    mp = rows_p * W

    # bf16 *before* padding; build three dy-shifted row views of the padded
    # input (the in-kernel im2col handles the dx windows out of VMEM).
    xp = jnp.pad(x.astype(jnp.bfloat16),
                 ((0, 0), (1, 1), (1, 1), (0, cpad - Cin)))       # (N, H+2, W+2, cpad)
    shifted = []
    for dy in range(3):
        s = xp[:, dy:dy + H, :, :].reshape(rows, W + 2, cpad)
        shifted.append(jnp.pad(s, ((0, rows_p - rows), (0, 0), (0, 0))))

    # 9 taps stacked on a leading axis: w_mat[dy*3+dx] is (cpad, coutp), bf16.
    w_mat = jnp.pad(w.astype(jnp.bfloat16),
                    ((0, 0), (0, 0), (0, cpad - Cin), (0, coutp - Cout)))
    w_mat = w_mat.reshape(9, cpad, coutp)

    x_spec = pl.BlockSpec((tile_r, W + 2, cpad), lambda i: (i, 0, 0))
    # Constant index_map -> the block is not refetched across grid steps.
    # (pipeline_mode=pl.Buffered(1) would also single-buffer it on newer JAX.)
    w_spec = pl.BlockSpec((9, cpad, coutp), lambda i: (0, 0, 0))

    # Pass 1: conv (in-kernel im2col) + per-tile partial statistics.
    raw, stats = pl.pallas_call(
        _conv_stats_kernel,
        out_shape=(jax.ShapeDtypeStruct((mp, coutp), jnp.bfloat16),
                   jax.ShapeDtypeStruct((num_tiles, 2, coutp), jnp.float32)),
        grid_spec=pltpu.PrefetchScalarGridSpec(
            num_scalar_prefetch=0,
            grid=(num_tiles,),
            in_specs=[x_spec, x_spec, x_spec, w_spec],
            out_specs=(pl.BlockSpec((tile_r * W, coutp), lambda i: (i, 0)),
                       pl.BlockSpec((1, 2, coutp), lambda i: (i, 0, 0)))),
        compiler_params=pltpu.CompilerParams(
            dimension_semantics=("parallel",),
            vmem_limit_bytes=vmem_limit),
    )(shifted[0], shifted[1], shifted[2], w_mat)

    # Tiny per-channel reduction + BN coefficients in plain JAX.  Zero-padded
    # rows / channels contribute exactly zero, so divide by the true count.
    ssum = jnp.sum(stats[:, 0, :], axis=0)
    ssq = jnp.sum(stats[:, 1, :], axis=0)
    mean = ssum / m_valid
    # E[x^2] - mean^2 in f32, clamped >= 0 (no NaN through rsqrt; see notes on
    # cancellation when |mean| >> std — fine for conv activations in f32).
    var = jnp.maximum(ssq / m_valid - mean * mean, 0.0)
    gamma_p = jnp.pad(gamma.astype(jnp.float32), (0, coutp - Cout))
    beta_p = jnp.pad(beta.astype(jnp.float32), (0, coutp - Cout))
    scale = gamma_p * jax.lax.rsqrt(var + BN_EPS)
    shift = beta_p - mean * scale

    # Pass 2: normalize + ReLU; donate `raw` in place when dtypes match.
    alias = {0: 0} if jnp.dtype(out_dtype) == jnp.dtype(jnp.bfloat16) else {}
    y = pl.pallas_call(
        _bn_relu_kernel,
        out_shape=jax.ShapeDtypeStruct((mp, coutp), out_dtype),
        grid_spec=pltpu.PrefetchScalarGridSpec(
            num_scalar_prefetch=0,
            grid=(num_tiles,),
            in_specs=[pl.BlockSpec((tile_r * W, coutp), lambda i: (i, 0)),
                      pl.BlockSpec((1, coutp), lambda i: (0, 0)),
                      pl.BlockSpec((1, coutp), lambda i: (0, 0))],
            out_specs=pl.BlockSpec((tile_r * W, coutp), lambda i: (i, 0))),
        input_output_aliases=alias,
        compiler_params=pltpu.CompilerParams(
            dimension_semantics=("parallel",),
            vmem_limit_bytes=vmem_limit),
    )(raw, scale.reshape(1, coutp), shift.reshape(1, coutp))

    return y[:m_valid].reshape(N, H, W, coutp)[..., :Cout]


# ---------------------------------------------------------------------------
# Gather-free bilinear 2x upsample (align_corners=True), bf16 interpolation
# ---------------------------------------------------------------------------
def _interp_matrix(n_in, n_out):
    """1-D bilinear interpolation matrix (n_out, n_in), align_corners=True."""
    if n_in == 1:
        return jnp.ones((n_out, 1), jnp.float32)
    pos = jnp.arange(n_out, dtype=jnp.float32) * (n_in - 1) / max(n_out - 1, 1)
    lo = jnp.floor(pos)
    frac = pos - lo
    lo_i = lo.astype(jnp.int32)
    hi_i = jnp.minimum(lo_i + 1, n_in - 1)
    src = jnp.arange(n_in, dtype=jnp.int32)[None, :]
    return (jnp.where(src == lo_i[:, None], 1.0 - frac[:, None], 0.0)
            + jnp.where(src == hi_i[:, None], frac[:, None], 0.0))


def upsample2x_bilinear_align_corners(x):
    """nn.Upsample(scale_factor=2, mode='bilinear', align_corners=True), NHWC."""
    N, H, W, C = x.shape
    ay = _interp_matrix(H, 2 * H).astype(jnp.bfloat16)
    ax = _interp_matrix(W, 2 * W).astype(jnp.bfloat16)
    xb = x.astype(jnp.bfloat16)
    # TODO(synk): for large feature maps replace these dense interpolation
    # matmuls with a 2-tap Pallas lerp kernel (only two nonzero weights/row).
    y = jnp.einsum('ph,nhwc->npwc', ay, xb, preferred_element_type=jnp.float32)
    y = jnp.einsum('qw,npwc->npqc', ax, y.astype(jnp.bfloat16),
                   preferred_element_type=jnp.float32)
    return y.astype(jnp.bfloat16)


# ---------------------------------------------------------------------------
# Up.forward
# ---------------------------------------------------------------------------
def up_forward(x1_nchw, x2_nchw, params):
    """Up.forward(x1, x2): upsample x1, pad, concat [x2, x1], DoubleConv."""
    x1 = jnp.transpose(x1_nchw, (0, 2, 3, 1))   # NCHW -> NHWC
    x2 = jnp.transpose(x2_nchw, (0, 2, 3, 1))

    x1 = upsample2x_bilinear_align_corners(x1)  # bf16

    diff_y = x2.shape[1] - x1.shape[1]
    diff_x = x2.shape[2] - x1.shape[2]
    x1 = jnp.pad(x1, ((0, 0),
                      (diff_y // 2, diff_y - diff_y // 2),
                      (diff_x // 2, diff_x - diff_x // 2),
                      (0, 0)))

    x = jnp.concatenate([x2.astype(jnp.bfloat16), x1], axis=-1)   # cat([x2, x1], dim=1)

    # Mid activation kept in bf16 (it feeds the second conv's bf16 matmuls);
    # only the final stage output is f32.
    h = conv3x3_bn_relu(x, params["w1"], params["g1"], params["b1"],
                        out_dtype=jnp.bfloat16)
    y = conv3x3_bn_relu(h, params["w2"], params["g2"], params["b2"],
                        out_dtype=jnp.float32)

    return jnp.transpose(y, (0, 3, 1, 2))       # back to NCHW


if __name__ == "__main__":
    # Up(in_channels=8, out_channels=4, bilinear=True)
    #   -> mid_channels = in_channels // 2 = 4
    #   x1: (N, in_channels//2, H/2, W/2), x2: (N, in_channels//2, H, W)
    in_channels, out_channels = 8, 4
    mid_channels = in_channels // 2
    N, H2, W2 = 2, 16, 16
    H1, W1 = H2 // 2, W2 // 2

    key = jax.random.PRNGKey(0)
    k = jax.random.split(key, 8)
    x1 = jax.random.normal(k[0], (N, in_channels // 2, H1, W1), jnp.float32)
    x2 = jax.random.normal(k[1], (N, in_channels // 2, H2, W2), jnp.float32)

    # Deterministic synthetic parameters; conv weights stored as (kh, kw, Cin, Cout)
    # (PyTorch's (Cout, Cin, kh, kw) maps via transpose(2, 3, 1, 0)).
    params = dict(
        w1=0.1 * jax.random.normal(k[2], (3, 3, in_channels, mid_channels), jnp.float32),
        g1=1.0 + 0.1 * jax.random.normal(k[3], (mid_channels,), jnp.float32),
        b1=0.1 * jax.random.normal(k[4], (mid_channels,), jnp.float32),
        w2=0.1 * jax.random.normal(k[5], (3, 3, mid_channels, out_channels), jnp.float32),
        g2=1.0 + 0.1 * jax.random.normal(k[6], (out_channels,), jnp.float32),
        b2=0.1 * jax.random.normal(k[7], (out_channels,), jnp.float32),
    )

    out = jax.jit(up_forward)(x1, x2, params)
    jax.block_until_ready(out)
    assert out.shape == (N, out_channels, H2, W2), out.shape
    assert bool(jnp.all(jnp.isfinite(out)))
    print("KERNEL_OK")
</pallas_src>

<mosaic_0001>
module attributes {stable_mosaic.version = 11 : i64} {
  func.func @_conv_stats_kernel(%arg0: i32, %arg1: memref<16x18x128xbf16, #tpu.memory_space<vmem>>, %arg2: memref<16x18x128xbf16, #tpu.memory_space<vmem>>, %arg3: memref<16x18x128xbf16, #tpu.memory_space<vmem>>, %arg4: memref<9x128x128xbf16, #tpu.memory_space<vmem>>, %arg5: memref<256x128xbf16, #tpu.memory_space<vmem>>, %arg6: memref<1x2x128xf32, #tpu.memory_space<vmem>>) attributes {dimension_semantics = [#tpu.dimension_semantics<parallel>], iteration_bounds = array<i64: 2>, scalar_prefetch = 0 : i64, scratch_operands = 0 : i64, tpu.core_type = #tpu.core_type<tc>, window_params = [{transform_indices = @transform_0, window_bounds = array<i64: 16, 18, 128>}, {transform_indices = @transform_1, window_bounds = array<i64: 16, 18, 128>}, {transform_indices = @transform_2, window_bounds = array<i64: 16, 18, 128>}, {pipeline_mode = #tpu.pipeline_mode<synchronous>, transform_indices = @transform_3, window_bounds = array<i64: 9, 128, 128>}, {transform_indices = @transform_4, window_bounds = array<i64: 256, 128>}, {transform_indices = @transform_5, window_bounds = array<i64: 1, 2, 128>}]} {
    %cst = arith.constant 0.000000e+00 : f32
    %0 = vector.broadcast %cst : f32 to vector<256x128xf32>
    %c0 = arith.constant 0 : index
    %c0_0 = arith.constant 0 : index
    %c0_1 = arith.constant 0 : index
    %1 = vector.load %arg1[%c0, %c0_0, %c0_1] : memref<16x18x128xbf16, #tpu.memory_space<vmem>>, vector<16x16x128xbf16>
    %2 = vector.shape_cast %1 : vector<16x16x128xbf16> to vector<256x128xbf16>
    %c0_2 = arith.constant 0 : index
    %c0_3 = arith.constant 0 : index
    %c0_4 = arith.constant 0 : index
    %3 = vector.load %arg4[%c0_2, %c0_3, %c0_4] : memref<9x128x128xbf16, #tpu.memory_space<vmem>>, vector<1x128x128xbf16>
    %4 = vector.shape_cast %3 : vector<1x128x128xbf16> to vector<128x128xbf16>
    %cst_5 = arith.constant dense<0.000000e+00> : vector<256x128xf32>
    %5 = tpu.matmul %2, %4, %cst_5 {dimension_numbers = #tpu.dot_dimension_numbers<[1], [0], [0], [1], [0, 0, 1, 1], [], []>} : vector<256x128xbf16>, vector<128x128xbf16>, vector<256x128xf32> -> vector<256x128xf32>
    %6 = arith.addf %0, %5 : vector<256x128xf32>
    %c0_6 = arith.constant 0 : index
    %c1 = arith.constant 1 : index
    %c0_7 = arith.constant 0 : index
    %7 = vector.load %arg1[%c0_6, %c1, %c0_7] : memref<16x18x128xbf16, #tpu.memory_space<vmem>>, vector<16x16x128xbf16>
    %8 = vector.shape_cast %7 : vector<16x16x128xbf16> to vector<256x128xbf16>
    %c1_8 = arith.constant 1 : index
    %c0_9 = arith.constant 0 : index
    %c0_10 = arith.constant 0 : index
    %9 = vector.load %arg4[%c1_8, %c0_9, %c0_10] : memref<9x128x128xbf16, #tpu.memory_space<vmem>>, vector<1x128x128xbf16>
    %10 = vector.shape_cast %9 : vector<1x128x128xbf16> to vector<128x128xbf16>
    %cst_11 = arith.constant dense<0.000000e+00> : vector<256x128xf32>
    %11 = tpu.matmul %8, %10, %cst_11 {dimension_numbers = #tpu.dot_dimension_numbers<[1], [0], [0], [1], [0, 0, 1, 1], [], []>} : vector<256x128xbf16>, vector<128x128xbf16>, vector<256x128xf32> -> vector<256x128xf32>
    %12 = arith.addf %6, %11 : vector<256x128xf32>
    %c0_12 = arith.constant 0 : index
    %c2 = arith.constant 2 : index
    %c0_13 = arith.constant 0 : index
    %13 = vector.load %arg1[%c0_12, %c2, %c0_13] : memref<16x18x128xbf16, #tpu.memory_space<vmem>>, vector<16x16x128xbf16>
    %14 = vector.shape_cast %13 : vector<16x16x128xbf16> to vector<256x128xbf16>
    %c2_14 = arith.constant 2 : index
    %c0_15 = arith.constant 0 : index
    %c0_16 = arith.constant 0 : index
    %15 = vector.load %arg4[%c2_14, %c0_15, %c0_16] : memref<9x128x128xbf16, #tpu.memory_space<vmem>>, vector<1x128x128xbf16>
    %16 = vector.shape_cast %15 : vector<1x128x128xbf16> to vector<128x128xbf16>
    %cst_17 = arith.constant dense<0.000000e+00> : vector<256x128xf32>
    %17 = tpu.matmul %14, %16, %cst_17 {dimension_numbers = #tpu.dot_dimension_numbers<[1], [0], [0], [1], [0, 0, 1, 1], [], []>} : vector<256x128xbf16>, vector<128x128xbf16>, vector<256x128xf32> -> vector<256x128xf32>
    %18 = arith.addf %12, %17 : vector<256x128xf32>
    %c0_18 = arith.constant 0 : index
    %c0_19 = arith.constant 0 : index
    %c0_20 = arith.constant 0 : index
    %19 = vector.load %arg2[%c0_18, %c0_19, %c0_20] : memref<16x18x128xbf16, #tpu.memory_space<vmem>>, vector<16x16x128xbf16>
    %20 = vector.shape_cast %19 : vector<16x16x128xbf16> to vector<256x128xbf16>
    %c3 = arith.constant 3 : index
    %c0_21 = arith.constant 0 : index
    %c0_22 = arith.constant 0 : index
    %21 = vector.load %arg4[%c3, %c0_21, %c0_22] : memref<9x128x128xbf16, #tpu.memory_space<vmem>>, vector<1x128x128xbf16>
    %22 = vector.shape_cast %21 : vector<1x128x128xbf16> to vector<128x128xbf16>
    %cst_23 = arith.constant dense<0.000000e+00> : vector<256x128xf32>
    %23 = tpu.matmul %20, %22, %cst_23 {dimension_numbers = #tpu.dot_dimension_numbers<[1], [0], [0], [1], [0, 0, 1, 1], [], []>} : vector<256x128xbf16>, vector<128x128xbf16>, vector<256x128xf32> -> vector<256x128xf32>
    %24 = arith.addf %18, %23 : vector<256x128xf32>
    %c0_24 = arith.constant 0 : index
    %c1_25 = arith.constant 1 : index
    %c0_26 = arith.constant 0 : index
    %25 = vector.load %arg2[%c0_24, %c1_25, %c0_26] : memref<16x18x128xbf16, #tpu.memory_space<vmem>>, vector<16x16x128xbf16>
    %26 = vector.shape_cast %25 : vector<16x16x128xbf16> to vector<256x128xbf16>
    %c4 = arith.constant 4 : index
    %c0_27 = arith.constant 0 : index
    %c0_28 = arith.constant 0 : index
    %27 = vector.load %arg4[%c4, %c0_27, %c0_28] : memref<9x128x128xbf16, #tpu.memory_space<vmem>>, vector<1x128x128xbf16>
    %28 = vector.shape_cast %27 : vector<1x128x128xbf16> to vector<128x128xbf16>
    %cst_29 = arith.constant dense<0.000000e+00> : vector<256x128xf32>
    %29 = tpu.matmul %26, %28, %cst_29 {dimension_numbers = #tpu.dot_dimension_numbers<[1], [0], [0], [1], [0, 0, 1, 1], [], []>} : vector<256x128xbf16>, vector<128x128xbf16>, vector<256x128xf32> -> vector<256x128xf32>
    %30 = arith.addf %24, %29 : vector<256x128xf32>
    %c0_30 = arith.constant 0 : index
    %c2_31 = arith.constant 2 : index
    %c0_32 = arith.constant 0 : index
    %31 = vector.load %arg2[%c0_30, %c2_31, %c0_32] : memref<16x18x128xbf16, #tpu.memory_space<vmem>>, vector<16x16x128xbf16>
    %32 = vector.shape_cast %31 : vector<16x16x128xbf16> to vector<256x128xbf16>
    %c5 = arith.constant 5 : index
    %c0_33 = arith.constant 0 : index
    %c0_34 = arith.constant 0 : index
    %33 = vector.load %arg4[%c5, %c0_33, %c0_34] : memref<9x128x128xbf16, #tpu.memory_space<vmem>>, vector<1x128x128xbf16>
    %34 = vector.shape_cast %33 : vector<1x128x128xbf16> to vector<128x128xbf16>
    %cst_35 = arith.constant dense<0.000000e+00> : vector<256x128xf32>
    %35 = tpu.matmul %32, %34, %cst_35 {dimension_numbers = #tpu.dot_dimension_numbers<[1], [0], [0], [1], [0, 0, 1, 1], [], []>} : vector<256x128xbf16>, vector<128x128xbf16>, vector<256x128xf32> -> vector<256x128xf32>
    %36 = arith.addf %30, %35 : vector<256x128xf32>
    %c0_36 = arith.constant 0 : index
    %c0_37 = arith.constant 0 : index
    %c0_38 = arith.constant 0 : index
    %37 = vector.load %arg3[%c0_36, %c0_37, %c0_38] : memref<16x18x128xbf16, #tpu.memory_space<vmem>>, vector<16x16x128xbf16>
    %38 = vector.shape_cast %37 : vector<16x16x128xbf16> to vector<256x128xbf16>
    %c6 = arith.constant 6 : index
    %c0_39 = arith.constant 0 : index
    %c0_40 = arith.constant 0 : index
    %39 = vector.load %arg4[%c6, %c0_39, %c0_40] : memref<9x128x128xbf16, #tpu.memory_space<vmem>>, vector<1x128x128xbf16>
    %40 = vector.shape_cast %39 : vector<1x128x128xbf16> to vector<128x128xbf16>
    %cst_41 = arith.constant dense<0.000000e+00> : vector<256x128xf32>
    %41 = tpu.matmul %38, %40, %cst_41 {dimension_numbers = #tpu.dot_dimension_numbers<[1], [0], [0], [1], [0, 0, 1, 1], [], []>} : vector<256x128xbf16>, vector<128x128xbf16>, vector<256x128xf32> -> vector<256x128xf32>
    %42 = arith.addf %36, %41 : vector<256x128xf32>
    %c0_42 = arith.constant 0 : index
    %c1_43 = arith.constant 1 : index
    %c0_44 = arith.constant 0 : index
    %43 = vector.load %arg3[%c0_42, %c1_43, %c0_44] : memref<16x18x128xbf16, #tpu.memory_space<vmem>>, vector<16x16x128xbf16>
    %44 = vector.shape_cast %43 : vector<16x16x128xbf16> to vector<256x128xbf16>
    %c7 = arith.constant 7 : index
    %c0_45 = arith.constant 0 : index
    %c0_46 = arith.constant 0 : index
    %45 = vector.load %arg4[%c7, %c0_45, %c0_46] : memref<9x128x128xbf16, #tpu.memory_space<vmem>>, vector<1x128x128xbf16>
    %46 = vector.shape_cast %45 : vector<1x128x128xbf16> to vector<128x128xbf16>
    %cst_47 = arith.constant dense<0.000000e+00> : vector<256x128xf32>
    %47 = tpu.matmul %44, %46, %cst_47 {dimension_numbers = #tpu.dot_dimension_numbers<[1], [0], [0], [1], [0, 0, 1, 1], [], []>} : vector<256x128xbf16>, vector<128x128xbf16>, vector<256x128xf32> -> vector<256x128xf32>
    %48 = arith.addf %42, %47 : vector<256x128xf32>
    %c0_48 = arith.constant 0 : index
    %c2_49 = arith.constant 2 : index
    %c0_50 = arith.constant 0 : index
    %49 = vector.load %arg3[%c0_48, %c2_49, %c0_50] : memref<16x18x128xbf16, #tpu.memory_space<vmem>>, vector<16x16x128xbf16>
    %50 = vector.shape_cast %49 : vector<16x16x128xbf16> to vector<256x128xbf16>
    %c8 = arith.constant 8 : index
    %c0_51 = arith.constant 0 : index
    %c0_52 = arith.constant 0 : index
    %51 = vector.load %arg4[%c8, %c0_51, %c0_52] : memref<9x128x128xbf16, #tpu.memory_space<vmem>>, vector<1x128x128xbf16>
    %52 = vector.shape_cast %51 : vector<1x128x128xbf16> to vector<128x128xbf16>
    %cst_53 = arith.constant dense<0.000000e+00> : vector<256x128xf32>
    %53 = tpu.matmul %50, %52, %cst_53 {dimension_numbers = #tpu.dot_dimension_numbers<[1], [0], [0], [1], [0, 0, 1, 1], [], []>} : vector<256x128xbf16>, vector<128x128xbf16>, vector<256x128xf32> -> vector<256x128xf32>
    %54 = arith.addf %48, %53 : vector<256x128xf32>
    %55 = arith.truncf %54 : vector<256x128xf32> to vector<256x128xbf16>
    %c0_54 = arith.constant 0 : index
    %c0_55 = arith.constant 0 : index
    %56 = vector.load %arg5[%c0_54, %c0_55] : memref<256x128xbf16, #tpu.memory_space<vmem>>, vector<256x128xbf16>
    tpu.vector_store %arg5[%c0_54, %c0_55], %55 {strides = array<i32>} : memref<256x128xbf16, #tpu.memory_space<vmem>>, vector<256x128xbf16>,
    %cst_56 = arith.constant dense<0.000000e+00> : vector<128xf32>
    %57 = vector.multi_reduction <add>, %54, %cst_56 [0] : vector<256x128xf32> to vector<128xf32>
    %58 = vector.shape_cast %57 : vector<128xf32> to vector<1x128xf32>
    %c0_57 = arith.constant 0 : index
    %c0_58 = arith.constant 0 : index
    %c0_59 = arith.constant 0 : index
    %59 = vector.load %arg6[%c0_57, %c0_58, %c0_59] : memref<1x2x128xf32, #tpu.memory_space<vmem>>, vector<1x1x128xf32>
    %60 = vector.shape_cast %59 : vector<1x1x128xf32> to vector<1x128xf32>
    %61 = vector.shape_cast %58 : vector<1x128xf32> to vector<1x1x128xf32>
    tpu.vector_store %arg6[%c0_57, %c0_58, %c0_59], %61 {strides = array<i32>} : memref<1x2x128xf32, #tpu.memory_space<vmem>>, vector<1x1x128xf32>,
    %62 = arith.mulf %54, %54 : vector<256x128xf32>
    %cst_60 = arith.constant dense<0.000000e+00> : vector<128xf32>
    %63 = vector.multi_reduction <add>, %62, %cst_60 [0] : vector<256x128xf32> to vector<128xf32>
    %64 = vector.shape_cast %63 : vector<128xf32> to vector<1x128xf32>
    %c0_61 = arith.constant 0 : index
    %c1_62 = arith.constant 1 : index
    %c0_63 = arith.constant 0 : index
    %65 = vector.load %arg6[%c0_61, %c1_62, %c0_63] : memref<1x2x128xf32, #tpu.memory_space<vmem>>, vector<1x1x128xf32>
    %66 = vector.shape_cast %65 : vector<1x1x128xf32> to vector<1x128xf32>
    %67 = vector.shape_cast %64 : vector<1x128xf32> to vector<1x1x128xf32>
    tpu.vector_store %arg6[%c0_61, %c1_62, %c0_63], %67 {strides = array<i32>} : memref<1x2x128xf32, #tpu.memory_space<vmem>>, vector<1x1x128xf32>,
    return
  }
  func.func @transform_0(%arg0: i32) -> (i32, i32, i32) {
    %c0_i32 = arith.constant 0 : i32
    %c0_i32_0 = arith.constant 0 : i32
    %c0_i32_1 = arith.constant 0 : i32
    return %arg0, %c0_i32, %c0_i32_0 : i32, i32, i32
  }
  func.func @transform_1(%arg0: i32) -> (i32, i32, i32) {
    %c0_i32 = arith.constant 0 : i32
    %c0_i32_0 = arith.constant 0 : i32
    %c0_i32_1 = arith.constant 0 : i32
    return %arg0, %c0_i32, %c0_i32_0 : i32, i32, i32
  }
  func.func @transform_2(%arg0: i32) -> (i32, i32, i32) {
    %c0_i32 = arith.constant 0 : i32
    %c0_i32_0 = arith.constant 0 : i32
    %c0_i32_1 = arith.constant 0 : i32
    return %arg0, %c0_i32, %c0_i32_0 : i32, i32, i32
  }
  func.func @transform_3(%arg0: i32) -> (i32, i32, i32) {
    %c0_i32 = arith.constant 0 : i32
    %c0_i32_0 = arith.constant 0 : i32
    %c0_i32_1 = arith.constant 0 : i32
    %c0_i32_2 = arith.constant 0 : i32
    return %c0_i32, %c0_i32_0, %c0_i32_1 : i32, i32, i32
  }
  func.func @transform_4(%arg0: i32) -> (i32, i32) {
    %c0_i32 = arith.constant 0 : i32
    %c0_i32_0 = arith.constant 0 : i32
    return %arg0, %c0_i32 : i32, i32
  }
  func.func @transform_5(%arg0: i32) -> (i32, i32, i32) {
    %c0_i32 = arith.constant 0 : i32
    %c0_i32_0 = arith.constant 0 : i32
    %c0_i32_1 = arith.constant 0 : i32
    return %arg0, %c0_i32, %c0_i32_0 : i32, i32, i32
  }
}

module attributes {stable_mosaic.version = 11 : i64} {
  func.func @_bn_relu_kernel(%arg0: i32, %arg1: memref<256x128xbf16, #tpu.memory_space<vmem>>, %arg2: memref<1x128xf32, #tpu.memory_space<vmem>>, %arg3: memref<1x128xf32, #tpu.memory_space<vmem>>, %arg4: memref<256x128xbf16, #tpu.memory_space<vmem>>) attributes {dimension_semantics = [#tpu.dimension_semantics<parallel>], iteration_bounds = array<i64: 2>, scalar_prefetch = 0 : i64, scratch_operands = 0 : i64, tpu.core_type = #tpu.core_type<tc>, window_params = [{transform_indices = @transform_0, window_bounds = array<i64: 256, 128>}, {pipeline_mode = #tpu.pipeline_mode<synchronous>, transform_indices = @transform_1, window_bounds = array<i64: 1, 128>}, {pipeline_mode = #tpu.pipeline_mode<synchronous>, transform_indices = @transform_2, window_bounds = array<i64: 1, 128>}, {transform_indices = @transform_3, window_bounds = array<i64: 256, 128>}]} {
    %c0 = arith.constant 0 : index
    %c0_0 = arith.constant 0 : index
    %0 = vector.load %arg1[%c0, %c0_0] : memref<256x128xbf16, #tpu.memory_space<vmem>>, vector<256x128xbf16>
    %1 = arith.extf %0 : vector<256x128xbf16> to vector<256x128xf32>
    %c0_1 = arith.constant 0 : index
    %c0_2 = arith.constant 0 : index
    %2 = vector.load %arg2[%c0_1, %c0_2] : memref<1x128xf32, #tpu.memory_space<vmem>>, vector<1x128xf32>
    %3 = vector.broadcast %2 : vector<1x128xf32> to vector<256x128xf32>
    %4 = arith.mulf %1, %3 : vector<256x128xf32>
    %c0_3 = arith.constant 0 : index
    %c0_4 = arith.constant 0 : index
    %5 = vector.load %arg3[%c0_3, %c0_4] : memref<1x128xf32, #tpu.memory_space<vmem>>, vector<1x128xf32>
    %6 = vector.broadcast %5 : vector<1x128xf32> to vector<256x128xf32>
    %7 = arith.addf %4, %6 : vector<256x128xf32>
    %cst = arith.constant 0.000000e+00 : f32
    %8 = vector.broadcast %cst : f32 to vector<256x128xf32>
    %9 = arith.maximumf %7, %8 : vector<256x128xf32>
    %10 = arith.truncf %9 : vector<256x128xf32> to vector<256x128xbf16>
    %c0_5 = arith.constant 0 : index
    %c0_6 = arith.constant 0 : index
    %11 = vector.load %arg4[%c0_5, %c0_6] : memref<256x128xbf16, #tpu.memory_space<vmem>>, vector<256x128xbf16>
    tpu.vector_store %arg4[%c0_5, %c0_6], %10 {strides = array<i32>} : memref<256x128xbf16, #tpu.memory_space<vmem>>, vector<256x128xbf16>,
    return
  }
  func.func @transform_0(%arg0: i32) -> (i32, i32) {
    %c0_i32 = arith.constant 0 : i32
    %c0_i32_0 = arith.constant 0 : i32
    return %arg0, %c0_i32 : i32, i32
  }
  func.func @transform_1(%arg0: i32) -> (i32, i32) {
    %c0_i32 = arith.constant 0 : i32
    %c0_i32_0 = arith.constant 0 : i32
    %c0_i32_1 = arith.constant 0 : i32
    return %c0_i32, %c0_i32_0 : i32, i32
  }
  func.func @transform_2(%arg0: i32) -> (i32, i32) {
    %c0_i32 = arith.constant 0 : i32
    %c0_i32_0 = arith.constant 0 : i32
    %c0_i32_1 = arith.constant 0 : i32
    return %c0_i32, %c0_i32_0 : i32, i32
  }
  func.func @transform_3(%arg0: i32) -> (i32, i32) {
    %c0_i32 = arith.constant 0 : i32
    %c0_i32_0 = arith.constant 0 : i32
    return %arg0, %c0_i32 : i32, i32
  }
}

module attributes {stable_mosaic.version = 11 : i64} {
  func.func @_bn_relu_kernel(%arg0: i32, %arg1: memref<256x128xbf16, #tpu.memory_space<vmem>>, %arg2: memref<1x128xf32, #tpu.memory_space<vmem>>, %arg3: memref<1x128xf32, #tpu.memory_space<vmem>>, %arg4: memref<256x128xf32, #tpu.memory_space<vmem>>) attributes {dimension_semantics = [#tpu.dimension_semantics<parallel>], iteration_bounds = array<i64: 2>, scalar_prefetch = 0 : i64, scratch_operands = 0 : i64, tpu.core_type = #tpu.core_type<tc>, window_params = [{transform_indices = @transform_0, window_bounds = array<i64: 256, 128>}, {pipeline_mode = #tpu.pipeline_mode<synchronous>, transform_indices = @transform_1, window_bounds = array<i64: 1, 128>}, {pipeline_mode = #tpu.pipeline_mode<synchronous>, transform_indices = @transform_2, window_bounds = array<i64: 1, 128>}, {transform_indices = @transform_3, window_bounds = array<i64: 256, 128>}]} {
    %c0 = arith.constant 0 : index
    %c0_0 = arith.constant 0 : index
    %0 = vector.load %arg1[%c0, %c0_0] : memref<256x128xbf16, #tpu.memory_space<vmem>>, vector<256x128xbf16>
    %1 = arith.extf %0 : vector<256x128xbf16> to vector<256x128xf32>
    %c0_1 = arith.constant 0 : index
    %c0_2 = arith.constant 0 : index
    %2 = vector.load %arg2[%c0_1, %c0_2] : memref<1x128xf32, #tpu.memory_space<vmem>>, vector<1x128xf32>
    %3 = vector.broadcast %2 : vector<1x128xf32> to vector<256x128xf32>
    %4 = arith.mulf %1, %3 : vector<256x128xf32>
    %c0_3 = arith.constant 0 : index
    %c0_4 = arith.constant 0 : index
    %5 = vector.load %arg3[%c0_3, %c0_4] : memref<1x128xf32, #tpu.memory_space<vmem>>, vector<1x128xf32>
    %6 = vector.broadcast %5 : vector<1x128xf32> to vector<256x128xf32>
    %7 = arith.addf %4, %6 : vector<256x128xf32>
    %cst = arith.constant 0.000000e+00 : f32
    %8 = vector.broadcast %cst : f32 to vector<256x128xf32>
    %9 = arith.maximumf %7, %8 : vector<256x128xf32>
    %c0_5 = arith.constant 0 : index
    %c0_6 = arith.constant 0 : index
    %10 = vector.load %arg4[%c0_5, %c0_6] : memref<256x128xf32, #tpu.memory_space<vmem>>, vector<256x128xf32>
    tpu.vector_store %arg4[%c0_5, %c0_6], %9 {strides = array<i32>} : memref<256x128xf32, #tpu.memory_space<vmem>>, vector<256x128xf32>,
    return
  }
  func.func @transform_0(%arg0: i32) -> (i32, i32) {
    %c0_i32 = arith.constant 0 : i32
    %c0_i32_0 = arith.constant 0 : i32
    return %arg0, %c0_i32 : i32, i32
  }
  func.func @transform_1(%arg0: i32) -> (i32, i32) {
    %c0_i32 = arith.constant 0 : i32
    %c0_i32_0 = arith.constant 0 : i32
    %c0_i32_1 = arith.constant 0 : i32
    return %c0_i32, %c0_i32_0 : i32, i32
  }
  func.func @transform_2(%arg0: i32) -> (i32, i32) {
    %c0_i32 = arith.constant 0 : i32
    %c0_i32_0 = arith.constant 0 : i32
    %c0_i32_1 = arith.constant 0 : i32
    return %c0_i32, %c0_i32_0 : i32, i32
  }
  func.func @transform_3(%arg0: i32) -> (i32, i32) {
    %c0_i32 = arith.constant 0 : i32
    %c0_i32_0 = arith.constant 0 : i32
    return %arg0, %c0_i32 : i32, i32
  }
}

</mosaic_0001>

<llo_original>
// kernel: up_forward.4
$region0: #{up_forward.4}
  #allocation0 [shape = 'u32[]', space=smem, size = 0x4, offset = 0x4, fixed_abs, tag = 'smem constant byte address 0x4 - core index']
  #allocation1 [shape = 'u32[144,128]{1,0:T(1,128)}', space=vmem, size = 0x12000, scoped, tag = 'internal scratch']
  %s0 = inlined_call_operand.vmem [shape: bf16[32,18,128], index: 0, kind: input, shape index: {}]
  %s1 = inlined_call_operand.vmem [shape: bf16[32,18,128], index: 1, kind: input, shape index: {}]
  %s2 = inlined_call_operand.vmem [shape: bf16[32,18,128], index: 2, kind: input, shape index: {}]
  %s3 = inlined_call_operand.vmem [shape: bf16[9,128,128], index: 3, kind: input, shape index: {}]
  %s4 = inlined_call_operand.vmem [shape: bf16[512,128], index: 4, kind: output, shape index: {0}]
  %s5 = inlined_call_operand.vmem [shape: f32[2,2,128], index: 5, kind: output, shape index: {1}]
  %6 = xla_tuple %s4, %s5
  %s7 = sld [smem:[#allocation0]]
  $region57: #{up_forward.4} parent=0
    _
  %s9 = ssub.s32 1, %s7
  %s10 = scalar_select 0, %s9, %s7
  loop: start=0, step=1, limit=4
  $region2: #{up_forward.4} parent=0 // loop_pre_header
    _
  $region3: #{up_forward.4} parent=0 // loop_header
    %s12 = sphi 0, %s16
    %p13 = scmp.ge.s32.totalorder %s12, 4
    %s22 = sphi 0, %s24
    %s25 = sphi 0, %s22
    %s26 = sphi 0, %s25
    %s42 = sphi 0, %s26
    %s48 = sphi 0, %s50
    %s51 = sphi 0, %s48
    %s52 = sphi 0, %s51
    %s68 = sphi 0, %s52
    %s74 = sphi 0, %s76
    %s77 = sphi 0, %s74
    %s78 = sphi 0, %s77
    %s94 = sphi 0, %s78
    %s98 = sphi 0, %s98
    %s100 = sphi 0, %s98
    %s101 = sphi 0, %s100
    %s115 = sphi 0, %s101
    %s121 = sphi 0, %s123
    %s124 = sphi 0, %s121
    %s125 = sphi 0, %s124
    %s141 = sphi 0, %s125
    %s147 = sphi 0, %s149
    %s150 = sphi 0, %s147
    %s151 = sphi 0, %s150
    %s167 = sphi 0, %s151
  $region4: #{up_forward.4} parent=0 // loop_header_branch
    %15 = sbr.rel (%p13) target = $region8
  $region5: #{up_forward.4} parent=0 // loop_body
    %s17 = ssub.s32 %s12, 1
    %s18 = ssub.s32 %s12, 2
    %s19 = sadd.s32 %s12, 1
    %s20 = ssub.s32 %s12, %s19
    %p21 = scmp.eq.s32.totalorder %s20, 0
    %s23 = sadd.s32 %s22, 1
    %s24 = scalar_select %p21, %s22, %s23
    %p27 = pneg %p21
    %p28 = scmp.eq.s32.totalorder %s12, 1
    %p29 = por %p27, %p28
    %p30 = scmp.ne.s32.totalorder %s22, %s25
    %p31 = scmp.eq.s32.totalorder %s12, 0
    %p32 = por %p30, %p31
    %p33 = scmp.ne.s32.totalorder %s22, %s25
    %p34 = scmp.eq.s32.totalorder %s17, 1
    %p35 = por %p33, %p34
    %p36 = scmp.ne.s32.totalorder %s25, %s26
    %p37 = scmp.eq.s32.totalorder %s17, 0
    %p38 = por %p36, %p37
    %p39 = scmp.ne.s32.totalorder %s25, %s26
    %p40 = scmp.eq.s32.totalorder %s18, 1
    %p41 = por %p39, %p40
    %p43 = scmp.ne.s32.totalorder %s26, %s42
    %p44 = scmp.eq.s32.totalorder %s18, 0
    %p45 = por %p43, %p44
    %s46 = ssub.s32 %s12, %s19
    %p47 = scmp.eq.s32.totalorder %s46, 0
    %s49 = sadd.s32 %s48, 1
    %s50 = scalar_select %p47, %s48, %s49
    %p53 = pneg %p47
    %p54 = scmp.eq.s32.totalorder %s12, 1
    %p55 = por %p53, %p54
    %p56 = scmp.ne.s32.totalorder %s48, %s51
    %p57 = scmp.eq.s32.totalorder %s12, 0
    %p58 = por %p56, %p57
    %p59 = scmp.ne.s32.totalorder %s48, %s51
    %p60 = scmp.eq.s32.totalorder %s17, 1
    %p61 = por %p59, %p60
    %p62 = scmp.ne.s32.totalorder %s51, %s52
    %p63 = scmp.eq.s32.totalorder %s17, 0
    %p64 = por %p62, %p63
    %p65 = scmp.ne.s32.totalorder %s51, %s52
    %p66 = scmp.eq.s32.totalorder %s18, 1
    %p67 = por %p65, %p66
    %p69 = scmp.ne.s32.totalorder %s52, %s68
    %p70 = scmp.eq.s32.totalorder %s18, 0
    %p71 = por %p69, %p70
    %s72 = ssub.s32 %s12, %s19
    %p73 = scmp.eq.s32.totalorder %s72, 0
    %s75 = sadd.s32 %s74, 1
    %s76 = scalar_select %p73, %s74, %s75
    %p79 = pneg %p73
    %p80 = scmp.eq.s32.totalorder %s12, 1
    %p81 = por %p79, %p80
    %p82 = scmp.ne.s32.totalorder %s74, %s77
    %p83 = scmp.eq.s32.totalorder %s12, 0
    %p84 = por %p82, %p83
    %p85 = scmp.ne.s32.totalorder %s74, %s77
    %p86 = scmp.eq.s32.totalorder %s17, 1
    %p87 = por %p85, %p86
    %p88 = scmp.ne.s32.totalorder %s77, %s78
    %p89 = scmp.eq.s32.totalorder %s17, 0
    %p90 = por %p88, %p89
    %p91 = scmp.ne.s32.totalorder %s77, %s78
    %p92 = scmp.eq.s32.totalorder %s18, 1
    %p93 = por %p91, %p92
    %p95 = scmp.ne.s32.totalorder %s78, %s94
    %p96 = scmp.eq.s32.totalorder %s18, 0
    %p97 = por %p95, %p96
    %s99 = sadd.s32 %s98, 1
    %p102 = scmp.eq.s32.totalorder %s12, 1
    %p103 = scmp.ne.s32.totalorder %s98, %s100
    %p104 = scmp.eq.s32.totalorder %s12, 0
    %p105 = por %p103, %p104
    %p106 = scmp.ne.s32.totalorder %s98, %s100
    %p107 = scmp.eq.s32.totalorder %s17, 1
    %p108 = por %p106, %p107
    %p109 = scmp.ne.s32.totalorder %s100, %s101
    %p110 = scmp.eq.s32.totalorder %s17, 0
    %p111 = por %p109, %p110
    %p112 = scmp.ne.s32.totalorder %s100, %s101
    %p113 = scmp.eq.s32.totalorder %s18, 1
    %p114 = por %p112, %p113
    %p116 = scmp.ne.s32.totalorder %s101, %s115
    %p117 = scmp.eq.s32.totalorder %s18, 0
    %p118 = por %p116, %p117
    %s119 = ssub.s32 %s12, %s19
    %p120 = scmp.eq.s32.totalorder %s119, 0
    %s122 = sadd.s32 %s121, 1
    %s123 = scalar_select %p120, %s121, %s122
    %p126 = pneg %p120
    %p127 = scmp.eq.s32.totalorder %s12, 1
    %p128 = por %p126, %p127
    %p129 = scmp.ne.s32.totalorder %s121, %s124
    %p130 = scmp.eq.s32.totalorder %s12, 0
    %p131 = por %p129, %p130
    %p132 = scmp.ne.s32.totalorder %s121, %s124
    %p133 = scmp.eq.s32.totalorder %s17, 1
    %p134 = por %p132, %p133
    %p135 = scmp.ne.s32.totalorder %s124, %s125
    %p136 = scmp.eq.s32.totalorder %s17, 0
    %p137 = por %p135, %p136
    %p138 = scmp.ne.s32.totalorder %s124, %s125
    %p139 = scmp.eq.s32.totalorder %s18, 1
    %p140 = por %p138, %p139
    %p142 = scmp.ne.s32.totalorder %s125, %s141
    %p143 = scmp.eq.s32.totalorder %s18, 0
    %p144 = por %p142, %p143
    %s145 = ssub.s32 %s12, %s19
    %p146 = scmp.eq.s32.totalorder %s145, 0
    %s148 = sadd.s32 %s147, 1
    %s149 = scalar_select %p146, %s147, %s148
    %p152 = pneg %p146
    %p153 = scmp.eq.s32.totalorder %s12, 1
    %p154 = por %p152, %p153
    %p155 = scmp.ne.s32.totalorder %s147, %s150
    %p156 = scmp.eq.s32.totalorder %s12, 0
    %p157 = por %p155, %p156
    %p158 = scmp.ne.s32.totalorder %s147, %s150
    %p159 = scmp.eq.s32.totalorder %s17, 1
    %p160 = por %p158, %p159
    %p161 = scmp.ne.s32.totalorder %s150, %s151
    %p162 = scmp.eq.s32.totalorder %s17, 0
    %p163 = por %p161, %p162
    %p164 = scmp.ne.s32.totalorder %s150, %s151
    %p165 = scmp.eq.s32.totalorder %s18, 1
    %p166 = por %p164, %p165
    %p168 = scmp.ne.s32.totalorder %s151, %s167
    %p169 = scmp.eq.s32.totalorder %s18, 0
    %p170 = por %p168, %p169
    %p171 = scmp.le.s32.totalorder 1, %s12
    %p172 = scmp.lt.s32.totalorder %s12, 3
    %p173 = pnand %p171, %p172
    %p174 = pneg %p173
    // Predicated region
    $region9: #{up_forward.4} parent=5 // pred_check
      _
    $region10: #{up_forward.4} parent=5 // pred_check_branch
      %176 = sbr.rel (%p173) target = $region12
    $region11: #{up_forward.4} parent=5 // pred_region
      %s177 = ssub.s32 %s12, 1
      // Predicated region
      $region13: #{up_forward.4} parent=11 // pred_check
        %p178 = pneg %p111
      $region14: #{up_forward.4} parent=11 // pred_check_branch
        %180 = sbr.rel (%p178) target = $region16
      $region15: #{up_forward.4} parent=11 // pred_region
        _
      $region16: #{up_forward.4} parent=11 // pred_fallthru
        _
    $region12: #{up_forward.4} parent=5 // pred_fallthru
      _
    %p181 = scmp.lt.s32.totalorder %s12, 2
    // Predicated region
    $region17: #{up_forward.4} parent=5 // pred_check
      %p182 = pneg %p181
    $region18: #{up_forward.4} parent=5 // pred_check_branch
      %184 = sbr.rel (%p182) target = $region20
    $region19: #{up_forward.4} parent=5 // pred_region
      // Predicated region
      $region21: #{up_forward.4} parent=19 // pred_check
        %p185 = pneg %p32
      $region22: #{up_forward.4} parent=19 // pred_check_branch
        %187 = sbr.rel (%p185) target = $region24
      $region23: #{up_forward.4} parent=19 // pred_region
        %s188 = smul.u32 16, %s12
        %p189 = scmp.lt.s32.totalorder %s188, 31
        %s190 = scalar_select %p189, %s188, 31
        %s191 = smul.addr %s190, 3
        %s192 = smul.addr %s191, 4
        %s193 = scalar_lea.vmem %s0, %s192
        %s194 = smul.u32 16, %s12
      $region24: #{up_forward.4} parent=19 // pred_fallthru
        _
      // Predicated region
      $region25: #{up_forward.4} parent=19 // pred_check
        %p195 = pneg %p58
      $region26: #{up_forward.4} parent=19 // pred_check_branch
        %197 = sbr.rel (%p195) target = $region28
      $region27: #{up_forward.4} parent=19 // pred_region
        %s198 = smul.u32 16, %s12
        %p199 = scmp.lt.s32.totalorder %s198, 31
        %s200 = scalar_select %p199, %s198, 31
        %s201 = smul.addr %s200, 3
        %s202 = smul.addr %s201, 4
        %s203 = scalar_lea.vmem %s1, %s202
        %s204 = smul.u32 16, %s12
      $region28: #{up_forward.4} parent=19 // pred_fallthru
        _
      // Predicated region
      $region29: #{up_forward.4} parent=19 // pred_check
        %p205 = pneg %p84
      $region30: #{up_forward.4} parent=19 // pred_check_branch
        %207 = sbr.rel (%p205) target = $region32
      $region31: #{up_forward.4} parent=19 // pred_region
        %s208 = smul.u32 16, %s12
        %p209 = scmp.lt.s32.totalorder %s208, 31
        %s210 = scalar_select %p209, %s208, 31
        %s211 = smul.addr %s210, 3
        %s212 = smul.addr %s211, 4
        %s213 = scalar_lea.vmem %s2, %s212
        %s214 = smul.u32 16, %s12
      $region32: #{up_forward.4} parent=19 // pred_fallthru
        _
    $region20: #{up_forward.4} parent=5 // pred_fallthru
      _
    %p215 = scmp.le.s32.totalorder 1, %s12
    %p216 = scmp.lt.s32.totalorder %s12, 3
    %p217 = pnand %p215, %p216
    %p218 = pneg %p217
    // Predicated region
    $region33: #{up_forward.4} parent=5 // pred_check
      _
    $region34: #{up_forward.4} parent=5 // pred_check_branch
      %220 = sbr.rel (%p217) target = $region36
    $region35: #{up_forward.4} parent=5 // pred_region
      %s221 = ssub.s32 %s12, 1
      %s222 = smul.u32 16, %s17
      %p223 = scmp.lt.s32.totalorder %s222, 31
      %s224 = scalar_select %p223, %s222, 31
      %s225 = smul.addr %s224, 3
      %s226 = smul.addr %s225, 4
      %s227 = scalar_lea.vmem %s0, %s226
      %p228 = pneg %p38
      %p229 = pneg %p35
      %s230 = smul.u32 16, %s17
      %p231 = scmp.lt.s32.totalorder %s230, 31
      %s232 = scalar_select %p231, %s230, 31
      %s233 = smul.addr %s232, 3
      %s234 = smul.addr %s233, 4
      %s235 = scalar_lea.vmem %s1, %s234
      %p236 = pneg %p64
      %p237 = pneg %p61
      %s238 = smul.u32 16, %s17
      %p239 = scmp.lt.s32.totalorder %s238, 31
      %s240 = scalar_select %p239, %s238, 31
      %s241 = smul.addr %s240, 3
      %s242 = smul.addr %s241, 4
      %s243 = scalar_lea.vmem %s2, %s242
      %p244 = pneg %p90
      %p245 = pneg %p87
      %p246 = pneg %p111
      %p247 = pneg %p108
      %p248 = pneg %p137
      %p249 = pneg %p134
      %s250 = smul.u32 32, %s17
      %p251 = scmp.lt.s32.totalorder %s250, 63
      %s252 = scalar_select %p251, %s250, 63
      %s253 = smul.addr %s252, 4
      %s254 = scalar_lea.vmem %s4, %s253
      %p255 = pneg %p163
      %p256 = pneg %p160
      %p257 = scmp.lt.s32.totalorder %s17, 1
      %s258 = scalar_select %p257, %s17, 1
      %s259 = smul.addr %s258, 2
      %s260 = scalar_lea.vmem %s5, %s259
      %s261 = smul.u32 16, %s17
      %p262 = scmp.lt.s32.totalorder %s261, 31
      %s263 = scalar_select %p262, %s261, 31
      %s264 = smul.addr %s263, 3
      %s265 = smul.addr %s264, 4
      %s266 = scalar_lea.vmem %s0, %s265
      %s267 = smul.u32 16, %s17
      %s268 = smul.u32 16, %s17
      %p269 = scmp.lt.s32.totalorder %s268, 31
      %s270 = scalar_select %p269, %s268, 31
      %s271 = smul.addr %s270, 3
      %s272 = smul.addr %s271, 4
      %s273 = scalar_lea.vmem %s1, %s272
      %s274 = smul.u32 16, %s17
      %s275 = smul.u32 16, %s17
      %p276 = scmp.lt.s32.totalorder %s275, 31
      %s277 = scalar_select %p276, %s275, 31
      %s278 = smul.addr %s277, 3
      %s279 = smul.addr %s278, 4
      %s280 = scalar_lea.vmem %s2, %s279
      %s281 = smul.u32 16, %s17
      %s282 = smul.u32 32, %s17
      %p283 = scmp.lt.s32.totalorder %s282, 63
      %s284 = scalar_select %p283, %s282, 63
      %s285 = smul.addr %s284, 4
      %s286 = scalar_lea.vmem %s4, %s285
      %s287 = smul.u32 32, %s17
      %p288 = scmp.lt.s32.totalorder %s17, 1
      %s289 = scalar_select %p288, %s17, 1
      %s290 = smul.addr %s289, 2
      %s291 = scalar_lea.vmem %s5, %s290
      %v293 = vld [vmem:[%s266] sm:$0xf]
      %v294 = vld [vmem:[%s266 + $0x4] sm:$0xf]
      %v295 = vld [vmem:[%s266 + $0xc] sm:$0xf]
      %v296 = vld [vmem:[%s266 + $0x10] sm:$0xf]
      %v297 = vld [vmem:[%s266 + $0x18] sm:$0xf]
      %v298 = vld [vmem:[%s266 + $0x1c] sm:$0xf]
      %v299 = vld [vmem:[%s266 + $0x24] sm:$0xf]
      %v300 = vld [vmem:[%s266 + $0x28] sm:$0xf]
      %v301 = vld [vmem:[%s266 + $0x30] sm:$0xf]
      %v302 = vld [vmem:[%s266 + $0x34] sm:$0xf]
      %v303 = vld [vmem:[%s266 + $0x3c] sm:$0xf]
      %v304 = vld [vmem:[%s266 + $0x40] sm:$0xf]
      %v305 = vld [vmem:[%s266 + $0x48] sm:$0xf]
      %v306 = vld [vmem:[%s266 + $0x4c] sm:$0xf]
      %v307 = vld [vmem:[%s266 + $0x54] sm:$0xf]
      %v308 = vld [vmem:[%s266 + $0x58] sm:$0xf]
      %v309 = vld [vmem:[%s266 + $0x60] sm:$0xf]
      %v310 = vld [vmem:[%s266 + $0x64] sm:$0xf]
      %v311 = vld [vmem:[%s266 + $0x6c] sm:$0xf]
      %v312 = vld [vmem:[%s266 + $0x70] sm:$0xf]
      %v313 = vld [vmem:[%s266 + $0x78] sm:$0xf]
      %v314 = vld [vmem:[%s266 + $0x7c] sm:$0xf]
      %v315 = vld [vmem:[%s266 + $0x84] sm:$0xf]
      %v316 = vld [vmem:[%s266 + $0x88] sm:$0xf]
      %v317 = vld [vmem:[%s266 + $0x90] sm:$0xf]
      %v318 = vld [vmem:[%s266 + $0x94] sm:$0xf]
      %v319 = vld [vmem:[%s266 + $0x9c] sm:$0xf]
      %v320 = vld [vmem:[%s266 + $0xa0] sm:$0xf]
      %v321 = vld [vmem:[%s266 + $0xa8] sm:$0xf]
      %v322 = vld [vmem:[%s266 + $0xac] sm:$0xf]
      %v323 = vld [vmem:[%s266 + $0xb4] sm:$0xf]
      %v324 = vld [vmem:[%s266 + $0xb8] sm:$0xf]
      %v325 = vld [vmem:[%s3] sm:$0xf]
      %v326 = vld [vmem:[%s3 + $0x4] sm:$0xf]
      %v327 = vld [vmem:[%s3 + $0x8] sm:$0xf]
      %v328 = vld [vmem:[%s3 + $0xc] sm:$0xf]
      %v329 = vld [vmem:[%s3 + $0x10] sm:$0xf]
      %v330 = vld [vmem:[%s3 + $0x14] sm:$0xf]
      %v331 = vld [vmem:[%s3 + $0x18] sm:$0xf]
      %v332 = vld [vmem:[%s3 + $0x1c] sm:$0xf]
      %v333 = vld [vmem:[%s3 + $0x20] sm:$0xf]
      %v334 = vld [vmem:[%s3 + $0x24] sm:$0xf]
      %v335 = vld [vmem:[%s3 + $0x28] sm:$0xf]
      %v336 = vld [vmem:[%s3 + $0x2c] sm:$0xf]
      %v337 = vld [vmem:[%s3 + $0x30] sm:$0xf]
      %v338 = vld [vmem:[%s3 + $0x34] sm:$0xf]
      %v339 = vld [vmem:[%s3 + $0x38] sm:$0xf]
      %v340 = vld [vmem:[%s3 + $0x3c] sm:$0xf]
      %v341 = vld [vmem:[%s266 + $0x8] sm:$0x1]
      %v342 = vld [vmem:[%s266 + $0x14] sm:$0x1]
      %v343 = vld [vmem:[%s266 + $0x20] sm:$0x1]
      %v344 = vld [vmem:[%s266 + $0x2c] sm:$0x1]
      %v345 = vld [vmem:[%s266 + $0x38] sm:$0x1]
      %v346 = vld [vmem:[%s266 + $0x44] sm:$0x1]
      %v347 = vld [vmem:[%s266 + $0x50] sm:$0x1]
      %v348 = vld [vmem:[%s266 + $0x5c] sm:$0x1]
      %v349 = vld [vmem:[%s266 + $0x68] sm:$0x1]
      %v350 = vld [vmem:[%s266 + $0x74] sm:$0x1]
      %v351 = vld [vmem:[%s266 + $0x80] sm:$0x1]
      %v352 = vld [vmem:[%s266 + $0x8c] sm:$0x1]
      %v353 = vld [vmem:[%s266 + $0x98] sm:$0x1]
      %v354 = vld [vmem:[%s266 + $0xa4] sm:$0x1]
      %v355 = vld [vmem:[%s266 + $0xb0] sm:$0x1]
      %v356 = vld [vmem:[%s266 + $0xbc] sm:$0x1]
      %vm357 = vsmask.f32 3328
      %vm358 = vsmask.f32 7440
      %vm359 = vmor %vm357, %vm358
      %v361 = vshrl.u32 %v293, 16
      %v363 = vrot.slane %v361, 4
      %v364 = vshll.u32 %v293, 16
      %v366 = vrot.slane %v364, 5
      %v367 = vor.u32 %v363, %v366
      %v368 = vrot.slane %v367, 4
      %v370 = vshll.u32 %v294, 16
      %v372 = vrot.slane %v370, 5
      %v373 = vsel %vm359, %v368, %v372
      %v374 = vshrl.u32 %v294, 16
      %v376 = vrot.slane %v374, 4
      %v377 = vor.u32 %v376, %v372
      %v378 = vrot.slane %v377, 4
      %v380 = vshll.u32 %v341, 16
      %v382 = vrot.slane %v380, 5
      %v383 = vsel %vm359, %v378, %v382
      %v385 = vshrl.u32 %v295, 16
      %v387 = vrot.slane %v385, 4
      %v388 = vshll.u32 %v295, 16
      %v390 = vrot.slane %v388, 5
      %v391 = vor.u32 %v387, %v390
      %v392 = vrot.slane %v391, 4
      %v394 = vshll.u32 %v296, 16
      %v396 = vrot.slane %v394, 5
      %v397 = vsel %vm359, %v392, %v396
      %v398 = vshrl.u32 %v296, 16
      %v400 = vrot.slane %v398, 4
      %v401 = vor.u32 %v400, %v396
      %v402 = vrot.slane %v401, 4
      %v404 = vshll.u32 %v342, 16
      %v406 = vrot.slane %v404, 5
      %v407 = vsel %vm359, %v402, %v406
      %v409 = vshrl.u32 %v297, 16
      %v411 = vrot.slane %v409, 4
      %v412 = vshll.u32 %v297, 16
      %v414 = vrot.slane %v412, 5
      %v415 = vor.u32 %v411, %v414
      %v416 = vrot.slane %v415, 4
      %v418 = vshll.u32 %v298, 16
      %v420 = vrot.slane %v418, 5
      %v421 = vsel %vm359, %v416, %v420
      %v422 = vshrl.u32 %v298, 16
      %v424 = vrot.slane %v422, 4
      %v425 = vor.u32 %v424, %v420
      %v426 = vrot.slane %v425, 4
      %v428 = vshll.u32 %v343, 16
      %v430 = vrot.slane %v428, 5
      %v431 = vsel %vm359, %v426, %v430
      %v433 = vshrl.u32 %v299, 16
      %v435 = vrot.slane %v433, 4
      %v436 = vshll.u32 %v299, 16
      %v438 = vrot.slane %v436, 5
      %v439 = vor.u32 %v435, %v438
      %v440 = vrot.slane %v439, 4
      %v442 = vshll.u32 %v300, 16
      %v444 = vrot.slane %v442, 5
      %v445 = vsel %vm359, %v440, %v444
      %v446 = vshrl.u32 %v300, 16
      %v448 = vrot.slane %v446, 4
      %v449 = vor.u32 %v448, %v444
      %v450 = vrot.slane %v449, 4
      %v452 = vshll.u32 %v344, 16
      %v454 = vrot.slane %v452, 5
      %v455 = vsel %vm359, %v450, %v454
      %v457 = vshrl.u32 %v301, 16
      %v459 = vrot.slane %v457, 4
      %v460 = vshll.u32 %v301, 16
      %v462 = vrot.slane %v460, 5
      %v463 = vor.u32 %v459, %v462
      %v464 = vrot.slane %v463, 4
      %v466 = vshll.u32 %v302, 16
      %v468 = vrot.slane %v466, 5
      %v469 = vsel %vm359, %v464, %v468
      %v470 = vshrl.u32 %v302, 16
      %v472 = vrot.slane %v470, 4
      %v473 = vor.u32 %v472, %v468
      %v474 = vrot.slane %v473, 4
      %v476 = vshll.u32 %v345, 16
      %v478 = vrot.slane %v476, 5
      %v479 = vsel %vm359, %v474, %v478
      %v481 = vshrl.u32 %v303, 16
      %v483 = vrot.slane %v481, 4
      %v484 = vshll.u32 %v303, 16
      %v486 = vrot.slane %v484, 5
      %v487 = vor.u32 %v483, %v486
      %v488 = vrot.slane %v487, 4
      %v490 = vshll.u32 %v304, 16
      %v492 = vrot.slane %v490, 5
      %v493 = vsel %vm359, %v488, %v492
      %v494 = vshrl.u32 %v304, 16
      %v496 = vrot.slane %v494, 4
      %v497 = vor.u32 %v496, %v492
      %v498 = vrot.slane %v497, 4
      %v500 = vshll.u32 %v346, 16
      %v502 = vrot.slane %v500, 5
      %v503 = vsel %vm359, %v498, %v502
      %v505 = vshrl.u32 %v305, 16
      %v507 = vrot.slane %v505, 4
      %v508 = vshll.u32 %v305, 16
      %v510 = vrot.slane %v508, 5
      %v511 = vor.u32 %v507, %v510
      %v512 = vrot.slane %v511, 4
      %v514 = vshll.u32 %v306, 16
      %v516 = vrot.slane %v514, 5
      %v517 = vsel %vm359, %v512, %v516
      %v518 = vshrl.u32 %v306, 16
      %v520 = vrot.slane %v518, 4
      %v521 = vor.u32 %v520, %v516
      %v522 = vrot.slane %v521, 4
      %v524 = vshll.u32 %v347, 16
      %v526 = vrot.slane %v524, 5
      %v527 = vsel %vm359, %v522, %v526
      %v529 = vshrl.u32 %v307, 16
      %v531 = vrot.slane %v529, 4
      %v532 = vshll.u32 %v307, 16
      %v534 = vrot.slane %v532, 5
      %v535 = vor.u32 %v531, %v534
      %v536 = vrot.slane %v535, 4
      %v538 = vshll.u32 %v308, 16
      %v540 = vrot.slane %v538, 5
      %v541 = vsel %vm359, %v536, %v540
      %v542 = vshrl.u32 %v308, 16
      %v544 = vrot.slane %v542, 4
      %v545 = vor.u32 %v544, %v540
      %v546 = vrot.slane %v545, 4
      %v548 = vshll.u32 %v348, 16
      %v550 = vrot.slane %v548, 5
      %v551 = vsel %vm359, %v546, %v550
      %v553 = vshrl.u32 %v309, 16
      %v555 = vrot.slane %v553, 4
      %v556 = vshll.u32 %v309, 16
      %v558 = vrot.slane %v556, 5
      %v559 = vor.u32 %v555, %v558
      %v560 = vrot.slane %v559, 4
      %v562 = vshll.u32 %v310, 16
      %v564 = vrot.slane %v562, 5
      %v565 = vsel %vm359, %v560, %v564
      %v566 = vshrl.u32 %v310, 16
      %v568 = vrot.slane %v566, 4
      %v569 = vor.u32 %v568, %v564
      %v570 = vrot.slane %v569, 4
      %v572 = vshll.u32 %v349, 16
      %v574 = vrot.slane %v572, 5
      %v575 = vsel %vm359, %v570, %v574
      %v577 = vshrl.u32 %v311, 16
      %v579 = vrot.slane %v577, 4
      %v580 = vshll.u32 %v311, 16
      %v582 = vrot.slane %v580, 5
      %v583 = vor.u32 %v579, %v582
      %v584 = vrot.slane %v583, 4
      %v586 = vshll.u32 %v312, 16
      %v588 = vrot.slane %v586, 5
      %v589 = vsel %vm359, %v584, %v588
      %v590 = vshrl.u32 %v312, 16
      %v592 = vrot.slane %v590, 4
      %v593 = vor.u32 %v592, %v588
      %v594 = vrot.slane %v593, 4
      %v596 = vshll.u32 %v350, 16
      %v598 = vrot.slane %v596, 5
      %v599 = vsel %vm359, %v594, %v598
      %v601 = vshrl.u32 %v313, 16
      %v603 = vrot.slane %v601, 4
      %v604 = vshll.u32 %v313, 16
      %v606 = vrot.slane %v604, 5
      %v607 = vor.u32 %v603, %v606
      %v608 = vrot.slane %v607, 4
      %v610 = vshll.u32 %v314, 16
      %v612 = vrot.slane %v610, 5
      %v613 = vsel %vm359, %v608, %v612
      %v614 = vshrl.u32 %v314, 16
      %v616 = vrot.slane %v614, 4
      %v617 = vor.u32 %v616, %v612
      %v618 = vrot.slane %v617, 4
      %v620 = vshll.u32 %v351, 16
      %v622 = vrot.slane %v620, 5
      %v623 = vsel %vm359, %v618, %v622
      %v625 = vshrl.u32 %v315, 16
      %v627 = vrot.slane %v625, 4
      %v628 = vshll.u32 %v315, 16
      %v630 = vrot.slane %v628, 5
      %v631 = vor.u32 %v627, %v630
      %v632 = vrot.slane %v631, 4
      %v634 = vshll.u32 %v316, 16
      %v636 = vrot.slane %v634, 5
      %v637 = vsel %vm359, %v632, %v636
      %v638 = vshrl.u32 %v316, 16
      %v640 = vrot.slane %v638, 4
      %v641 = vor.u32 %v640, %v636
      %v642 = vrot.slane %v641, 4
      %v644 = vshll.u32 %v352, 16
      %v646 = vrot.slane %v644, 5
      %v647 = vsel %vm359, %v642, %v646
      %v649 = vshrl.u32 %v317, 16
      %v651 = vrot.slane %v649, 4
      %v652 = vshll.u32 %v317, 16
      %v654 = vrot.slane %v652, 5
      %v655 = vor.u32 %v651, %v654
      %v656 = vrot.slane %v655, 4
      %v658 = vshll.u32 %v318, 16
      %v660 = vrot.slane %v658, 5
      %v661 = vsel %vm359, %v656, %v660
      %v662 = vshrl.u32 %v318, 16
      %v664 = vrot.slane %v662, 4
      %v665 = vor.u32 %v664, %v660
      %v666 = vrot.slane %v665, 4
      %v668 = vshll.u32 %v353, 16
      %v670 = vrot.slane %v668, 5
      %v671 = vsel %vm359, %v666, %v670
      %v673 = vshrl.u32 %v319, 16
      %v675 = vrot.slane %v673, 4
      %v676 = vshll.u32 %v319, 16
      %v678 = vrot.slane %v676, 5
      %v679 = vor.u32 %v675, %v678
      %v680 = vrot.slane %v679, 4
      %v682 = vshll.u32 %v320, 16
      %v684 = vrot.slane %v682, 5
      %v685 = vsel %vm359, %v680, %v684
      %v686 = vshrl.u32 %v320, 16
      %v688 = vrot.slane %v686, 4
      %v689 = vor.u32 %v688, %v684
      %v690 = vrot.slane %v689, 4
      %v692 = vshll.u32 %v354, 16
      %v694 = vrot.slane %v692, 5
      %v695 = vsel %vm359, %v690, %v694
      %v697 = vshrl.u32 %v321, 16
      %v699 = vrot.slane %v697, 4
      %v700 = vshll.u32 %v321, 16
      %v702 = vrot.slane %v700, 5
      %v703 = vor.u32 %v699, %v702
      %v704 = vrot.slane %v703, 4
      %v706 = vshll.u32 %v322, 16
      %v708 = vrot.slane %v706, 5
      %v709 = vsel %vm359, %v704, %v708
      %v710 = vshrl.u32 %v322, 16
      %v712 = vrot.slane %v710, 4
      %v713 = vor.u32 %v712, %v708
      %v714 = vrot.slane %v713, 4
      %v716 = vshll.u32 %v355, 16
      %v718 = vrot.slane %v716, 5
      %v719 = vsel %vm359, %v714, %v718
      %v721 = vshrl.u32 %v323, 16
      %v723 = vrot.slane %v721, 4
      %v724 = vshll.u32 %v323, 16
      %v726 = vrot.slane %v724, 5
      %v727 = vor.u32 %v723, %v726
      %v728 = vrot.slane %v727, 4
      %v730 = vshll.u32 %v324, 16
      %v732 = vrot.slane %v730, 5
      %v733 = vsel %vm359, %v728, %v732
      %v734 = vshrl.u32 %v324, 16
      %v736 = vrot.slane %v734, 4
      %v737 = vor.u32 %v736, %v732
      %v738 = vrot.slane %v737, 4
      %v740 = vshll.u32 %v356, 16
      %v742 = vrot.slane %v740, 5
      %v743 = vsel %vm359, %v738, %v742
      %s744 = scalar_lea.vmem %s3, 64
      %v745 = vld [vmem:[%s744] sm:$0xf]
      %v746 = vld [vmem:[%s744 + $0x4] sm:$0xf]
      %v747 = vld [vmem:[%s744 + $0x8] sm:$0xf]
      %v748 = vld [vmem:[%s744 + $0xc] sm:$0xf]
      %v749 = vld [vmem:[%s744 + $0x10] sm:$0xf]
      %v750 = vld [vmem:[%s744 + $0x14] sm:$0xf]
      %v751 = vld [vmem:[%s744 + $0x18] sm:$0xf]
      %v752 = vld [vmem:[%s744 + $0x1c] sm:$0xf]
      %v753 = vld [vmem:[%s744 + $0x20] sm:$0xf]
      %v754 = vld [vmem:[%s744 + $0x24] sm:$0xf]
      %v755 = vld [vmem:[%s744 + $0x28] sm:$0xf]
      %v756 = vld [vmem:[%s744 + $0x2c] sm:$0xf]
      %v757 = vld [vmem:[%s744 + $0x30] sm:$0xf]
      %v758 = vld [vmem:[%s744 + $0x34] sm:$0xf]
      %v759 = vld [vmem:[%s744 + $0x38] sm:$0xf]
      %v760 = vld [vmem:[%s744 + $0x3c] sm:$0xf]
      %v761 = vunpack.c.l.b16 %v373
      %v762 = vunpack.c.l.b16 %v383
      %v763 = vunpack.c.l.b16 %v397
      %v764 = vunpack.c.l.b16 %v407
      %v765 = vunpack.c.l.b16 %v421
      %v766 = vunpack.c.l.b16 %v431
      %v767 = vunpack.c.l.b16 %v445
      %v768 = vunpack.c.l.b16 %v455
      %v769 = vunpack.c.l.b16 %v469
      %v770 = vunpack.c.l.b16 %v479
      %v771 = vunpack.c.l.b16 %v493
      %v772 = vunpack.c.l.b16 %v503
      %v773 = vunpack.c.l.b16 %v517
      %v774 = vunpack.c.l.b16 %v527
      %v775 = vunpack.c.l.b16 %v541
      %v776 = vunpack.c.l.b16 %v551
      %v777 = vunpack.c.l.b16 %v565
      %v778 = vunpack.c.l.b16 %v575
      %v779 = vunpack.c.l.b16 %v589
      %v780 = vunpack.c.l.b16 %v599
      %v781 = vunpack.c.l.b16 %v613
      %v782 = vunpack.c.l.b16 %v623
      %v783 = vunpack.c.l.b16 %v637
      %v784 = vunpack.c.l.b16 %v647
      %v785 = vunpack.c.l.b16 %v661
      %v786 = vunpack.c.l.b16 %v671
      %v787 = vunpack.c.l.b16 %v685
      %v788 = vunpack.c.l.b16 %v695
      %v789 = vunpack.c.l.b16 %v709
      %v790 = vunpack.c.l.b16 %v719
      %v791 = vunpack.c.l.b16 %v733
      %v792 = vunpack.c.l.b16 %v743
      %v793 = vpack.c.b16 %v762, %v761
      %v794 = vpack.c.b16 %v764, %v763
      %v795 = vpack.c.b16 %v766, %v765
      %v796 = vpack.c.b16 %v768, %v767
      %v797 = vpack.c.b16 %v770, %v769
      %v798 = vpack.c.b16 %v772, %v771
      %v799 = vpack.c.b16 %v774, %v773
      %v800 = vpack.c.b16 %v776, %v775
      %v801 = vpack.c.b16 %v778, %v777
      %v802 = vpack.c.b16 %v780, %v779
      %v803 = vpack.c.b16 %v782, %v781
      %v804 = vpack.c.b16 %v784, %v783
      %v805 = vpack.c.b16 %v786, %v785
      %v806 = vpack.c.b16 %v788, %v787
      %v807 = vpack.c.b16 %v790, %v789
      %v808 = vpack.c.b16 %v792, %v791
      %v841 = vunpack.c.l.b16 %v745
      %v842 = vunpack.c.l.b16 %v746
      %v843 = vunpack.c.l.b16 %v747
      %v844 = vunpack.c.l.b16 %v748
      %v845 = vunpack.c.l.b16 %v749
      %v846 = vunpack.c.l.b16 %v750
      %v847 = vunpack.c.l.b16 %v751
      %v848 = vunpack.c.l.b16 %v752
      %v849 = vunpack.c.l.b16 %v753
      %v850 = vunpack.c.l.b16 %v754
      %v851 = vunpack.c.l.b16 %v755
      %v852 = vunpack.c.l.b16 %v756
      %v853 = vunpack.c.l.b16 %v757
      %v854 = vunpack.c.l.b16 %v758
      %v855 = vunpack.c.l.b16 %v759
      %v856 = vunpack.c.l.b16 %v760
      %v857 = vpack.c.b16 %v842, %v841
      %v858 = vpack.c.b16 %v844, %v843
      %v859 = vpack.c.b16 %v846, %v845
      %v860 = vpack.c.b16 %v848, %v847
      %v861 = vpack.c.b16 %v850, %v849
      %v862 = vpack.c.b16 %v852, %v851
      %v863 = vpack.c.b16 %v854, %v853
      %v864 = vpack.c.b16 %v856, %v855
      %873 = vmatprep.subr.bf16.mxu0 0
      %874 = vmatpush1.bf16.msra.mxu0 %v857
      %875 = vmatprep.subr.bf16.mxu0 0
      %876 = vmatpush1.bf16.msra.mxu0 %v858
      %877 = vmatprep.subr.bf16.mxu0 0
      %878 = vmatpush1.bf16.msra.mxu0 %v859
      %879 = vmatprep.subr.bf16.mxu0 0
      %880 = vmatpush1.bf16.msra.mxu0 %v860
      %881 = vmatprep.subr.bf16.mxu0 0
      %882 = vmatpush1.bf16.msra.mxu0 %v861
      %883 = vmatprep.subr.bf16.mxu0 0
      %884 = vmatpush1.bf16.msra.mxu0 %v862
      %885 = vmatprep.subr.bf16.mxu0 0
      %886 = vmatpush1.bf16.msra.mxu0 %v863
      %887 = vmatprep.subr.bf16.mxu0 0
      %888 = vmatpush1.bf16.msra.mxu0 %v864
      %889 = vmatprep.subr.bf16.mxu0 0
      %890 = vmatpush1.bf16.msra.mxu0 0
      %891 = vmatprep.subr.bf16.mxu0 0
      %892 = vmatpush1.bf16.msra.mxu0 0
      %893 = vmatprep.subr.bf16.mxu0 0
      %894 = vmatpush1.bf16.msra.mxu0 0
      %895 = vmatprep.subr.bf16.mxu0 0
      %896 = vmatpush1.bf16.msra.mxu0 0
      %897 = vmatprep.subr.bf16.mxu0 0
      %898 = vmatpush1.bf16.msra.mxu0 0
      %899 = vmatprep.subr.bf16.mxu0 0
      %900 = vmatpush1.bf16.msra.mxu0 0
      %901 = vmatprep.subr.bf16.mxu0 0
      %902 = vmatpush1.bf16.msra.mxu0 0
      %903 = vmatprep.subr.bf16.mxu0 0
      %904 = vmatpush1.bf16.msra.mxu0 0
      %905 = vmatprep.mubr.bf16.mxu0 0
      %906 = vmatmul.mubr.bf16.gmra.mrb[0].mxu0 %v793
      %v907 = vpop.f32.mrb[0].mxu0
      %v908 = vadd.f32 0.0, %v907
      %v909 = vpop.f32.mrb[0].mxu0
      %v910 = vpop.f32.mrb[0].mxu0
      %v911 = vadd.f32 0.0, %v910
      %v912 = vpop.f32.mrb[0].mxu0
      %913 = vmatprep.mubr.bf16.mxu0 0
      %914 = vmatmul.mubr.bf16.gmra.mrb[0].mxu0 %v794
      %v915 = vpop.f32.mrb[0].mxu0
      %v916 = vadd.f32 0.0, %v915
      %v917 = vpop.f32.mrb[0].mxu0
      %v918 = vpop.f32.mrb[0].mxu0
      %v919 = vadd.f32 0.0, %v918
      %v920 = vpop.f32.mrb[0].mxu0
      %921 = vmatprep.mubr.bf16.mxu0 0
      %922 = vmatmul.mubr.bf16.gmra.mrb[0].mxu0 %v795
      %v923 = vpop.f32.mrb[0].mxu0
      %v924 = vadd.f32 0.0, %v923
      %v925 = vpop.f32.mrb[0].mxu0
      %v926 = vpop.f32.mrb[0].mxu0
      %v927 = vadd.f32 0.0, %v926
      %v928 = vpop.f32.mrb[0].mxu0
      %929 = vmatprep.mubr.bf16.mxu0 0
      %930 = vmatmul.mubr.bf16.gmra.mrb[0].mxu0 %v796
      %v931 = vpop.f32.mrb[0].mxu0
      %v932 = vadd.f32 0.0, %v931
      %v933 = vpop.f32.mrb[0].mxu0
      %v934 = vpop.f32.mrb[0].mxu0
      %v935 = vadd.f32 0.0, %v934
      %v936 = vpop.f32.mrb[0].mxu0
      %937 = vmatprep.mubr.bf16.mxu0 0
      %938 = vmatmul.mubr.bf16.gmra.mrb[0].mxu0 %v797
      %v939 = vpop.f32.mrb[0].mxu0
      %v940 = vadd.f32 0.0, %v939
      %v941 = vpop.f32.mrb[0].mxu0
      %v942 = vpop.f32.mrb[0].mxu0
      %v943 = vadd.f32 0.0, %v942
      %v944 = vpop.f32.mrb[0].mxu0
      %945 = vmatprep.mubr.bf16.mxu0 0
      %946 = vmatmul.mubr.bf16.gmra.mrb[0].mxu0 %v798
      %v947 = vpop.f32.mrb[0].mxu0
      %v948 = vadd.f32 0.0, %v947
      %v949 = vpop.f32.mrb[0].mxu0
      %v950 = vpop.f32.mrb[0].mxu0
      %v951 = vadd.f32 0.0, %v950
      %v952 = vpop.f32.mrb[0].mxu0
      %953 = vmatprep.mubr.bf16.mxu0 0
      %954 = vmatmul.mubr.bf16.gmra.mrb[0].mxu0 %v799
      %v955 = vpop.f32.mrb[0].mxu0
      %v956 = vadd.f32 0.0, %v955
      %v957 = vpop.f32.mrb[0].mxu0
      %v958 = vpop.f32.mrb[0].mxu0
      %v959 = vadd.f32 0.0, %v958
      %v960 = vpop.f32.mrb[0].mxu0
      %961 = vmatprep.mubr.bf16.mxu0 0
      %962 = vmatmul.mubr.bf16.gmra.mrb[0].mxu0 %v800
      %v963 = vpop.f32.mrb[0].mxu0
      %v964 = vadd.f32 0.0, %v963
      %v965 = vpop.f32.mrb[0].mxu0
      %v966 = vpop.f32.mrb[0].mxu0
      %v967 = vadd.f32 0.0, %v966
      %v968 = vpop.f32.mrb[0].mxu0
      %969 = vmatprep.mubr.bf16.mxu0 0
      %970 = vmatmul.mubr.bf16.gmra.mrb[0].mxu0 %v801
      %v971 = vpop.f32.mrb[0].mxu0
      %v972 = vadd.f32 0.0, %v971
      %v973 = vpop.f32.mrb[0].mxu0
      %v974 = vpop.f32.mrb[0].mxu0
      %v975 = vadd.f32 0.0, %v974
      %v976 = vpop.f32.mrb[0].mxu0
      %977 = vmatprep.mubr.bf16.mxu0 0
      %978 = vmatmul.mubr.bf16.gmra.mrb[0].mxu0 %v802
      %v979 = vpop.f32.mrb[0].mxu0
      %v980 = vadd.f32 0.0, %v979
      %v981 = vpop.f32.mrb[0].mxu0
      %v982 = vpop.f32.mrb[0].mxu0
      %v983 = vadd.f32 0.0, %v982
      %v984 = vpop.f32.mrb[0].mxu0
      %985 = vmatprep.mubr.bf16.mxu0 0
      %986 = vmatmul.mubr.bf16.gmra.mrb[0].mxu0 %v803
      %v987 = vpop.f32.mrb[0].mxu0
      %v988 = vadd.f32 0.0, %v987
      %v989 = vpop.f32.mrb[0].mxu0
      %v990 = vpop.f32.mrb[0].mxu0
      %v991 = vadd.f32 0.0, %v990
      %v992 = vpop.f32.mrb[0].mxu0
      %993 = vmatprep.mubr.bf16.mxu0 0
      %994 = vmatmul.mubr.bf16.gmra.mrb[0].mxu0 %v804
      %v995 = vpop.f32.mrb[0].mxu0
      %v996 = vadd.f32 0.0, %v995
      %v997 = vpop.f32.mrb[0].mxu0
      %v998 = vpop.f32.mrb[0].mxu0
      %v999 = vadd.f32 0.0, %v998
      %v1000 = vpop.f32.mrb[0].mxu0
      %1001 = vmatprep.mubr.bf16.mxu0 0
      %1002 = vmatmul.mubr.bf16.gmra.mrb[0].mxu0 %v805
      %v1003 = vpop.f32.mrb[0].mxu0
      %v1004 = vadd.f32 0.0, %v1003
      %v1005 = vpop.f32.mrb[0].mxu0
      %v1006 = vpop.f32.mrb[0].mxu0
      %v1007 = vadd.f32 0.0, %v1006
      %v1008 = vpop.f32.mrb[0].mxu0
      %1009 = vmatprep.mubr.bf16.mxu0 0
      %1010 = vmatmul.mubr.bf16.gmra.mrb[0].mxu0 %v806
      %v1011 = vpop.f32.mrb[0].mxu0
      %v1012 = vadd.f32 0.0, %v1011
      %v1013 = vpop.f32.mrb[0].mxu0
      %v1014 = vpop.f32.mrb[0].mxu0
      %v1015 = vadd.f32 0.0, %v1014
      %v1016 = vpop.f32.mrb[0].mxu0
      %1017 = vmatprep.mubr.bf16.mxu0 0
      %1018 = vmatmul.mubr.bf16.gmra.mrb[0].mxu0 %v807
      %v1019 = vpop.f32.mrb[0].mxu0
      %v1020 = vadd.f32 0.0, %v1019
      %v1021 = vpop.f32.mrb[0].mxu0
      %v1022 = vpop.f32.mrb[0].mxu0
      %v1023 = vadd.f32 0.0, %v1022
      %v1024 = vpop.f32.mrb[0].mxu0
      %1025 = vmatprep.mubr.bf16.mxu0 0
      %1026 = vmatmul.mubr.bf16.gmra.mrb[0].mxu0 %v808
      %v1027 = vpop.f32.mrb[0].mxu0
      %v1028 = vadd.f32 0.0, %v1027
      %v1029 = vpop.f32.mrb[0].mxu0
      %v1030 = vpop.f32.mrb[0].mxu0
      %v1031 = vadd.f32 0.0, %v1030
      %v1032 = vpop.f32.mrb[0].mxu0
      %1033 = vdwg.mxu0
      %v1066 = vunpack.c.l.b16 %v293
      %v1067 = vunpack.c.l.b16 %v294
      %v1068 = vunpack.c.l.b16 %v295
      %v1069 = vunpack.c.l.b16 %v296
      %v1070 = vunpack.c.l.b16 %v297
      %v1071 = vunpack.c.l.b16 %v298
      %v1072 = vunpack.c.l.b16 %v299
      %v1073 = vunpack.c.l.b16 %v300
      %v1074 = vunpack.c.l.b16 %v301
      %v1075 = vunpack.c.l.b16 %v302
      %v1076 = vunpack.c.l.b16 %v303
      %v1077 = vunpack.c.l.b16 %v304
      %v1078 = vunpack.c.l.b16 %v305
      %v1079 = vunpack.c.l.b16 %v306
      %v1080 = vunpack.c.l.b16 %v307
      %v1081 = vunpack.c.l.b16 %v308
      %v1082 = vunpack.c.l.b16 %v309
      %v1083 = vunpack.c.l.b16 %v310
      %v1084 = vunpack.c.l.b16 %v311
      %v1085 = vunpack.c.l.b16 %v312
      %v1086 = vunpack.c.l.b16 %v313
      %v1087 = vunpack.c.l.b16 %v314
      %v1088 = vunpack.c.l.b16 %v315
      %v1089 = vunpack.c.l.b16 %v316
      %v1090 = vunpack.c.l.b16 %v317
      %v1091 = vunpack.c.l.b16 %v318
      %v1092 = vunpack.c.l.b16 %v319
      %v1093 = vunpack.c.l.b16 %v320
      %v1094 = vunpack.c.l.b16 %v321
      %v1095 = vunpack.c.l.b16 %v322
      %v1096 = vunpack.c.l.b16 %v323
      %v1097 = vunpack.c.l.b16 %v324
      %v1098 = vpack.c.b16 %v1067, %v1066
      %v1099 = vpack.c.b16 %v1069, %v1068
      %v1100 = vpack.c.b16 %v1071, %v1070
      %v1101 = vpack.c.b16 %v1073, %v1072
      %v1102 = vpack.c.b16 %v1075, %v1074
      %v1103 = vpack.c.b16 %v1077, %v1076
      %v1104 = vpack.c.b16 %v1079, %v1078
      %v1105 = vpack.c.b16 %v1081, %v1080
      %v1106 = vpack.c.b16 %v1083, %v1082
      %v1107 = vpack.c.b16 %v1085, %v1084
      %v1108 = vpack.c.b16 %v1087, %v1086
      %v1109 = vpack.c.b16 %v1089, %v1088
      %v1110 = vpack.c.b16 %v1091, %v1090
      %v1111 = vpack.c.b16 %v1093, %v1092
      %v1112 = vpack.c.b16 %v1095, %v1094
      %v1113 = vpack.c.b16 %v1097, %v1096
      %v1146 = vunpack.c.l.b16 %v325
      %v1147 = vunpack.c.l.b16 %v326
      %v1148 = vunpack.c.l.b16 %v327
      %v1149 = vunpack.c.l.b16 %v328
      %v1150 = vunpack.c.l.b16 %v329
      %v1151 = vunpack.c.l.b16 %v330
      %v1152 = vunpack.c.l.b16 %v331
      %v1153 = vunpack.c.l.b16 %v332
      %v1154 = vunpack.c.l.b16 %v333
      %v1155 = vunpack.c.l.b16 %v334
      %v1156 = vunpack.c.l.b16 %v335
      %v1157 = vunpack.c.l.b16 %v336
      %v1158 = vunpack.c.l.b16 %v337
      %v1159 = vunpack.c.l.b16 %v338
      %v1160 = vunpack.c.l.b16 %v339
      %v1161 = vunpack.c.l.b16 %v340
      %v1162 = vpack.c.b16 %v1147, %v1146
      %v1163 = vpack.c.b16 %v1149, %v1148
      %v1164 = vpack.c.b16 %v1151, %v1150
      %v1165 = vpack.c.b16 %v1153, %v1152
      %v1166 = vpack.c.b16 %v1155, %v1154
      %v1167 = vpack.c.b16 %v1157, %v1156
      %v1168 = vpack.c.b16 %v1159, %v1158
      %v1169 = vpack.c.b16 %v1161, %v1160
      %1178 = vmatprep.subr.bf16.mxu0 0
      %1179 = vmatpush1.bf16.msra.mxu0 %v1162
      %1180 = vmatprep.subr.bf16.mxu0 0
      %1181 = vmatpush1.bf16.msra.mxu0 %v1163
      %1182 = vmatprep.subr.bf16.mxu0 0
      %1183 = vmatpush1.bf16.msra.mxu0 %v1164
      %1184 = vmatprep.subr.bf16.mxu0 0
      %1185 = vmatpush1.bf16.msra.mxu0 %v1165
      %1186 = vmatprep.subr.bf16.mxu0 0
      %1187 = vmatpush1.bf16.msra.mxu0 %v1166
      %1188 = vmatprep.subr.bf16.mxu0 0
      %1189 = vmatpush1.bf16.msra.mxu0 %v1167
      %1190 = vmatprep.subr.bf16.mxu0 0
      %1191 = vmatpush1.bf16.msra.mxu0 %v1168
      %1192 = vmatprep.subr.bf16.mxu0 0
      %1193 = vmatpush1.bf16.msra.mxu0 %v1169
      %1194 = vmatprep.subr.bf16.mxu0 0
      %1195 = vmatpush1.bf16.msra.mxu0 0
      %1196 = vmatprep.subr.bf16.mxu0 0
      %1197 = vmatpush1.bf16.msra.mxu0 0
      %1198 = vmatprep.subr.bf16.mxu0 0
      %1199 = vmatpush1.bf16.msra.mxu0 0
      %1200 = vmatprep.subr.bf16.mxu0 0
      %1201 = vmatpush1.bf16.msra.mxu0 0
      %1202 = vmatprep.subr.bf16.mxu0 0
      %1203 = vmatpush1.bf16.msra.mxu0 0
      %1204 = vmatprep.subr.bf16.mxu0 0
      %1205 = vmatpush1.bf16.msra.mxu0 0
      %1206 = vmatprep.subr.bf16.mxu0 0
      %1207 = vmatpush1.bf16.msra.mxu0 0
      %1208 = vmatprep.subr.bf16.mxu0 0
      %1209 = vmatpush1.bf16.msra.mxu0 0
      %1210 = vmatprep.mubr.bf16.mxu0 0
      %1211 = vmatmul.mubr.bf16.gmra.mrb[0].mxu0 %v1098
      %v1212 = vpop.f32.mrb[0].mxu0
      %v1213 = vadd.f32 %v908, %v1212
      %v1214 = vpop.f32.mrb[0].mxu0
      %v1215 = vpop.f32.mrb[0].mxu0
      %v1216 = vadd.f32 %v911, %v1215
      %v1217 = vpop.f32.mrb[0].mxu0
      %1218 = vmatprep.mubr.bf16.mxu0 0
      %1219 = vmatmul.mubr.bf16.gmra.mrb[0].mxu0 %v1099
      %v1220 = vpop.f32.mrb[0].mxu0
      %v1221 = vadd.f32 %v916, %v1220
      %v1222 = vpop.f32.mrb[0].mxu0
      %v1223 = vpop.f32.mrb[0].mxu0
      %v1224 = vadd.f32 %v919, %v1223
      %v1225 = vpop.f32.mrb[0].mxu0
      %1226 = vmatprep.mubr.bf16.mxu0 0
      %1227 = vmatmul.mubr.bf16.gmra.mrb[0].mxu0 %v1100
      %v1228 = vpop.f32.mrb[0].mxu0
      %v1229 = vadd.f32 %v924, %v1228
      %v1230 = vpop.f32.mrb[0].mxu0
      %v1231 = vpop.f32.mrb[0].mxu0
      %v1232 = vadd.f32 %v927, %v1231
      %v1233 = vpop.f32.mrb[0].mxu0
      %1234 = vmatprep.mubr.bf16.mxu0 0
      %1235 = vmatmul.mubr.bf16.gmra.mrb[0].mxu0 %v1101
      %v1236 = vpop.f32.mrb[0].mxu0
      %v1237 = vadd.f32 %v932, %v1236
      %v1238 = vpop.f32.mrb[0].mxu0
      %v1239 = vpop.f32.mrb[0].mxu0
      %v1240 = vadd.f32 %v935, %v1239
      %v1241 = vpop.f32.mrb[0].mxu0
      %1242 = vmatprep.mubr.bf16.mxu0 0
      %1243 = vmatmul.mubr.bf16.gmra.mrb[0].mxu0 %v1102
      %v1244 = vpop.f32.mrb[0].mxu0
      %v1245 = vadd.f32 %v940, %v1244
      %v1246 = vpop.f32.mrb[0].mxu0
      %v1247 = vpop.f32.mrb[0].mxu0
      %v1248 = vadd.f32 %v943, %v1247
      %v1249 = vpop.f32.mrb[0].mxu0
      %1250 = vmatprep.mubr.bf16.mxu0 0
      %1251 = vmatmul.mubr.bf16.gmra.mrb[0].mxu0 %v1103
      %v1252 = vpop.f32.mrb[0].mxu0
      %v1253 = vadd.f32 %v948, %v1252
      %v1254 = vpop.f32.mrb[0].mxu0
      %v1255 = vpop.f32.mrb[0].mxu0
      %v1256 = vadd.f32 %v951, %v1255
      %v1257 = vpop.f32.mrb[0].mxu0
      %1258 = vmatprep.mubr.bf16.mxu0 0
      %1259 = vmatmul.mubr.bf16.gmra.mrb[0].mxu0 %v1104
      %v1260 = vpop.f32.mrb[0].mxu0
      %v1261 = vadd.f32 %v956, %v1260
      %v1262 = vpop.f32.mrb[0].mxu0
      %v1263 = vpop.f32.mrb[0].mxu0
      %v1264 = vadd.f32 %v959, %v1263
      %v1265 = vpop.f32.mrb[0].mxu0
      %1266 = vmatprep.mubr.bf16.mxu0 0
      %1267 = vmatmul.mubr.bf16.gmra.mrb[0].mxu0 %v1105
      %v1268 = vpop.f32.mrb[0].mxu0
      %v1269 = vadd.f32 %v964, %v1268
      %v1270 = vpop.f32.mrb[0].mxu0
      %v1271 = vpop.f32.mrb[0].mxu0
      %v1272 = vadd.f32 %v967, %v1271
      %v1273 = vpop.f32.mrb[0].mxu0
      %1274 = vmatprep.mubr.bf16.mxu0 0
      %1275 = vmatmul.mubr.bf16.gmra.mrb[0].mxu0 %v1106
      %v1276 = vpop.f32.mrb[0].mxu0
      %v1277 = vadd.f32 %v972, %v1276
      %v1278 = vpop.f32.mrb[0].mxu0
      %v1279 = vpop.f32.mrb[0].mxu0
      %v1280 = vadd.f32 %v975, %v1279
      %v1281 = vpop.f32.mrb[0].mxu0
      %1282 = vmatprep.mubr.bf16.mxu0 0
      %1283 = vmatmul.mubr.bf16.gmra.mrb[0].mxu0 %v1107
      %v1284 = vpop.f32.mrb[0].mxu0
      %v1285 = vadd.f32 %v980, %v1284
      %v1286 = vpop.f32.mrb[0].mxu0
      %v1287 = vpop.f32.mrb[0].mxu0
      %v1288 = vadd.f32 %v983, %v1287
      %v1289 = vpop.f32.mrb[0].mxu0
      %1290 = vmatprep.mubr.bf16.mxu0 0
      %1291 = vmatmul.mubr.bf16.gmra.mrb[0].mxu0 %v1108
      %v1292 = vpop.f32.mrb[0].mxu0
      %v1293 = vadd.f32 %v988, %v1292
      %v1294 = vpop.f32.mrb[0].mxu0
      %v1295 = vpop.f32.mrb[0].mxu0
      %v1296 = vadd.f32 %v991, %v1295
      %v1297 = vpop.f32.mrb[0].mxu0
      %1298 = vmatprep.mubr.bf16.mxu0 0
      %1299 = vmatmul.mubr.bf16.gmra.mrb[0].mxu0 %v1109
      %v1300 = vpop.f32.mrb[0].mxu0
      %v1301 = vadd.f32 %v996, %v1300
      %v1302 = vpop.f32.mrb[0].mxu0
      %v1303 = vpop.f32.mrb[0].mxu0
      %v1304 = vadd.f32 %v999, %v1303
      %v1305 = vpop.f32.mrb[0].mxu0
      %1306 = vmatprep.mubr.bf16.mxu0 0
      %1307 = vmatmul.mubr.bf16.gmra.mrb[0].mxu0 %v1110
      %v1308 = vpop.f32.mrb[0].mxu0
      %v1309 = vadd.f32 %v1004, %v1308
      %v1310 = vpop.f32.mrb[0].mxu0
      %v1311 = vpop.f32.mrb[0].mxu0
      %v1312 = vadd.f32 %v1007, %v1311
      %v1313 = vpop.f32.mrb[0].mxu0
      %1314 = vmatprep.mubr.bf16.mxu0 0
      %1315 = vmatmul.mubr.bf16.gmra.mrb[0].mxu0 %v1111
      %v1316 = vpop.f32.mrb[0].mxu0
      %v1317 = vadd.f32 %v1012, %v1316
      %v1318 = vpop.f32.mrb[0].mxu0
      %v1319 = vpop.f32.mrb[0].mxu0
      %v1320 = vadd.f32 %v1015, %v1319
      %v1321 = vpop.f32.mrb[0].mxu0
      %1322 = vmatprep.mubr.bf16.mxu0 0
      %1323 = vmatmul.mubr.bf16.gmra.mrb[0].mxu0 %v1112
      %v1324 = vpop.f32.mrb[0].mxu0
      %v1325 = vadd.f32 %v1020, %v1324
      %v1326 = vpop.f32.mrb[0].mxu0
      %v1327 = vpop.f32.mrb[0].mxu0
      %v1328 = vadd.f32 %v1023, %v1327
      %v1329 = vpop.f32.mrb[0].mxu0
      %1330 = vmatprep.mubr.bf16.mxu0 0
      %1331 = vmatmul.mubr.bf16.gmra.mrb[0].mxu0 %v1113
      %v1332 = vpop.f32.mrb[0].mxu0
      %v1333 = vadd.f32 %v1028, %v1332
      %v1334 = vpop.f32.mrb[0].mxu0
      %v1335 = vpop.f32.mrb[0].mxu0
      %v1336 = vadd.f32 %v1031, %v1335
      %v1337 = vpop.f32.mrb[0].mxu0
      %1338 = vdwg.mxu0
      %v1339 = vld [vmem:[%s266] sm:$0xe]
      %v1340 = vld [vmem:[%s266 + $0xc] sm:$0xe]
      %v1341 = vld [vmem:[%s266 + $0x18] sm:$0xe]
      %v1342 = vld [vmem:[%s266 + $0x24] sm:$0xe]
      %v1343 = vld [vmem:[%s266 + $0x30] sm:$0xe]
      %v1344 = vld [vmem:[%s266 + $0x3c] sm:$0xe]
      %v1345 = vld [vmem:[%s266 + $0x48] sm:$0xe]
      %v1346 = vld [vmem:[%s266 + $0x54] sm:$0xe]
      %v1347 = vld [vmem:[%s266 + $0x60] sm:$0xe]
      %v1348 = vld [vmem:[%s266 + $0x6c] sm:$0xe]
      %v1349 = vld [vmem:[%s266 + $0x78] sm:$0xe]
      %v1350 = vld [vmem:[%s266 + $0x84] sm:$0xe]
      %v1351 = vld [vmem:[%s266 + $0x90] sm:$0xe]
      %v1352 = vld [vmem:[%s266 + $0x9c] sm:$0xe]
      %v1353 = vld [vmem:[%s266 + $0xa8] sm:$0xe]
      %v1354 = vld [vmem:[%s266 + $0xb4] sm:$0xe]
      %vm1387 = vcmask 1042432
      %vm1388 = vcmask 1046532
      %vm1389 = vmor %vm1387, %vm1388
      %v1390 = vrot.slane %v1339, 5
      %v1391 = vrot.slane %v1390, 4
      %v1392 = vrot.slane %v294, 5
      %v1393 = vsel %vm1389, %v1391, %v1392
      %v1394 = vrot.slane %v1392, 4
      %v1395 = vrot.slane %v341, 5
      %v1396 = vsel %vm1389, %v1394, %v1395
      %v1397 = vrot.slane %v1340, 5
      %v1398 = vrot.slane %v1397, 4
      %v1399 = vrot.slane %v296, 5
      %v1400 = vsel %vm1389, %v1398, %v1399
      %v1401 = vrot.slane %v1399, 4
      %v1402 = vrot.slane %v342, 5
      %v1403 = vsel %vm1389, %v1401, %v1402
      %v1404 = vrot.slane %v1341, 5
      %v1405 = vrot.slane %v1404, 4
      %v1406 = vrot.slane %v298, 5
      %v1407 = vsel %vm1389, %v1405, %v1406
      %v1408 = vrot.slane %v1406, 4
      %v1409 = vrot.slane %v343, 5
      %v1410 = vsel %vm1389, %v1408, %v1409
      %v1411 = vrot.slane %v1342, 5
      %v1412 = vrot.slane %v1411, 4
      %v1413 = vrot.slane %v300, 5
      %v1414 = vsel %vm1389, %v1412, %v1413
      %v1415 = vrot.slane %v1413, 4
      %v1416 = vrot.slane %v344, 5
      %v1417 = vsel %vm1389, %v1415, %v1416
      %v1418 = vrot.slane %v1343, 5
      %v1419 = vrot.slane %v1418, 4
      %v1420 = vrot.slane %v302, 5
      %v1421 = vsel %vm1389, %v1419, %v1420
      %v1422 = vrot.slane %v1420, 4
      %v1423 = vrot.slane %v345, 5
      %v1424 = vsel %vm1389, %v1422, %v1423
      %v1425 = vrot.slane %v1344, 5
      %v1426 = vrot.slane %v1425, 4
      %v1427 = vrot.slane %v304, 5
      %v1428 = vsel %vm1389, %v1426, %v1427
      %v1429 = vrot.slane %v1427, 4
      %v1430 = vrot.slane %v346, 5
      %v1431 = vsel %vm1389, %v1429, %v1430
      %v1432 = vrot.slane %v1345, 5
      %v1433 = vrot.slane %v1432, 4
      %v1434 = vrot.slane %v306, 5
      %v1435 = vsel %vm1389, %v1433, %v1434
      %v1436 = vrot.slane %v1434, 4
      %v1437 = vrot.slane %v347, 5
      %v1438 = vsel %vm1389, %v1436, %v1437
      %v1439 = vrot.slane %v1346, 5
      %v1440 = vrot.slane %v1439, 4
      %v1441 = vrot.slane %v308, 5
      %v1442 = vsel %vm1389, %v1440, %v1441
      %v1443 = vrot.slane %v1441, 4
      %v1444 = vrot.slane %v348, 5
      %v1445 = vsel %vm1389, %v1443, %v1444
      %v1446 = vrot.slane %v1347, 5
      %v1447 = vrot.slane %v1446, 4
      %v1448 = vrot.slane %v310, 5
      %v1449 = vsel %vm1389, %v1447, %v1448
      %v1450 = vrot.slane %v1448, 4
      %v1451 = vrot.slane %v349, 5
      %v1452 = vsel %vm1389, %v1450, %v1451
      %v1453 = vrot.slane %v1348, 5
      %v1454 = vrot.slane %v1453, 4
      %v1455 = vrot.slane %v312, 5
      %v1456 = vsel %vm1389, %v1454, %v1455
      %v1457 = vrot.slane %v1455, 4
      %v1458 = vrot.slane %v350, 5
      %v1459 = vsel %vm1389, %v1457, %v1458
      %v1460 = vrot.slane %v1349, 5
      %v1461 = vrot.slane %v1460, 4
      %v1462 = vrot.slane %v314, 5
      %v1463 = vsel %vm1389, %v1461, %v1462
      %v1464 = vrot.slane %v1462, 4
      %v1465 = vrot.slane %v351, 5
      %v1466 = vsel %vm1389, %v1464, %v1465
      %v1467 = vrot.slane %v1350, 5
      %v1468 = vrot.slane %v1467, 4
      %v1469 = vrot.slane %v316, 5
      %v1470 = vsel %vm1389, %v1468, %v1469
      %v1471 = vrot.slane %v1469, 4
      %v1472 = vrot.slane %v352, 5
      %v1473 = vsel %vm1389, %v1471, %v1472
      %v1474 = vrot.slane %v1351, 5
      %v1475 = vrot.slane %v1474, 4
      %v1476 = vrot.slane %v318, 5
      %v1477 = vsel %vm1389, %v1475, %v1476
      %v1478 = vrot.slane %v1476, 4
      %v1479 = vrot.slane %v353, 5
      %v1480 = vsel %vm1389, %v1478, %v1479
      %v1481 = vrot.slane %v1352, 5
      %v1482 = vrot.slane %v1481, 4
      %v1483 = vrot.slane %v320, 5
      %v1484 = vsel %vm1389, %v1482, %v1483
      %v1485 = vrot.slane %v1483, 4
      %v1486 = vrot.slane %v354, 5
      %v1487 = vsel %vm1389, %v1485, %v1486
      %v1488 = vrot.slane %v1353, 5
      %v1489 = vrot.slane %v1488, 4
      %v1490 = vrot.slane %v322, 5
      %v1491 = vsel %vm1389, %v1489, %v1490
      %v1492 = vrot.slane %v1490, 4
      %v1493 = vrot.slane %v355, 5
      %v1494 = vsel %vm1389, %v1492, %v1493
      %v1495 = vrot.slane %v1354, 5
      %v1496 = vrot.slane %v1495, 4
      %v1497 = vrot.slane %v324, 5
      %v1498 = vsel %vm1389, %v1496, %v1497
      %v1499 = vrot.slane %v1497, 4
      %v1500 = vrot.slane %v356, 5
      %v1501 = vsel %vm1389, %v1499, %v1500
      %s1502 = scalar_lea.vmem %s3, 128
      %v1503 = vld [vmem:[%s1502] sm:$0xf]
      %v1504 = vld [vmem:[%s1502 + $0x4] sm:$0xf]
      %v1505 = vld [vmem:[%s1502 + $0x8] sm:$0xf]
      %v1506 = vld [vmem:[%s1502 + $0xc] sm:$0xf]
      %v1507 = vld [vmem:[%s1502 + $0x10] sm:$0xf]
      %v1508 = vld [vmem:[%s1502 + $0x14] sm:$0xf]
      %v1509 = vld [vmem:[%s1502 + $0x18] sm:$0xf]
      %v1510 = vld [vmem:[%s1502 + $0x1c] sm:$0xf]
      %v1511 = vld [vmem:[%s1502 + $0x20] sm:$0xf]
      %v1512 = vld [vmem:[%s1502 + $0x24] sm:$0xf]
      %v1513 = vld [vmem:[%s1502 + $0x28] sm:$0xf]
      %v1514 = vld [vmem:[%s1502 + $0x2c] sm:$0xf]
      %v1515 = vld [vmem:[%s1502 + $0x30] sm:$0xf]
      %v1516 = vld [vmem:[%s1502 + $0x34] sm:$0xf]
      %v1517 = vld [vmem:[%s1502 + $0x38] sm:$0xf]
      %v1518 = vld [vmem:[%s1502 + $0x3c] sm:$0xf]
      %v1519 = vunpack.c.l.b16 %v1393
      %v1520 = vunpack.c.l.b16 %v1396
      %v1521 = vunpack.c.l.b16 %v1400
      %v1522 = vunpack.c.l.b16 %v1403
      %v1523 = vunpack.c.l.b16 %v1407
      %v1524 = vunpack.c.l.b16 %v1410
      %v1525 = vunpack.c.l.b16 %v1414
      %v1526 = vunpack.c.l.b16 %v1417
      %v1527 = vunpack.c.l.b16 %v1421
      %v1528 = vunpack.c.l.b16 %v1424
      %v1529 = vunpack.c.l.b16 %v1428
      %v1530 = vunpack.c.l.b16 %v1431
      %v1531 = vunpack.c.l.b16 %v1435
      %v1532 = vunpack.c.l.b16 %v1438
      %v1533 = vunpack.c.l.b16 %v1442
      %v1534 = vunpack.c.l.b16 %v1445
      %v1535 = vunpack.c.l.b16 %v1449
      %v1536 = vunpack.c.l.b16 %v1452
      %v1537 = vunpack.c.l.b16 %v1456
      %v1538 = vunpack.c.l.b16 %v1459
      %v1539 = vunpack.c.l.b16 %v1463
      %v1540 = vunpack.c.l.b16 %v1466
      %v1541 = vunpack.c.l.b16 %v1470
      %v1542 = vunpack.c.l.b16 %v1473
      %v1543 = vunpack.c.l.b16 %v1477
      %v1544 = vunpack.c.l.b16 %v1480
      %v1545 = vunpack.c.l.b16 %v1484
      %v1546 = vunpack.c.l.b16 %v1487
      %v1547 = vunpack.c.l.b16 %v1491
      %v1548 = vunpack.c.l.b16 %v1494
      %v1549 = vunpack.c.l.b16 %v1498
      %v1550 = vunpack.c.l.b16 %v1501
      %v1551 = vpack.c.b16 %v1520, %v1519
      %v1552 = vpack.c.b16 %v1522, %v1521
      %v1553 = vpack.c.b16 %v1524, %v1523
      %v1554 = vpack.c.b16 %v1526, %v1525
      %v1555 = vpack.c.b16 %v1528, %v1527
      %v1556 = vpack.c.b16 %v1530, %v1529
      %v1557 = vpack.c.b16 %v1532, %v1531
      %v1558 = vpack.c.b16 %v1534, %v1533
      %v1559 = vpack.c.b16 %v1536, %v1535
      %v1560 = vpack.c.b16 %v1538, %v1537
      %v1561 = vpack.c.b16 %v1540, %v1539
      %v1562 = vpack.c.b16 %v1542, %v1541
      %v1563 = vpack.c.b16 %v1544, %v1543
      %v1564 = vpack.c.b16 %v1546, %v1545
      %v1565 = vpack.c.b16 %v1548, %v1547
      %v1566 = vpack.c.b16 %v1550, %v1549
      %v1599 = vunpack.c.l.b16 %v1503
      %v1600 = vunpack.c.l.b16 %v1504
      %v1601 = vunpack.c.l.b16 %v1505
      %v1602 = vunpack.c.l.b16 %v1506
      %v1603 = vunpack.c.l.b16 %v1507
      %v1604 = vunpack.c.l.b16 %v1508
      %v1605 = vunpack.c.l.b16 %v1509
      %v1606 = vunpack.c.l.b16 %v1510
      %v1607 = vunpack.c.l.b16 %v1511
      %v1608 = vunpack.c.l.b16 %v1512
      %v1609 = vunpack.c.l.b16 %v1513
      %v1610 = vunpack.c.l.b16 %v1514
      %v1611 = vunpack.c.l.b16 %v1515
      %v1612 = vunpack.c.l.b16 %v1516
      %v1613 = vunpack.c.l.b16 %v1517
      %v1614 = vunpack.c.l.b16 %v1518
      %v1615 = vpack.c.b16 %v1600, %v1599
      %v1616 = vpack.c.b16 %v1602, %v1601
      %v1617 = vpack.c.b16 %v1604, %v1603
      %v1618 = vpack.c.b16 %v1606, %v1605
      %v1619 = vpack.c.b16 %v1608, %v1607
      %v1620 = vpack.c.b16 %v1610, %v1609
      %v1621 = vpack.c.b16 %v1612, %v1611
      %v1622 = vpack.c.b16 %v1614, %v1613
      %1631 = vmatprep.subr.bf16.mxu0 0
      %1632 = vmatpush1.bf16.msra.mxu0 %v1615
      %1633 = vmatprep.subr.bf16.mxu0 0
      %1634 = vmatpush1.bf16.msra.mxu0 %v1616
      %1635 = vmatprep.subr.bf16.mxu0 0
      %1636 = vmatpush1.bf16.msra.mxu0 %v1617
      %1637 = vmatprep.subr.bf16.mxu0 0
      %1638 = vmatpush1.bf16.msra.mxu0 %v1618
      %1639 = vmatprep.subr.bf16.mxu0 0
      %1640 = vmatpush1.bf16.msra.mxu0 %v1619
      %1641 = vmatprep.subr.bf16.mxu0 0
      %1642 = vmatpush1.bf16.msra.mxu0 %v1620
      %1643 = vmatprep.subr.bf16.mxu0 0
      %1644 = vmatpush1.bf16.msra.mxu0 %v1621
      %1645 = vmatprep.subr.bf16.mxu0 0
      %1646 = vmatpush1.bf16.msra.mxu0 %v1622
      %1647 = vmatprep.subr.bf16.mxu0 0
      %1648 = vmatpush1.bf16.msra.mxu0 0
      %1649 = vmatprep.subr.bf16.mxu0 0
      %1650 = vmatpush1.bf16.msra.mxu0 0
      %1651 = vmatprep.subr.bf16.mxu0 0
      %1652 = vmatpush1.bf16.msra.mxu0 0
      %1653 = vmatprep.subr.bf16.mxu0 0
      %1654 = vmatpush1.bf16.msra.mxu0 0
      %1655 = vmatprep.subr.bf16.mxu0 0
      %1656 = vmatpush1.bf16.msra.mxu0 0
      %1657 = vmatprep.subr.bf16.mxu0 0
      %1658 = vmatpush1.bf16.msra.mxu0 0
      %1659 = vmatprep.subr.bf16.mxu0 0
      %1660 = vmatpush1.bf16.msra.mxu0 0
      %1661 = vmatprep.subr.bf16.mxu0 0
      %1662 = vmatpush1.bf16.msra.mxu0 0
      %1663 = vmatprep.mubr.bf16.mxu0 0
      %1664 = vmatmul.mubr.bf16.gmra.mrb[0].mxu0 %v1551
      %v1665 = vpop.f32.mrb[0].mxu0
      %v1666 = vadd.f32 0.0, %v1665
      %v1667 = vpop.f32.mrb[0].mxu0
      %v1668 = vpop.f32.mrb[0].mxu0
      %v1669 = vadd.f32 0.0, %v1668
      %v1670 = vpop.f32.mrb[0].mxu0
      %1671 = vmatprep.mubr.bf16.mxu0 0
      %1672 = vmatmul.mubr.bf16.gmra.mrb[0].mxu0 %v1552
      %v1673 = vpop.f32.mrb[0].mxu0
      %v1674 = vadd.f32 0.0, %v1673
      %v1675 = vpop.f32.mrb[0].mxu0
      %v1676 = vpop.f32.mrb[0].mxu0
      %v1677 = vadd.f32 0.0, %v1676
      %v1678 = vpop.f32.mrb[0].mxu0
      %1679 = vmatprep.mubr.bf16.mxu0 0
      %1680 = vmatmul.mubr.bf16.gmra.mrb[0].mxu0 %v1553
      %v1681 = vpop.f32.mrb[0].mxu0
      %v1682 = vadd.f32 0.0, %v1681
      %v1683 = vpop.f32.mrb[0].mxu0
      %v1684 = vpop.f32.mrb[0].mxu0
      %v1685 = vadd.f32 0.0, %v1684
      %v1686 = vpop.f32.mrb[0].mxu0
      %1687 = vmatprep.mubr.bf16.mxu0 0
      %1688 = vmatmul.mubr.bf16.gmra.mrb[0].mxu0 %v1554
      %v1689 = vpop.f32.mrb[0].mxu0
      %v1690 = vadd.f32 0.0, %v1689
      %v1691 = vpop.f32.mrb[0].mxu0
      %v1692 = vpop.f32.mrb[0].mxu0
      %v1693 = vadd.f32 0.0, %v1692
      %v1694 = vpop.f32.mrb[0].mxu0
      %1695 = vmatprep.mubr.bf16.mxu0 0
      %1696 = vmatmul.mubr.bf16.gmra.mrb[0].mxu0 %v1555
      %v1697 = vpop.f32.mrb[0].mxu0
      %v1698 = vadd.f32 0.0, %v1697
      %v1699 = vpop.f32.mrb[0].mxu0
      %v1700 = vpop.f32.mrb[0].mxu0
      %v1701 = vadd.f32 0.0, %v1700
      %v1702 = vpop.f32.mrb[0].mxu0
      %1703 = vmatprep.mubr.bf16.mxu0 0
      %1704 = vmatmul.mubr.bf16.gmra.mrb[0].mxu0 %v1556
      %v1705 = vpop.f32.mrb[0].mxu0
      %v1706 = vadd.f32 0.0, %v1705
      %v1707 = vpop.f32.mrb[0].mxu0
      %v1708 = vpop.f32.mrb[0].mxu0
      %v1709 = vadd.f32 0.0, %v1708
      %v1710 = vpop.f32.mrb[0].mxu0
      %1711 = vmatprep.mubr.bf16.mxu0 0
      %1712 = vmatmul.mubr.bf16.gmra.mrb[0].mxu0 %v1557
      %v1713 = vpop.f32.mrb[0].mxu0
      %v1714 = vadd.f32 0.0, %v1713
      %v1715 = vpop.f32.mrb[0].mxu0
      %v1716 = vpop.f32.mrb[0].mxu0
      %v1717 = vadd.f32 0.0, %v1716
      %v1718 = vpop.f32.mrb[0].mxu0
      %1719 = vmatprep.mubr.bf16.mxu0 0
      %1720 = vmatmul.mubr.bf16.gmra.mrb[0].mxu0 %v1558
      %v1721 = vpop.f32.mrb[0].mxu0
      %v1722 = vadd.f32 0.0, %v1721
      %v1723 = vpop.f32.mrb[0].mxu0
      %v1724 = vpop.f32.mrb[0].mxu0
      %v1725 = vadd.f32 0.0, %v1724
      %v1726 = vpop.f32.mrb[0].mxu0
      %1727 = vmatprep.mubr.bf16.mxu0 0
      %1728 = vmatmul.mubr.bf16.gmra.mrb[0].mxu0 %v1559
      %v1729 = vpop.f32.mrb[0].mxu0
      %v1730 = vadd.f32 0.0, %v1729
      %v1731 = vpop.f32.mrb[0].mxu0
      %v1732 = vpop.f32.mrb[0].mxu0
      %v1733 = vadd.f32 0.0, %v1732
      %v1734 = vpop.f32.mrb[0].mxu0
      %1735 = vmatprep.mubr.bf16.mxu0 0
      %1736 = vmatmul.mubr.bf16.gmra.mrb[0].mxu0 %v1560
      %v1737 = vpop.f32.mrb[0].mxu0
      %v1738 = vadd.f32 0.0, %v1737
      %v1739 = vpop.f32.mrb[0].mxu0
      %v1740 = vpop.f32.mrb[0].mxu0
      %v1741 = vadd.f32 0.0, %v1740
      %v1742 = vpop.f32.mrb[0].mxu0
      %1743 = vmatprep.mubr.bf16.mxu0 0
      %1744 = vmatmul.mubr.bf16.gmra.mrb[0].mxu0 %v1561
      %v1745 = vpop.f32.mrb[0].mxu0
      %v1746 = vadd.f32 0.0, %v1745
      %v1747 = vpop.f32.mrb[0].mxu0
      %v1748 = vpop.f32.mrb[0].mxu0
      %v1749 = vadd.f32 0.0, %v1748
      %v1750 = vpop.f32.mrb[0].mxu0
      %1751 = vmatprep.mubr.bf16.mxu0 0
      %1752 = vmatmul.mubr.bf16.gmra.mrb[0].mxu0 %v1562
      %v1753 = vpop.f32.mrb[0].mxu0
      %v1754 = vadd.f32 0.0, %v1753
      %v1755 = vpop.f32.mrb[0].mxu0
      %v1756 = vpop.f32.mrb[0].mxu0
      %v1757 = vadd.f32 0.0, %v1756
      %v1758 = vpop.f32.mrb[0].mxu0
      %1759 = vmatprep.mubr.bf16.mxu0 0
      %1760 = vmatmul.mubr.bf16.gmra.mrb[0].mxu0 %v1563
      %v1761 = vpop.f32.mrb[0].mxu0
      %v1762 = vadd.f32 0.0, %v1761
      %v1763 = vpop.f32.mrb[0].mxu0
      %v1764 = vpop.f32.mrb[0].mxu0
      %v1765 = vadd.f32 0.0, %v1764
      %v1766 = vpop.f32.mrb[0].mxu0
      %1767 = vmatprep.mubr.bf16.mxu0 0
      %1768 = vmatmul.mubr.bf16.gmra.mrb[0].mxu0 %v1564
      %v1769 = vpop.f32.mrb[0].mxu0
      %v1770 = vadd.f32 0.0, %v1769
      %v1771 = vpop.f32.mrb[0].mxu0
      %v1772 = vpop.f32.mrb[0].mxu0
      %v1773 = vadd.f32 0.0, %v1772
      %v1774 = vpop.f32.mrb[0].mxu0
      %1775 = vmatprep.mubr.bf16.mxu0 0
      %1776 = vmatmul.mubr.bf16.gmra.mrb[0].mxu0 %v1565
      %v1777 = vpop.f32.mrb[0].mxu0
      %v1778 = vadd.f32 0.0, %v1777
      %v1779 = vpop.f32.mrb[0].mxu0
      %v1780 = vpop.f32.mrb[0].mxu0
      %v1781 = vadd.f32 0.0, %v1780
      %v1782 = vpop.f32.mrb[0].mxu0
      %1783 = vmatprep.mubr.bf16.mxu0 0
      %1784 = vmatmul.mubr.bf16.gmra.mrb[0].mxu0 %v1566
      %v1785 = vpop.f32.mrb[0].mxu0
      %v1786 = vadd.f32 0.0, %v1785
      %v1787 = vpop.f32.mrb[0].mxu0
      %v1788 = vpop.f32.mrb[0].mxu0
      %v1789 = vadd.f32 0.0, %v1788
      %v1790 = vpop.f32.mrb[0].mxu0
      %1791 = vdwg.mxu0
      %v1792 = vadd.f32 %v1213, %v1666
      %v1793 = vadd.f32 %v1216, %v1669
      %v1794 = vadd.f32 %v1221, %v1674
      %v1795 = vadd.f32 %v1224, %v1677
      %v1796 = vadd.f32 %v1229, %v1682
      %v1797 = vadd.f32 %v1232, %v1685
      %v1798 = vadd.f32 %v1237, %v1690
      %v1799 = vadd.f32 %v1240, %v1693
      %v1800 = vadd.f32 %v1245, %v1698
      %v1801 = vadd.f32 %v1248, %v1701
      %v1802 = vadd.f32 %v1253, %v1706
      %v1803 = vadd.f32 %v1256, %v1709
      %v1804 = vadd.f32 %v1261, %v1714
      %v1805 = vadd.f32 %v1264, %v1717
      %v1806 = vadd.f32 %v1269, %v1722
      %v1807 = vadd.f32 %v1272, %v1725
      %v1808 = vadd.f32 %v1277, %v1730
      %v1809 = vadd.f32 %v1280, %v1733
      %v1810 = vadd.f32 %v1285, %v1738
      %v1811 = vadd.f32 %v1288, %v1741
      %v1812 = vadd.f32 %v1293, %v1746
      %v1813 = vadd.f32 %v1296, %v1749
      %v1814 = vadd.f32 %v1301, %v1754
      %v1815 = vadd.f32 %v1304, %v1757
      %v1816 = vadd.f32 %v1309, %v1762
      %v1817 = vadd.f32 %v1312, %v1765
      %v1818 = vadd.f32 %v1317, %v1770
      %v1819 = vadd.f32 %v1320, %v1773
      %v1820 = vadd.f32 %v1325, %v1778
      %v1821 = vadd.f32 %v1328, %v1781
      %v1822 = vadd.f32 %v1333, %v1786
      %v1823 = vadd.f32 %v1336, %v1789
      %v1824 = vld [vmem:[%s273] sm:$0xf]
      %v1825 = vld [vmem:[%s273 + $0x4] sm:$0xf]
      %v1826 = vld [vmem:[%s273 + $0xc] sm:$0xf]
      %v1827 = vld [vmem:[%s273 + $0x10] sm:$0xf]
      %v1828 = vld [vmem:[%s273 + $0x18] sm:$0xf]
      %v1829 = vld [vmem:[%s273 + $0x1c] sm:$0xf]
      %v1830 = vld [vmem:[%s273 + $0x24] sm:$0xf]
      %v1831 = vld [vmem:[%s273 + $0x28] sm:$0xf]
      %v1832 = vld [vmem:[%s273 + $0x30] sm:$0xf]
      %v1833 = vld [vmem:[%s273 + $0x34] sm:$0xf]
      %v1834 = vld [vmem:[%s273 + $0x3c] sm:$0xf]
      %v1835 = vld [vmem:[%s273 + $0x40] sm:$0xf]
      %v1836 = vld [vmem:[%s273 + $0x48] sm:$0xf]
      %v1837 = vld [vmem:[%s273 + $0x4c] sm:$0xf]
      %v1838 = vld [vmem:[%s273 + $0x54] sm:$0xf]
      %v1839 = vld [vmem:[%s273 + $0x58] sm:$0xf]
      %v1840 = vld [vmem:[%s273 + $0x60] sm:$0xf]
      %v1841 = vld [vmem:[%s273 + $0x64] sm:$0xf]
      %v1842 = vld [vmem:[%s273 + $0x6c] sm:$0xf]
      %v1843 = vld [vmem:[%s273 + $0x70] sm:$0xf]
      %v1844 = vld [vmem:[%s273 + $0x78] sm:$0xf]
      %v1845 = vld [vmem:[%s273 + $0x7c] sm:$0xf]
      %v1846 = vld [vmem:[%s273 + $0x84] sm:$0xf]
      %v1847 = vld [vmem:[%s273 + $0x88] sm:$0xf]
      %v1848 = vld [vmem:[%s273 + $0x90] sm:$0xf]
      %v1849 = vld [vmem:[%s273 + $0x94] sm:$0xf]
      %v1850 = vld [vmem:[%s273 + $0x9c] sm:$0xf]
      %v1851 = vld [vmem:[%s273 + $0xa0] sm:$0xf]
      %v1852 = vld [vmem:[%s273 + $0xa8] sm:$0xf]
      %v1853 = vld [vmem:[%s273 + $0xac] sm:$0xf]
      %v1854 = vld [vmem:[%s273 + $0xb4] sm:$0xf]
      %v1855 = vld [vmem:[%s273 + $0xb8] sm:$0xf]
      %s1856 = scalar_lea.vmem %s3, 192
      %v1857 = vld [vmem:[%s1856] sm:$0xf]
      %v1858 = vld [vmem:[%s1856 + $0x4] sm:$0xf]
      %v1859 = vld [vmem:[%s1856 + $0x8] sm:$0xf]
      %v1860 = vld [vmem:[%s1856 + $0xc] sm:$0xf]
      %v1861 = vld [vmem:[%s1856 + $0x10] sm:$0xf]
      %v1862 = vld [vmem:[%s1856 + $0x14] sm:$0xf]
      %v1863 = vld [vmem:[%s1856 + $0x18] sm:$0xf]
      %v1864 = vld [vmem:[%s1856 + $0x1c] sm:$0xf]
      %v1865 = vld [vmem:[%s1856 + $0x20] sm:$0xf]
      %v1866 = vld [vmem:[%s1856 + $0x24] sm:$0xf]
      %v1867 = vld [vmem:[%s1856 + $0x28] sm:$0xf]
      %v1868 = vld [vmem:[%s1856 + $0x2c] sm:$0xf]
      %v1869 = vld [vmem:[%s1856 + $0x30] sm:$0xf]
      %v1870 = vld [vmem:[%s1856 + $0x34] sm:$0xf]
      %v1871 = vld [vmem:[%s1856 + $0x38] sm:$0xf]
      %v1872 = vld [vmem:[%s1856 + $0x3c] sm:$0xf]
      %v1905 = vunpack.c.l.b16 %v1824
      %v1906 = vunpack.c.l.b16 %v1825
      %v1907 = vunpack.c.l.b16 %v1826
      %v1908 = vunpack.c.l.b16 %v1827
      %v1909 = vunpack.c.l.b16 %v1828
      %v1910 = vunpack.c.l.b16 %v1829
      %v1911 = vunpack.c.l.b16 %v1830
      %v1912 = vunpack.c.l.b16 %v1831
      %v1913 = vunpack.c.l.b16 %v1832
      %v1914 = vunpack.c.l.b16 %v1833
      %v1915 = vunpack.c.l.b16 %v1834
      %v1916 = vunpack.c.l.b16 %v1835
      %v1917 = vunpack.c.l.b16 %v1836
      %v1918 = vunpack.c.l.b16 %v1837
      %v1919 = vunpack.c.l.b16 %v1838
      %v1920 = vunpack.c.l.b16 %v1839
      %v1921 = vunpack.c.l.b16 %v1840
      %v1922 = vunpack.c.l.b16 %v1841
      %v1923 = vunpack.c.l.b16 %v1842
      %v1924 = vunpack.c.l.b16 %v1843
      %v1925 = vunpack.c.l.b16 %v1844
      %v1926 = vunpack.c.l.b16 %v1845
      %v1927 = vunpack.c.l.b16 %v1846
      %v1928 = vunpack.c.l.b16 %v1847
      %v1929 = vunpack.c.l.b16 %v1848
      %v1930 = vunpack.c.l.b16 %v1849
      %v1931 = vunpack.c.l.b16 %v1850
      %v1932 = vunpack.c.l.b16 %v1851
      %v1933 = vunpack.c.l.b16 %v1852
      %v1934 = vunpack.c.l.b16 %v1853
      %v1935 = vunpack.c.l.b16 %v1854
      %v1936 = vunpack.c.l.b16 %v1855
      %v1937 = vpack.c.b16 %v1906, %v1905
      %v1938 = vpack.c.b16 %v1908, %v1907
      %v1939 = vpack.c.b16 %v1910, %v1909
      %v1940 = vpack.c.b16 %v1912, %v1911
      %v1941 = vpack.c.b16 %v1914, %v1913
      %v1942 = vpack.c.b16 %v1916, %v1915
      %v1943 = vpack.c.b16 %v1918, %v1917
      %v1944 = vpack.c.b16 %v1920, %v1919
      %v1945 = vpack.c.b16 %v1922, %v1921
      %v1946 = vpack.c.b16 %v1924, %v1923
      %v1947 = vpack.c.b16 %v1926, %v1925
      %v1948 = vpack.c.b16 %v1928, %v1927
      %v1949 = vpack.c.b16 %v1930, %v1929
      %v1950 = vpack.c.b16 %v1932, %v1931
      %v1951 = vpack.c.b16 %v1934, %v1933
      %v1952 = vpack.c.b16 %v1936, %v1935
      %v1985 = vunpack.c.l.b16 %v1857
      %v1986 = vunpack.c.l.b16 %v1858
      %v1987 = vunpack.c.l.b16 %v1859
      %v1988 = vunpack.c.l.b16 %v1860
      %v1989 = vunpack.c.l.b16 %v1861
      %v1990 = vunpack.c.l.b16 %v1862
      %v1991 = vunpack.c.l.b16 %v1863
      %v1992 = vunpack.c.l.b16 %v1864
      %v1993 = vunpack.c.l.b16 %v1865
      %v1994 = vunpack.c.l.b16 %v1866
      %v1995 = vunpack.c.l.b16 %v1867
      %v1996 = vunpack.c.l.b16 %v1868
      %v1997 = vunpack.c.l.b16 %v1869
      %v1998 = vunpack.c.l.b16 %v1870
      %v1999 = vunpack.c.l.b16 %v1871
      %v2000 = vunpack.c.l.b16 %v1872
      %v2001 = vpack.c.b16 %v1986, %v1985
      %v2002 = vpack.c.b16 %v1988, %v1987
      %v2003 = vpack.c.b16 %v1990, %v1989
      %v2004 = vpack.c.b16 %v1992, %v1991
      %v2005 = vpack.c.b16 %v1994, %v1993
      %v2006 = vpack.c.b16 %v1996, %v1995
      %v2007 = vpack.c.b16 %v1998, %v1997
      %v2008 = vpack.c.b16 %v2000, %v1999
      %2017 = vmatprep.subr.bf16.mxu0 0
      %2018 = vmatpush1.bf16.msra.mxu0 %v2001
      %2019 = vmatprep.subr.bf16.mxu0 0
      %2020 = vmatpush1.bf16.msra.mxu0 %v2002
      %2021 = vmatprep.subr.bf16.mxu0 0
      %2022 = vmatpush1.bf16.msra.mxu0 %v2003
      %2023 = vmatprep.subr.bf16.mxu0 0
      %2024 = vmatpush1.bf16.msra.mxu0 %v2004
      %2025 = vmatprep.subr.bf16.mxu0 0
      %2026 = vmatpush1.bf16.msra.mxu0 %v2005
      %2027 = vmatprep.subr.bf16.mxu0 0
      %2028 = vmatpush1.bf16.msra.mxu0 %v2006
      %2029 = vmatprep.subr.bf16.mxu0 0
      %2030 = vmatpush1.bf16.msra.mxu0 %v2007
      %2031 = vmatprep.subr.bf16.mxu0 0
      %2032 = vmatpush1.bf16.msra.mxu0 %v2008
      %2033 = vmatprep.subr.bf16.mxu0 0
      %2034 = vmatpush1.bf16.msra.mxu0 0
      %2035 = vmatprep.subr.bf16.mxu0 0
      %2036 = vmatpush1.bf16.msra.mxu0 0
      %2037 = vmatprep.subr.bf16.mxu0 0
      %2038 = vmatpush1.bf16.msra.mxu0 0
      %2039 = vmatprep.subr.bf16.mxu0 0
      %2040 = vmatpush1.bf16.msra.mxu0 0
      %2041 = vmatprep.subr.bf16.mxu0 0
      %2042 = vmatpush1.bf16.msra.mxu0 0
      %2043 = vmatprep.subr.bf16.mxu0 0
      %2044 = vmatpush1.bf16.msra.mxu0 0
      %2045 = vmatprep.subr.bf16.mxu0 0
      %2046 = vmatpush1.bf16.msra.mxu0 0
      %2047 = vmatprep.subr.bf16.mxu0 0
      %2048 = vmatpush1.bf16.msra.mxu0 0
      %2049 = vmatprep.mubr.bf16.mxu0 0
      %2050 = vmatmul.mubr.bf16.gmra.mrb[0].mxu0 %v1937
      %v2051 = vpop.f32.mrb[0].mxu0
      %v2052 = vadd.f32 0.0, %v2051
      %v2053 = vpop.f32.mrb[0].mxu0
      %v2054 = vpop.f32.mrb[0].mxu0
      %v2055 = vadd.f32 0.0, %v2054
      %v2056 = vpop.f32.mrb[0].mxu0
      %2057 = vmatprep.mubr.bf16.mxu0 0
      %2058 = vmatmul.mubr.bf16.gmra.mrb[0].mxu0 %v1938
      %v2059 = vpop.f32.mrb[0].mxu0
      %v2060 = vadd.f32 0.0, %v2059
      %v2061 = vpop.f32.mrb[0].mxu0
      %v2062 = vpop.f32.mrb[0].mxu0
      %v2063 = vadd.f32 0.0, %v2062
      %v2064 = vpop.f32.mrb[0].mxu0
      %2065 = vmatprep.mubr.bf16.mxu0 0
      %2066 = vmatmul.mubr.bf16.gmra.mrb[0].mxu0 %v1939
      %v2067 = vpop.f32.mrb[0].mxu0
      %v2068 = vadd.f32 0.0, %v2067
      %v2069 = vpop.f32.mrb[0].mxu0
      %v2070 = vpop.f32.mrb[0].mxu0
      %v2071 = vadd.f32 0.0, %v2070
      %v2072 = vpop.f32.mrb[0].mxu0
      %2073 = vmatprep.mubr.bf16.mxu0 0
      %2074 = vmatmul.mubr.bf16.gmra.mrb[0].mxu0 %v1940
      %v2075 = vpop.f32.mrb[0].mxu0
      %v2076 = vadd.f32 0.0, %v2075
      %v2077 = vpop.f32.mrb[0].mxu0
      %v2078 = vpop.f32.mrb[0].mxu0
      %v2079 = vadd.f32 0.0, %v2078
      %v2080 = vpop.f32.mrb[0].mxu0
      %2081 = vmatprep.mubr.bf16.mxu0 0
      %2082 = vmatmul.mubr.bf16.gmra.mrb[0].mxu0 %v1941
      %v2083 = vpop.f32.mrb[0].mxu0
      %v2084 = vadd.f32 0.0, %v2083
      %v2085 = vpop.f32.mrb[0].mxu0
      %v2086 = vpop.f32.mrb[0].mxu0
      %v2087 = vadd.f32 0.0, %v2086
      %v2088 = vpop.f32.mrb[0].mxu0
      %2089 = vmatprep.mubr.bf16.mxu0 0
      %2090 = vmatmul.mubr.bf16.gmra.mrb[0].mxu0 %v1942
      %v2091 = vpop.f32.mrb[0].mxu0
      %v2092 = vadd.f32 0.0, %v2091
      %v2093 = vpop.f32.mrb[0].mxu0
      %v2094 = vpop.f32.mrb[0].mxu0
      %v2095 = vadd.f32 0.0, %v2094
      %v2096 = vpop.f32.mrb[0].mxu0
      %2097 = vmatprep.mubr.bf16.mxu0 0
      %2098 = vmatmul.mubr.bf16.gmra.mrb[0].mxu0 %v1943
      %v2099 = vpop.f32.mrb[0].mxu0
      %v2100 = vadd.f32 0.0, %v2099
      %v2101 = vpop.f32.mrb[0].mxu0
      %v2102 = vpop.f32.mrb[0].mxu0
      %v2103 = vadd.f32 0.0, %v2102
      %v2104 = vpop.f32.mrb[0].mxu0
      %2105 = vmatprep.mubr.bf16.mxu0 0
      %2106 = vmatmul.mubr.bf16.gmra.mrb[0].mxu0 %v1944
      %v2107 = vpop.f32.mrb[0].mxu0
      %v2108 = vadd.f32 0.0, %v2107
      %v2109 = vpop.f32.mrb[0].mxu0
      %v2110 = vpop.f32.mrb[0].mxu0
      %v2111 = vadd.f32 0.0, %v2110
      %v2112 = vpop.f32.mrb[0].mxu0
      %2113 = vmatprep.mubr.bf16.mxu0 0
      %2114 = vmatmul.mubr.bf16.gmra.mrb[0].mxu0 %v1945
      %v2115 = vpop.f32.mrb[0].mxu0
      %v2116 = vadd.f32 0.0, %v2115
      %v2117 = vpop.f32.mrb[0].mxu0
      %v2118 = vpop.f32.mrb[0].mxu0
      %v2119 = vadd.f32 0.0, %v2118
      %v2120 = vpop.f32.mrb[0].mxu0
      %2121 = vmatprep.mubr.bf16.mxu0 0
      %2122 = vmatmul.mubr.bf16.gmra.mrb[0].mxu0 %v1946
      %v2123 = vpop.f32.mrb[0].mxu0
      %v2124 = vadd.f32 0.0, %v2123
      %v2125 = vpop.f32.mrb[0].mxu0
      %v2126 = vpop.f32.mrb[0].mxu0
      %v2127 = vadd.f32 0.0, %v2126
      %v2128 = vpop.f32.mrb[0].mxu0
      %2129 = vmatprep.mubr.bf16.mxu0 0
      %2130 = vmatmul.mubr.bf16.gmra.mrb[0].mxu0 %v1947
      %v2131 = vpop.f32.mrb[0].mxu0
      %v2132 = vadd.f32 0.0, %v2131
      %v2133 = vpop.f32.mrb[0].mxu0
      %v2134 = vpop.f32.mrb[0].mxu0
      %v2135 = vadd.f32 0.0, %v2134
      %v2136 = vpop.f32.mrb[0].mxu0
      %2137 = vmatprep.mubr.bf16.mxu0 0
      %2138 = vmatmul.mubr.bf16.gmra.mrb[0].mxu0 %v1948
      %v2139 = vpop.f32.mrb[0].mxu0
      %v2140 = vadd.f32 0.0, %v2139
      %v2141 = vpop.f32.mrb[0].mxu0
      %v2142 = vpop.f32.mrb[0].mxu0
      %v2143 = vadd.f32 0.0, %v2142
      %v2144 = vpop.f32.mrb[0].mxu0
      %2145 = vmatprep.mubr.bf16.mxu0 0
      %2146 = vmatmul.mubr.bf16.gmra.mrb[0].mxu0 %v1949
      %v2147 = vpop.f32.mrb[0].mxu0
      %v2148 = vadd.f32 0.0, %v2147
      %v2149 = vpop.f32.mrb[0].mxu0
      %v2150 = vpop.f32.mrb[0].mxu0
      %v2151 = vadd.f32 0.0, %v2150
      %v2152 = vpop.f32.mrb[0].mxu0
      %2153 = vmatprep.mubr.bf16.mxu0 0
      %2154 = vmatmul.mubr.bf16.gmra.mrb[0].mxu0 %v1950
      %v2155 = vpop.f32.mrb[0].mxu0
      %v2156 = vadd.f32 0.0, %v2155
      %v2157 = vpop.f32.mrb[0].mxu0
      %v2158 = vpop.f32.mrb[0].mxu0
      %v2159 = vadd.f32 0.0, %v2158
      %v2160 = vpop.f32.mrb[0].mxu0
      %2161 = vmatprep.mubr.bf16.mxu0 0
      %2162 = vmatmul.mubr.bf16.gmra.mrb[0].mxu0 %v1951
      %v2163 = vpop.f32.mrb[0].mxu0
      %v2164 = vadd.f32 0.0, %v2163
      %v2165 = vpop.f32.mrb[0].mxu0
      %v2166 = vpop.f32.mrb[0].mxu0
      %v2167 = vadd.f32 0.0, %v2166
      %v2168 = vpop.f32.mrb[0].mxu0
      %2169 = vmatprep.mubr.bf16.mxu0 0
      %2170 = vmatmul.mubr.bf16.gmra.mrb[0].mxu0 %v1952
      %v2171 = vpop.f32.mrb[0].mxu0
      %v2172 = vadd.f32 0.0, %v2171
      %v2173 = vpop.f32.mrb[0].mxu0
      %v2174 = vpop.f32.mrb[0].mxu0
      %v2175 = vadd.f32 0.0, %v2174
      %v2176 = vpop.f32.mrb[0].mxu0
      %2177 = vdwg.mxu0
      %v2178 = vadd.f32 %v1792, %v2052
      %v2179 = vadd.f32 %v1793, %v2055
      %v2180 = vadd.f32 %v1794, %v2060
      %v2181 = vadd.f32 %v1795, %v2063
      %v2182 = vadd.f32 %v1796, %v2068
      %v2183 = vadd.f32 %v1797, %v2071
      %v2184 = vadd.f32 %v1798, %v2076
      %v2185 = vadd.f32 %v1799, %v2079
      %v2186 = vadd.f32 %v1800, %v2084
      %v2187 = vadd.f32 %v1801, %v2087
      %v2188 = vadd.f32 %v1802, %v2092
      %v2189 = vadd.f32 %v1803, %v2095
      %v2190 = vadd.f32 %v1804, %v2100
      %v2191 = vadd.f32 %v1805, %v2103
      %v2192 = vadd.f32 %v1806, %v2108
      %v2193 = vadd.f32 %v1807, %v2111
      %v2194 = vadd.f32 %v1808, %v2116
      %v2195 = vadd.f32 %v1809, %v2119
      %v2196 = vadd.f32 %v1810, %v2124
      %v2197 = vadd.f32 %v1811, %v2127
      %v2198 = vadd.f32 %v1812, %v2132
      %v2199 = vadd.f32 %v1813, %v2135
      %v2200 = vadd.f32 %v1814, %v2140
      %v2201 = vadd.f32 %v1815, %v2143
      %v2202 = vadd.f32 %v1816, %v2148
      %v2203 = vadd.f32 %v1817, %v2151
      %v2204 = vadd.f32 %v1818, %v2156
      %v2205 = vadd.f32 %v1819, %v2159
      %v2206 = vadd.f32 %v1820, %v2164
      %v2207 = vadd.f32 %v1821, %v2167
      %v2208 = vadd.f32 %v1822, %v2172
      %v2209 = vadd.f32 %v1823, %v2175
      %v2210 = vld [vmem:[%s273] sm:$0xf]
      %v2211 = vld [vmem:[%s273 + $0x4] sm:$0xf]
      %v2212 = vld [vmem:[%s273 + $0x8] sm:$0x1]
      %v2213 = vld [vmem:[%s273 + $0xc] sm:$0xf]
      %v2214 = vld [vmem:[%s273 + $0x10] sm:$0xf]
      %v2215 = vld [vmem:[%s273 + $0x14] sm:$0x1]
      %v2216 = vld [vmem:[%s273 + $0x18] sm:$0xf]
      %v2217 = vld [vmem:[%s273 + $0x1c] sm:$0xf]
      %v2218 = vld [vmem:[%s273 + $0x20] sm:$0x1]
      %v2219 = vld [vmem:[%s273 + $0x24] sm:$0xf]
      %v2220 = vld [vmem:[%s273 + $0x28] sm:$0xf]
      %v2221 = vld [vmem:[%s273 + $0x2c] sm:$0x1]
      %v2222 = vld [vmem:[%s273 + $0x30] sm:$0xf]
      %v2223 = vld [vmem:[%s273 + $0x34] sm:$0xf]
      %v2224 = vld [vmem:[%s273 + $0x38] sm:$0x1]
      %v2225 = vld [vmem:[%s273 + $0x3c] sm:$0xf]
      %v2226 = vld [vmem:[%s273 + $0x40] sm:$0xf]
      %v2227 = vld [vmem:[%s273 + $0x44] sm:$0x1]
      %v2228 = vld [vmem:[%s273 + $0x48] sm:$0xf]
      %v2229 = vld [vmem:[%s273 + $0x4c] sm:$0xf]
      %v2230 = vld [vmem:[%s273 + $0x50] sm:$0x1]
      %v2231 = vld [vmem:[%s273 + $0x54] sm:$0xf]
      %v2232 = vld [vmem:[%s273 + $0x58] sm:$0xf]
      %v2233 = vld [vmem:[%s273 + $0x5c] sm:$0x1]
      %v2234 = vld [vmem:[%s273 + $0x60] sm:$0xf]
      %v2235 = vld [vmem:[%s273 + $0x64] sm:$0xf]
      %v2236 = vld [vmem:[%s273 + $0x68] sm:$0x1]
      %v2237 = vld [vmem:[%s273 + $0x6c] sm:$0xf]
      %v2238 = vld [vmem:[%s273 + $0x70] sm:$0xf]
      %v2239 = vld [vmem:[%s273 + $0x74] sm:$0x1]
      %v2240 = vld [vmem:[%s273 + $0x78] sm:$0xf]
      %v2241 = vld [vmem:[%s273 + $0x7c] sm:$0xf]
      %v2242 = vld [vmem:[%s273 + $0x80] sm:$0x1]
      %v2243 = vld [vmem:[%s273 + $0x84] sm:$0xf]
      %v2244 = vld [vmem:[%s273 + $0x88] sm:$0xf]
      %v2245 = vld [vmem:[%s273 + $0x8c] sm:$0x1]
      %v2246 = vld [vmem:[%s273 + $0x90] sm:$0xf]
      %v2247 = vld [vmem:[%s273 + $0x94] sm:$0xf]
      %v2248 = vld [vmem:[%s273 + $0x98] sm:$0x1]
      %v2249 = vld [vmem:[%s273 + $0x9c] sm:$0xf]
      %v2250 = vld [vmem:[%s273 + $0xa0] sm:$0xf]
      %v2251 = vld [vmem:[%s273 + $0xa4] sm:$0x1]
      %v2252 = vld [vmem:[%s273 + $0xa8] sm:$0xf]
      %v2253 = vld [vmem:[%s273 + $0xac] sm:$0xf]
      %v2254 = vld [vmem:[%s273 + $0xb0] sm:$0x1]
      %v2255 = vld [vmem:[%s273 + $0xb4] sm:$0xf]
      %v2256 = vld [vmem:[%s273 + $0xb8] sm:$0xf]
      %v2257 = vld [vmem:[%s273 + $0xbc] sm:$0x1]
      %v2259 = vshrl.u32 %v2210, 16
      %v2261 = vrot.slane %v2259, 4
      %v2262 = vshll.u32 %v2210, 16
      %v2264 = vrot.slane %v2262, 5
      %v2265 = vor.u32 %v2261, %v2264
      %v2266 = vrot.slane %v2265, 4
      %v2268 = vshll.u32 %v2211, 16
      %v2270 = vrot.slane %v2268, 5
      %v2271 = vsel %vm359, %v2266, %v2270
      %v2272 = vshrl.u32 %v2211, 16
      %v2274 = vrot.slane %v2272, 4
      %v2275 = vor.u32 %v2274, %v2270
      %v2276 = vrot.slane %v2275, 4
      %v2278 = vshll.u32 %v2212, 16
      %v2280 = vrot.slane %v2278, 5
      %v2281 = vsel %vm359, %v2276, %v2280
      %v2283 = vshrl.u32 %v2213, 16
      %v2285 = vrot.slane %v2283, 4
      %v2286 = vshll.u32 %v2213, 16
      %v2288 = vrot.slane %v2286, 5
      %v2289 = vor.u32 %v2285, %v2288
      %v2290 = vrot.slane %v2289, 4
      %v2292 = vshll.u32 %v2214, 16
      %v2294 = vrot.slane %v2292, 5
      %v2295 = vsel %vm359, %v2290, %v2294
      %v2296 = vshrl.u32 %v2214, 16
      %v2298 = vrot.slane %v2296, 4
      %v2299 = vor.u32 %v2298, %v2294
      %v2300 = vrot.slane %v2299, 4
      %v2302 = vshll.u32 %v2215, 16
      %v2304 = vrot.slane %v2302, 5
      %v2305 = vsel %vm359, %v2300, %v2304
      %v2307 = vshrl.u32 %v2216, 16
      %v2309 = vrot.slane %v2307, 4
      %v2310 = vshll.u32 %v2216, 16
      %v2312 = vrot.slane %v2310, 5
      %v2313 = vor.u32 %v2309, %v2312
      %v2314 = vrot.slane %v2313, 4
      %v2316 = vshll.u32 %v2217, 16
      %v2318 = vrot.slane %v2316, 5
      %v2319 = vsel %vm359, %v2314, %v2318
      %v2320 = vshrl.u32 %v2217, 16
      %v2322 = vrot.slane %v2320, 4
      %v2323 = vor.u32 %v2322, %v2318
      %v2324 = vrot.slane %v2323, 4
      %v2326 = vshll.u32 %v2218, 16
      %v2328 = vrot.slane %v2326, 5
      %v2329 = vsel %vm359, %v2324, %v2328
      %v2331 = vshrl.u32 %v2219, 16
      %v2333 = vrot.slane %v2331, 4
      %v2334 = vshll.u32 %v2219, 16
      %v2336 = vrot.slane %v2334, 5
      %v2337 = vor.u32 %v2333, %v2336
      %v2338 = vrot.slane %v2337, 4
      %v2340 = vshll.u32 %v2220, 16
      %v2342 = vrot.slane %v2340, 5
      %v2343 = vsel %vm359, %v2338, %v2342
      %v2344 = vshrl.u32 %v2220, 16
      %v2346 = vrot.slane %v2344, 4
      %v2347 = vor.u32 %v2346, %v2342
      %v2348 = vrot.slane %v2347, 4
      %v2350 = vshll.u32 %v2221, 16
      %v2352 = vrot.slane %v2350, 5
      %v2353 = vsel %vm359, %v2348, %v2352
      %v2355 = vshrl.u32 %v2222, 16
      %v2357 = vrot.slane %v2355, 4
      %v2358 = vshll.u32 %v2222, 16
      %v2360 = vrot.slane %v2358, 5
      %v2361 = vor.u32 %v2357, %v2360
      %v2362 = vrot.slane %v2361, 4
      %v2364 = vshll.u32 %v2223, 16
      %v2366 = vrot.slane %v2364, 5
      %v2367 = vsel %vm359, %v2362, %v2366
      %v2368 = vshrl.u32 %v2223, 16
      %v2370 = vrot.slane %v2368, 4
      %v2371 = vor.u32 %v2370, %v2366
      %v2372 = vrot.slane %v2371, 4
      %v2374 = vshll.u32 %v2224, 16
      %v2376 = vrot.slane %v2374, 5
      %v2377 = vsel %vm359, %v2372, %v2376
      %v2379 = vshrl.u32 %v2225, 16
      %v2381 = vrot.slane %v2379, 4
      %v2382 = vshll.u32 %v2225, 16
      %v2384 = vrot.slane %v2382, 5
      %v2385 = vor.u32 %v2381, %v2384
      %v2386 = vrot.slane %v2385, 4
      %v2388 = vshll.u32 %v2226, 16
      %v2390 = vrot.slane %v2388, 5
      %v2391 = vsel %vm359, %v2386, %v2390
      %v2392 = vshrl.u32 %v2226, 16
      %v2394 = vrot.slane %v2392, 4
      %v2395 = vor.u32 %v2394, %v2390
      %v2396 = vrot.slane %v2395, 4
      %v2398 = vshll.u32 %v2227, 16
      %v2400 = vrot.slane %v2398, 5
      %v2401 = vsel %vm359, %v2396, %v2400
      %v2403 = vshrl.u32 %v2228, 16
      %v2405 = vrot.slane %v2403, 4
      %v2406 = vshll.u32 %v2228, 16
      %v2408 = vrot.slane %v2406, 5
      %v2409 = vor.u32 %v2405, %v2408
      %v2410 = vrot.slane %v2409, 4
      %v2412 = vshll.u32 %v2229, 16
      %v2414 = vrot.slane %v2412, 5
      %v2415 = vsel %vm359, %v2410, %v2414
      %v2416 = vshrl.u32 %v2229, 16
      %v2418 = vrot.slane %v2416, 4
      %v2419 = vor.u32 %v2418, %v2414
      %v2420 = vrot.slane %v2419, 4
      %v2422 = vshll.u32 %v2230, 16
      %v2424 = vrot.slane %v2422, 5
      %v2425 = vsel %vm359, %v2420, %v2424
      %v2427 = vshrl.u32 %v2231, 16
      %v2429 = vrot.slane %v2427, 4
      %v2430 = vshll.u32 %v2231, 16
      %v2432 = vrot.slane %v2430, 5
      %v2433 = vor.u32 %v2429, %v2432
      %v2434 = vrot.slane %v2433, 4
      %v2436 = vshll.u32 %v2232, 16
      %v2438 = vrot.slane %v2436, 5
      %v2439 = vsel %vm359, %v2434, %v2438
      %v2440 = vshrl.u32 %v2232, 16
      %v2442 = vrot.slane %v2440, 4
      %v2443 = vor.u32 %v2442, %v2438
      %v2444 = vrot.slane %v2443, 4
      %v2446 = vshll.u32 %v2233, 16
      %v2448 = vrot.slane %v2446, 5
      %v2449 = vsel %vm359, %v2444, %v2448
      %v2451 = vshrl.u32 %v2234, 16
      %v2453 = vrot.slane %v2451, 4
      %v2454 = vshll.u32 %v2234, 16
      %v2456 = vrot.slane %v2454, 5
      %v2457 = vor.u32 %v2453, %v2456
      %v2458 = vrot.slane %v2457, 4
      %v2460 = vshll.u32 %v2235, 16
      %v2462 = vrot.slane %v2460, 5
      %v2463 = vsel %vm359, %v2458, %v2462
      %v2464 = vshrl.u32 %v2235, 16
      %v2466 = vrot.slane %v2464, 4
      %v2467 = vor.u32 %v2466, %v2462
      %v2468 = vrot.slane %v2467, 4
      %v2470 = vshll.u32 %v2236, 16
      %v2472 = vrot.slane %v2470, 5
      %v2473 = vsel %vm359, %v2468, %v2472
      %v2475 = vshrl.u32 %v2237, 16
      %v2477 = vrot.slane %v2475, 4
      %v2478 = vshll.u32 %v2237, 16
      %v2480 = vrot.slane %v2478, 5
      %v2481 = vor.u32 %v2477, %v2480
      %v2482 = vrot.slane %v2481, 4
      %v2484 = vshll.u32 %v2238, 16
      %v2486 = vrot.slane %v2484, 5
      %v2487 = vsel %vm359, %v2482, %v2486
      %v2488 = vshrl.u32 %v2238, 16
      %v2490 = vrot.slane %v2488, 4
      %v2491 = vor.u32 %v2490, %v2486
      %v2492 = vrot.slane %v2491, 4
      %v2494 = vshll.u32 %v2239, 16
      %v2496 = vrot.slane %v2494, 5
      %v2497 = vsel %vm359, %v2492, %v2496
      %v2499 = vshrl.u32 %v2240, 16
      %v2501 = vrot.slane %v2499, 4
      %v2502 = vshll.u32 %v2240, 16
      %v2504 = vrot.slane %v2502, 5
      %v2505 = vor.u32 %v2501, %v2504
      %v2506 = vrot.slane %v2505, 4
      %v2508 = vshll.u32 %v2241, 16
      %v2510 = vrot.slane %v2508, 5
      %v2511 = vsel %vm359, %v2506, %v2510
      %v2512 = vshrl.u32 %v2241, 16
      %v2514 = vrot.slane %v2512, 4
      %v2515 = vor.u32 %v2514, %v2510
      %v2516 = vrot.slane %v2515, 4
      %v2518 = vshll.u32 %v2242, 16
      %v2520 = vrot.slane %v2518, 5
      %v2521 = vsel %vm359, %v2516, %v2520
      %v2523 = vshrl.u32 %v2243, 16
      %v2525 = vrot.slane %v2523, 4
      %v2526 = vshll.u32 %v2243, 16
      %v2528 = vrot.slane %v2526, 5
      %v2529 = vor.u32 %v2525, %v2528
      %v2530 = vrot.slane %v2529, 4
      %v2532 = vshll.u32 %v2244, 16
      %v2534 = vrot.slane %v2532, 5
      %v2535 = vsel %vm359, %v2530, %v2534
      %v2536 = vshrl.u32 %v2244, 16
      %v2538 = vrot.slane %v2536, 4
      %v2539 = vor.u32 %v2538, %v2534
      %v2540 = vrot.slane %v2539, 4
      %v2542 = vshll.u32 %v2245, 16
      %v2544 = vrot.slane %v2542, 5
      %v2545 = vsel %vm359, %v2540, %v2544
      %v2547 = vshrl.u32 %v2246, 16
      %v2549 = vrot.slane %v2547, 4
      %v2550 = vshll.u32 %v2246, 16
      %v2552 = vrot.slane %v2550, 5
      %v2553 = vor.u32 %v2549, %v2552
      %v2554 = vrot.slane %v2553, 4
      %v2556 = vshll.u32 %v2247, 16
      %v2558 = vrot.slane %v2556, 5
      %v2559 = vsel %vm359, %v2554, %v2558
      %v2560 = vshrl.u32 %v2247, 16
      %v2562 = vrot.slane %v2560, 4
      %v2563 = vor.u32 %v2562, %v2558
      %v2564 = vrot.slane %v2563, 4
      %v2566 = vshll.u32 %v2248, 16
      %v2568 = vrot.slane %v2566, 5
      %v2569 = vsel %vm359, %v2564, %v2568
      %v2571 = vshrl.u32 %v2249, 16
      %v2573 = vrot.slane %v2571, 4
      %v2574 = vshll.u32 %v2249, 16
      %v2576 = vrot.slane %v2574, 5
      %v2577 = vor.u32 %v2573, %v2576
      %v2578 = vrot.slane %v2577, 4
      %v2580 = vshll.u32 %v2250, 16
      %v2582 = vrot.slane %v2580, 5
      %v2583 = vsel %vm359, %v2578, %v2582
      %v2584 = vshrl.u32 %v2250, 16
      %v2586 = vrot.slane %v2584, 4
      %v2587 = vor.u32 %v2586, %v2582
      %v2588 = vrot.slane %v2587, 4
      %v2590 = vshll.u32 %v2251, 16
      %v2592 = vrot.slane %v2590, 5
      %v2593 = vsel %vm359, %v2588, %v2592
      %v2595 = vshrl.u32 %v2252, 16
      %v2597 = vrot.slane %v2595, 4
      %v2598 = vshll.u32 %v2252, 16
      %v2600 = vrot.slane %v2598, 5
      %v2601 = vor.u32 %v2597, %v2600
      %v2602 = vrot.slane %v2601, 4
      %v2604 = vshll.u32 %v2253, 16
      %v2606 = vrot.slane %v2604, 5
      %v2607 = vsel %vm359, %v2602, %v2606
      %v2608 = vshrl.u32 %v2253, 16
      %v2610 = vrot.slane %v2608, 4
      %v2611 = vor.u32 %v2610, %v2606
      %v2612 = vrot.slane %v2611, 4
      %v2614 = vshll.u32 %v2254, 16
      %v2616 = vrot.slane %v2614, 5
      %v2617 = vsel %vm359, %v2612, %v2616
      %v2619 = vshrl.u32 %v2255, 16
      %v2621 = vrot.slane %v2619, 4
      %v2622 = vshll.u32 %v2255, 16
      %v2624 = vrot.slane %v2622, 5
      %v2625 = vor.u32 %v2621, %v2624
      %v2626 = vrot.slane %v2625, 4
      %v2628 = vshll.u32 %v2256, 16
      %v2630 = vrot.slane %v2628, 5
      %v2631 = vsel %vm359, %v2626, %v2630
      %v2632 = vshrl.u32 %v2256, 16
      %v2634 = vrot.slane %v2632, 4
      %v2635 = vor.u32 %v2634, %v2630
      %v2636 = vrot.slane %v2635, 4
      %v2638 = vshll.u32 %v2257, 16
      %v2640 = vrot.slane %v2638, 5
      %v2641 = vsel %vm359, %v2636, %v2640
      %s2642 = scalar_lea.vmem %s3, 256
      %v2643 = vld [vmem:[%s2642] sm:$0xf]
      %v2644 = vld [vmem:[%s2642 + $0x4] sm:$0xf]
      %v2645 = vld [vmem:[%s2642 + $0x8] sm:$0xf]
      %v2646 = vld [vmem:[%s2642 + $0xc] sm:$0xf]
      %v2647 = vld [vmem:[%s2642 + $0x10] sm:$0xf]
      %v2648 = vld [vmem:[%s2642 + $0x14] sm:$0xf]
      %v2649 = vld [vmem:[%s2642 + $0x18] sm:$0xf]
      %v2650 = vld [vmem:[%s2642 + $0x1c] sm:$0xf]
      %v2651 = vld [vmem:[%s2642 + $0x20] sm:$0xf]
      %v2652 = vld [vmem:[%s2642 + $0x24] sm:$0xf]
      %v2653 = vld [vmem:[%s2642 + $0x28] sm:$0xf]
      %v2654 = vld [vmem:[%s2642 + $0x2c] sm:$0xf]
      %v2655 = vld [vmem:[%s2642 + $0x30] sm:$0xf]
      %v2656 = vld [vmem:[%s2642 + $0x34] sm:$0xf]
      %v2657 = vld [vmem:[%s2642 + $0x38] sm:$0xf]
      %v2658 = vld [vmem:[%s2642 + $0x3c] sm:$0xf]
      %v2659 = vunpack.c.l.b16 %v2271
      %v2660 = vunpack.c.l.b16 %v2281
      %v2661 = vunpack.c.l.b16 %v2295
      %v2662 = vunpack.c.l.b16 %v2305
      %v2663 = vunpack.c.l.b16 %v2319
      %v2664 = vunpack.c.l.b16 %v2329
      %v2665 = vunpack.c.l.b16 %v2343
      %v2666 = vunpack.c.l.b16 %v2353
      %v2667 = vunpack.c.l.b16 %v2367
      %v2668 = vunpack.c.l.b16 %v2377
      %v2669 = vunpack.c.l.b16 %v2391
      %v2670 = vunpack.c.l.b16 %v2401
      %v2671 = vunpack.c.l.b16 %v2415
      %v2672 = vunpack.c.l.b16 %v2425
      %v2673 = vunpack.c.l.b16 %v2439
      %v2674 = vunpack.c.l.b16 %v2449
      %v2675 = vunpack.c.l.b16 %v2463
      %v2676 = vunpack.c.l.b16 %v2473
      %v2677 = vunpack.c.l.b16 %v2487
      %v2678 = vunpack.c.l.b16 %v2497
      %v2679 = vunpack.c.l.b16 %v2511
      %v2680 = vunpack.c.l.b16 %v2521
      %v2681 = vunpack.c.l.b16 %v2535
      %v2682 = vunpack.c.l.b16 %v2545
      %v2683 = vunpack.c.l.b16 %v2559
      %v2684 = vunpack.c.l.b16 %v2569
      %v2685 = vunpack.c.l.b16 %v2583
      %v2686 = vunpack.c.l.b16 %v2593
      %v2687 = vunpack.c.l.b16 %v2607
      %v2688 = vunpack.c.l.b16 %v2617
      %v2689 = vunpack.c.l.b16 %v2631
      %v2690 = vunpack.c.l.b16 %v2641
      %v2691 = vpack.c.b16 %v2660, %v2659
      %v2692 = vpack.c.b16 %v2662, %v2661
      %v2693 = vpack.c.b16 %v2664, %v2663
      %v2694 = vpack.c.b16 %v2666, %v2665
      %v2695 = vpack.c.b16 %v2668, %v2667
      %v2696 = vpack.c.b16 %v2670, %v2669
      %v2697 = vpack.c.b16 %v2672, %v2671
      %v2698 = vpack.c.b16 %v2674, %v2673
      %v2699 = vpack.c.b16 %v2676, %v2675
      %v2700 = vpack.c.b16 %v2678, %v2677
      %v2701 = vpack.c.b16 %v2680, %v2679
      %v2702 = vpack.c.b16 %v2682, %v2681
      %v2703 = vpack.c.b16 %v2684, %v2683
      %v2704 = vpack.c.b16 %v2686, %v2685
      %v2705 = vpack.c.b16 %v2688, %v2687
      %v2706 = vpack.c.b16 %v2690, %v2689
      %v2739 = vunpack.c.l.b16 %v2643
      %v2740 = vunpack.c.l.b16 %v2644
      %v2741 = vunpack.c.l.b16 %v2645
      %v2742 = vunpack.c.l.b16 %v2646
      %v2743 = vunpack.c.l.b16 %v2647
      %v2744 = vunpack.c.l.b16 %v2648
      %v2745 = vunpack.c.l.b16 %v2649
      %v2746 = vunpack.c.l.b16 %v2650
      %v2747 = vunpack.c.l.b16 %v2651
      %v2748 = vunpack.c.l.b16 %v2652
      %v2749 = vunpack.c.l.b16 %v2653
      %v2750 = vunpack.c.l.b16 %v2654
      %v2751 = vunpack.c.l.b16 %v2655
      %v2752 = vunpack.c.l.b16 %v2656
      %v2753 = vunpack.c.l.b16 %v2657
      %v2754 = vunpack.c.l.b16 %v2658
      %v2755 = vpack.c.b16 %v2740, %v2739
      %v2756 = vpack.c.b16 %v2742, %v2741
      %v2757 = vpack.c.b16 %v2744, %v2743
      %v2758 = vpack.c.b16 %v2746, %v2745
      %v2759 = vpack.c.b16 %v2748, %v2747
      %v2760 = vpack.c.b16 %v2750, %v2749
      %v2761 = vpack.c.b16 %v2752, %v2751
      %v2762 = vpack.c.b16 %v2754, %v2753
      %2771 = vmatprep.subr.bf16.mxu0 0
      %2772 = vmatpush1.bf16.msra.mxu0 %v2755
      %2773 = vmatprep.subr.bf16.mxu0 0
      %2774 = vmatpush1.bf16.msra.mxu0 %v2756
      %2775 = vmatprep.subr.bf16.mxu0 0
      %2776 = vmatpush1.bf16.msra.mxu0 %v2757
      %2777 = vmatprep.subr.bf16.mxu0 0
      %2778 = vmatpush1.bf16.msra.mxu0 %v2758
      %2779 = vmatprep.subr.bf16.mxu0 0
      %2780 = vmatpush1.bf16.msra.mxu0 %v2759
      %2781 = vmatprep.subr.bf16.mxu0 0
      %2782 = vmatpush1.bf16.msra.mxu0 %v2760
      %2783 = vmatprep.subr.bf16.mxu0 0
      %2784 = vmatpush1.bf16.msra.mxu0 %v2761
      %2785 = vmatprep.subr.bf16.mxu0 0
      %2786 = vmatpush1.bf16.msra.mxu0 %v2762
      %2787 = vmatprep.subr.bf16.mxu0 0
      %2788 = vmatpush1.bf16.msra.mxu0 0
      %2789 = vmatprep.subr.bf16.mxu0 0
      %2790 = vmatpush1.bf16.msra.mxu0 0
      %2791 = vmatprep.subr.bf16.mxu0 0
      %2792 = vmatpush1.bf16.msra.mxu0 0
      %2793 = vmatprep.subr.bf16.mxu0 0
      %2794 = vmatpush1.bf16.msra.mxu0 0
      %2795 = vmatprep.subr.bf16.mxu0 0
      %2796 = vmatpush1.bf16.msra.mxu0 0
      %2797 = vmatprep.subr.bf16.mxu0 0
      %2798 = vmatpush1.bf16.msra.mxu0 0
      %2799 = vmatprep.subr.bf16.mxu0 0
      %2800 = vmatpush1.bf16.msra.mxu0 0
      %2801 = vmatprep.subr.bf16.mxu0 0
      %2802 = vmatpush1.bf16.msra.mxu0 0
      %2803 = vmatprep.mubr.bf16.mxu0 0
      %2804 = vmatmul.mubr.bf16.gmra.mrb[0].mxu0 %v2691
      %v2805 = vpop.f32.mrb[0].mxu0
      %v2806 = vadd.f32 0.0, %v2805
      %v2807 = vpop.f32.mrb[0].mxu0
      %v2808 = vpop.f32.mrb[0].mxu0
      %v2809 = vadd.f32 0.0, %v2808
      %v2810 = vpop.f32.mrb[0].mxu0
      %2811 = vmatprep.mubr.bf16.mxu0 0
      %2812 = vmatmul.mubr.bf16.gmra.mrb[0].mxu0 %v2692
      %v2813 = vpop.f32.mrb[0].mxu0
      %v2814 = vadd.f32 0.0, %v2813
      %v2815 = vpop.f32.mrb[0].mxu0
      %v2816 = vpop.f32.mrb[0].mxu0
      %v2817 = vadd.f32 0.0, %v2816
      %v2818 = vpop.f32.mrb[0].mxu0
      %2819 = vmatprep.mubr.bf16.mxu0 0
      %2820 = vmatmul.mubr.bf16.gmra.mrb[0].mxu0 %v2693
      %v2821 = vpop.f32.mrb[0].mxu0
      %v2822 = vadd.f32 0.0, %v2821
      %v2823 = vpop.f32.mrb[0].mxu0
      %v2824 = vpop.f32.mrb[0].mxu0
      %v2825 = vadd.f32 0.0, %v2824
      %v2826 = vpop.f32.mrb[0].mxu0
      %2827 = vmatprep.mubr.bf16.mxu0 0
      %2828 = vmatmul.mubr.bf16.gmra.mrb[0].mxu0 %v2694
      %v2829 = vpop.f32.mrb[0].mxu0
      %v2830 = vadd.f32 0.0, %v2829
      %v2831 = vpop.f32.mrb[0].mxu0
      %v2832 = vpop.f32.mrb[0].mxu0
      %v2833 = vadd.f32 0.0, %v2832
      %v2834 = vpop.f32.mrb[0].mxu0
      %2835 = vmatprep.mubr.bf16.mxu0 0
      %2836 = vmatmul.mubr.bf16.gmra.mrb[0].mxu0 %v2695
      %v2837 = vpop.f32.mrb[0].mxu0
      %v2838 = vadd.f32 0.0, %v2837
      %v2839 = vpop.f32.mrb[0].mxu0
      %v2840 = vpop.f32.mrb[0].mxu0
      %v2841 = vadd.f32 0.0, %v2840
      %v2842 = vpop.f32.mrb[0].mxu0
      %2843 = vmatprep.mubr.bf16.mxu0 0
      %2844 = vmatmul.mubr.bf16.gmra.mrb[0].mxu0 %v2696
      %v2845 = vpop.f32.mrb[0].mxu0
      %v2846 = vadd.f32 0.0, %v2845
      %v2847 = vpop.f32.mrb[0].mxu0
      %v2848 = vpop.f32.mrb[0].mxu0
      %v2849 = vadd.f32 0.0, %v2848
      %v2850 = vpop.f32.mrb[0].mxu0
      %2851 = vmatprep.mubr.bf16.mxu0 0
      %2852 = vmatmul.mubr.bf16.gmra.mrb[0].mxu0 %v2697
      %v2853 = vpop.f32.mrb[0].mxu0
      %v2854 = vadd.f32 0.0, %v2853
      %v2855 = vpop.f32.mrb[0].mxu0
      %v2856 = vpop.f32.mrb[0].mxu0
      %v2857 = vadd.f32 0.0, %v2856
      %v2858 = vpop.f32.mrb[0].mxu0
      %2859 = vmatprep.mubr.bf16.mxu0 0
      %2860 = vmatmul.mubr.bf16.gmra.mrb[0].mxu0 %v2698
      %v2861 = vpop.f32.mrb[0].mxu0
      %v2862 = vadd.f32 0.0, %v2861
      %v2863 = vpop.f32.mrb[0].mxu0
      %v2864 = vpop.f32.mrb[0].mxu0
      %v2865 = vadd.f32 0.0, %v2864
      %v2866 = vpop.f32.mrb[0].mxu0
      %2867 = vmatprep.mubr.bf16.mxu0 0
      %2868 = vmatmul.mubr.bf16.gmra.mrb[0].mxu0 %v2699
      %v2869 = vpop.f32.mrb[0].mxu0
      %v2870 = vadd.f32 0.0, %v2869
      %v2871 = vpop.f32.mrb[0].mxu0
      %v2872 = vpop.f32.mrb[0].mxu0
      %v2873 = vadd.f32 0.0, %v2872
      %v2874 = vpop.f32.mrb[0].mxu0
      %2875 = vmatprep.mubr.bf16.mxu0 0
      %2876 = vmatmul.mubr.bf16.gmra.mrb[0].mxu0 %v2700
      %v2877 = vpop.f32.mrb[0].mxu0
      %v2878 = vadd.f32 0.0, %v2877
      %v2879 = vpop.f32.mrb[0].mxu0
      %v2880 = vpop.f32.mrb[0].mxu0
      %v2881 = vadd.f32 0.0, %v2880
      %v2882 = vpop.f32.mrb[0].mxu0
      %2883 = vmatprep.mubr.bf16.mxu0 0
      %2884 = vmatmul.mubr.bf16.gmra.mrb[0].mxu0 %v2701
      %v2885 = vpop.f32.mrb[0].mxu0
      %v2886 = vadd.f32 0.0, %v2885
      %v2887 = vpop.f32.mrb[0].mxu0
      %v2888 = vpop.f32.mrb[0].mxu0
      %v2889 = vadd.f32 0.0, %v2888
      %v2890 = vpop.f32.mrb[0].mxu0
      %2891 = vmatprep.mubr.bf16.mxu0 0
      %2892 = vmatmul.mubr.bf16.gmra.mrb[0].mxu0 %v2702
      %v2893 = vpop.f32.mrb[0].mxu0
      %v2894 = vadd.f32 0.0, %v2893
      %v2895 = vpop.f32.mrb[0].mxu0
      %v2896 = vpop.f32.mrb[0].mxu0
      %v2897 = vadd.f32 0.0, %v2896
      %v2898 = vpop.f32.mrb[0].mxu0
      %2899 = vmatprep.mubr.bf16.mxu0 0
      %2900 = vmatmul.mubr.bf16.gmra.mrb[0].mxu0 %v2703
      %v2901 = vpop.f32.mrb[0].mxu0
      %v2902 = vadd.f32 0.0, %v2901
      %v2903 = vpop.f32.mrb[0].mxu0
      %v2904 = vpop.f32.mrb[0].mxu0
      %v2905 = vadd.f32 0.0, %v2904
      %v2906 = vpop.f32.mrb[0].mxu0
      %2907 = vmatprep.mubr.bf16.mxu0 0
      %2908 = vmatmul.mubr.bf16.gmra.mrb[0].mxu0 %v2704
      %v2909 = vpop.f32.mrb[0].mxu0
      %v2910 = vadd.f32 0.0, %v2909
      %v2911 = vpop.f32.mrb[0].mxu0
      %v2912 = vpop.f32.mrb[0].mxu0
      %v2913 = vadd.f32 0.0, %v2912
      %v2914 = vpop.f32.mrb[0].mxu0
      %2915 = vmatprep.mubr.bf16.mxu0 0
      %2916 = vmatmul.mubr.bf16.gmra.mrb[0].mxu0 %v2705
      %v2917 = vpop.f32.mrb[0].mxu0
      %v2918 = vadd.f32 0.0, %v2917
      %v2919 = vpop.f32.mrb[0].mxu0
      %v2920 = vpop.f32.mrb[0].mxu0
      %v2921 = vadd.f32 0.0, %v2920
      %v2922 = vpop.f32.mrb[0].mxu0
      %2923 = vmatprep.mubr.bf16.mxu0 0
      %2924 = vmatmul.mubr.bf16.gmra.mrb[0].mxu0 %v2706
      %v2925 = vpop.f32.mrb[0].mxu0
      %v2926 = vadd.f32 0.0, %v2925
      %v2927 = vpop.f32.mrb[0].mxu0
      %v2928 = vpop.f32.mrb[0].mxu0
      %v2929 = vadd.f32 0.0, %v2928
      %v2930 = vpop.f32.mrb[0].mxu0
      %2931 = vdwg.mxu0
      %v2932 = vadd.f32 %v2178, %v2806
      %v2933 = vadd.f32 %v2179, %v2809
      %v2934 = vadd.f32 %v2180, %v2814
      %v2935 = vadd.f32 %v2181, %v2817
      %v2936 = vadd.f32 %v2182, %v2822
      %v2937 = vadd.f32 %v2183, %v2825
      %v2938 = vadd.f32 %v2184, %v2830
      %v2939 = vadd.f32 %v2185, %v2833
      %v2940 = vadd.f32 %v2186, %v2838
      %v2941 = vadd.f32 %v2187, %v2841
      %v2942 = vadd.f32 %v2188, %v2846
      %v2943 = vadd.f32 %v2189, %v2849
      %v2944 = vadd.f32 %v2190, %v2854
      %v2945 = vadd.f32 %v2191, %v2857
      %v2946 = vadd.f32 %v2192, %v2862
      %v2947 = vadd.f32 %v2193, %v2865
      %v2948 = vadd.f32 %v2194, %v2870
      %v2949 = vadd.f32 %v2195, %v2873
      %v2950 = vadd.f32 %v2196, %v2878
      %v2951 = vadd.f32 %v2197, %v2881
      %v2952 = vadd.f32 %v2198, %v2886
      %v2953 = vadd.f32 %v2199, %v2889
      %v2954 = vadd.f32 %v2200, %v2894
      %v2955 = vadd.f32 %v2201, %v2897
      %v2956 = vadd.f32 %v2202, %v2902
      %v2957 = vadd.f32 %v2203, %v2905
      %v2958 = vadd.f32 %v2204, %v2910
      %v2959 = vadd.f32 %v2205, %v2913
      %v2960 = vadd.f32 %v2206, %v2918
      %v2961 = vadd.f32 %v2207, %v2921
      %v2962 = vadd.f32 %v2208, %v2926
      %v2963 = vadd.f32 %v2209, %v2929
      %v2964 = vld [vmem:[%s273] sm:$0xe]
      %v2965 = vld [vmem:[%s273 + $0xc] sm:$0xe]
      %v2966 = vld [vmem:[%s273 + $0x18] sm:$0xe]
      %v2967 = vld [vmem:[%s273 + $0x24] sm:$0xe]
      %v2968 = vld [vmem:[%s273 + $0x30] sm:$0xe]
      %v2969 = vld [vmem:[%s273 + $0x3c] sm:$0xe]
      %v2970 = vld [vmem:[%s273 + $0x48] sm:$0xe]
      %v2971 = vld [vmem:[%s273 + $0x54] sm:$0xe]
      %v2972 = vld [vmem:[%s273 + $0x60] sm:$0xe]
      %v2973 = vld [vmem:[%s273 + $0x6c] sm:$0xe]
      %v2974 = vld [vmem:[%s273 + $0x78] sm:$0xe]
      %v2975 = vld [vmem:[%s273 + $0x84] sm:$0xe]
      %v2976 = vld [vmem:[%s273 + $0x90] sm:$0xe]
      %v2977 = vld [vmem:[%s273 + $0x9c] sm:$0xe]
      %v2978 = vld [vmem:[%s273 + $0xa8] sm:$0xe]
      %v2979 = vld [vmem:[%s273 + $0xb4] sm:$0xe]
      %v3028 = vrot.slane %v2964, 5
      %v3029 = vrot.slane %v3028, 4
      %v3030 = vrot.slane %v2211, 5
      %v3031 = vsel %vm1389, %v3029, %v3030
      %v3032 = vrot.slane %v3030, 4
      %v3033 = vrot.slane %v2212, 5
      %v3034 = vsel %vm1389, %v3032, %v3033
      %v3035 = vrot.slane %v2965, 5
      %v3036 = vrot.slane %v3035, 4
      %v3037 = vrot.slane %v2214, 5
      %v3038 = vsel %vm1389, %v3036, %v3037
      %v3039 = vrot.slane %v3037, 4
      %v3040 = vrot.slane %v2215, 5
      %v3041 = vsel %vm1389, %v3039, %v3040
      %v3042 = vrot.slane %v2966, 5
      %v3043 = vrot.slane %v3042, 4
      %v3044 = vrot.slane %v2217, 5
      %v3045 = vsel %vm1389, %v3043, %v3044
      %v3046 = vrot.slane %v3044, 4
      %v3047 = vrot.slane %v2218, 5
      %v3048 = vsel %vm1389, %v3046, %v3047
      %v3049 = vrot.slane %v2967, 5
      %v3050 = vrot.slane %v3049, 4
      %v3051 = vrot.slane %v2220, 5
      %v3052 = vsel %vm1389, %v3050, %v3051
      %v3053 = vrot.slane %v3051, 4
      %v3054 = vrot.slane %v2221, 5
      %v3055 = vsel %vm1389, %v3053, %v3054
      %v3056 = vrot.slane %v2968, 5
      %v3057 = vrot.slane %v3056, 4
      %v3058 = vrot.slane %v2223, 5
      %v3059 = vsel %vm1389, %v3057, %v3058
      %v3060 = vrot.slane %v3058, 4
      %v3061 = vrot.slane %v2224, 5
      %v3062 = vsel %vm1389, %v3060, %v3061
      %v3063 = vrot.slane %v2969, 5
      %v3064 = vrot.slane %v3063, 4
      %v3065 = vrot.slane %v2226, 5
      %v3066 = vsel %vm1389, %v3064, %v3065
      %v3067 = vrot.slane %v3065, 4
      %v3068 = vrot.slane %v2227, 5
      %v3069 = vsel %vm1389, %v3067, %v3068
      %v3070 = vrot.slane %v2970, 5
      %v3071 = vrot.slane %v3070, 4
      %v3072 = vrot.slane %v2229, 5
      %v3073 = vsel %vm1389, %v3071, %v3072
      %v3074 = vrot.slane %v3072, 4
      %v3075 = vrot.slane %v2230, 5
      %v3076 = vsel %vm1389, %v3074, %v3075
      %v3077 = vrot.slane %v2971, 5
      %v3078 = vrot.slane %v3077, 4
      %v3079 = vrot.slane %v2232, 5
      %v3080 = vsel %vm1389, %v3078, %v3079
      %v3081 = vrot.slane %v3079, 4
      %v3082 = vrot.slane %v2233, 5
      %v3083 = vsel %vm1389, %v3081, %v3082
      %v3084 = vrot.slane %v2972, 5
      %v3085 = vrot.slane %v3084, 4
      %v3086 = vrot.slane %v2235, 5
      %v3087 = vsel %vm1389, %v3085, %v3086
      %v3088 = vrot.slane %v3086, 4
      %v3089 = vrot.slane %v2236, 5
      %v3090 = vsel %vm1389, %v3088, %v3089
      %v3091 = vrot.slane %v2973, 5
      %v3092 = vrot.slane %v3091, 4
      %v3093 = vrot.slane %v2238, 5
      %v3094 = vsel %vm1389, %v3092, %v3093
      %v3095 = vrot.slane %v3093, 4
      %v3096 = vrot.slane %v2239, 5
      %v3097 = vsel %vm1389, %v3095, %v3096
      %v3098 = vrot.slane %v2974, 5
      %v3099 = vrot.slane %v3098, 4
      %v3100 = vrot.slane %v2241, 5
      %v3101 = vsel %vm1389, %v3099, %v3100
      %v3102 = vrot.slane %v3100, 4
      %v3103 = vrot.slane %v2242, 5
      %v3104 = vsel %vm1389, %v3102, %v3103
      %v3105 = vrot.slane %v2975, 5
      %v3106 = vrot.slane %v3105, 4
      %v3107 = vrot.slane %v2244, 5
      %v3108 = vsel %vm1389, %v3106, %v3107
      %v3109 = vrot.slane %v3107, 4
      %v3110 = vrot.slane %v2245, 5
      %v3111 = vsel %vm1389, %v3109, %v3110
      %v3112 = vrot.slane %v2976, 5
      %v3113 = vrot.slane %v3112, 4
      %v3114 = vrot.slane %v2247, 5
      %v3115 = vsel %vm1389, %v3113, %v3114
      %v3116 = vrot.slane %v3114, 4
      %v3117 = vrot.slane %v2248, 5
      %v3118 = vsel %vm1389, %v3116, %v3117
      %v3119 = vrot.slane %v2977, 5
      %v3120 = vrot.slane %v3119, 4
      %v3121 = vrot.slane %v2250, 5
      %v3122 = vsel %vm1389, %v3120, %v3121
      %v3123 = vrot.slane %v3121, 4
      %v3124 = vrot.slane %v2251, 5
      %v3125 = vsel %vm1389, %v3123, %v3124
      %v3126 = vrot.slane %v2978, 5
      %v3127 = vrot.slane %v3126, 4
      %v3128 = vrot.slane %v2253, 5
      %v3129 = vsel %vm1389, %v3127, %v3128
      %v3130 = vrot.slane %v3128, 4
      %v3131 = vrot.slane %v2254, 5
      %v3132 = vsel %vm1389, %v3130, %v3131
      %v3133 = vrot.slane %v2979, 5
      %v3134 = vrot.slane %v3133, 4
      %v3135 = vrot.slane %v2256, 5
      %v3136 = vsel %vm1389, %v3134, %v3135
      %v3137 = vrot.slane %v3135, 4
      %v3138 = vrot.slane %v2257, 5
      %v3139 = vsel %vm1389, %v3137, %v3138
      %s3140 = scalar_lea.vmem %s3, 320
      %v3141 = vld [vmem:[%s3140] sm:$0xf]
      %v3142 = vld [vmem:[%s3140 + $0x4] sm:$0xf]
      %v3143 = vld [vmem:[%s3140 + $0x8] sm:$0xf]
      %v3144 = vld [vmem:[%s3140 + $0xc] sm:$0xf]
      %v3145 = vld [vmem:[%s3140 + $0x10] sm:$0xf]
      %v3146 = vld [vmem:[%s3140 + $0x14] sm:$0xf]
      %v3147 = vld [vmem:[%s3140 + $0x18] sm:$0xf]
      %v3148 = vld [vmem:[%s3140 + $0x1c] sm:$0xf]
      %v3149 = vld [vmem:[%s3140 + $0x20] sm:$0xf]
      %v3150 = vld [vmem:[%s3140 + $0x24] sm:$0xf]
      %v3151 = vld [vmem:[%s3140 + $0x28] sm:$0xf]
      %v3152 = vld [vmem:[%s3140 + $0x2c] sm:$0xf]
      %v3153 = vld [vmem:[%s3140 + $0x30] sm:$0xf]
      %v3154 = vld [vmem:[%s3140 + $0x34] sm:$0xf]
      %v3155 = vld [vmem:[%s3140 + $0x38] sm:$0xf]
      %v3156 = vld [vmem:[%s3140 + $0x3c] sm:$0xf]
      %v3157 = vunpack.c.l.b16 %v3031
      %v3158 = vunpack.c.l.b16 %v3034
      %v3159 = vunpack.c.l.b16 %v3038
      %v3160 = vunpack.c.l.b16 %v3041
      %v3161 = vunpack.c.l.b16 %v3045
      %v3162 = vunpack.c.l.b16 %v3048
      %v3163 = vunpack.c.l.b16 %v3052
      %v3164 = vunpack.c.l.b16 %v3055
      %v3165 = vunpack.c.l.b16 %v3059
      %v3166 = vunpack.c.l.b16 %v3062
      %v3167 = vunpack.c.l.b16 %v3066
      %v3168 = vunpack.c.l.b16 %v3069
      %v3169 = vunpack.c.l.b16 %v3073
      %v3170 = vunpack.c.l.b16 %v3076
      %v3171 = vunpack.c.l.b16 %v3080
      %v3172 = vunpack.c.l.b16 %v3083
      %v3173 = vunpack.c.l.b16 %v3087
      %v3174 = vunpack.c.l.b16 %v3090
      %v3175 = vunpack.c.l.b16 %v3094
      %v3176 = vunpack.c.l.b16 %v3097
      %v3177 = vunpack.c.l.b16 %v3101
      %v3178 = vunpack.c.l.b16 %v3104
      %v3179 = vunpack.c.l.b16 %v3108
      %v3180 = vunpack.c.l.b16 %v3111
      %v3181 = vunpack.c.l.b16 %v3115
      %v3182 = vunpack.c.l.b16 %v3118
      %v3183 = vunpack.c.l.b16 %v3122
      %v3184 = vunpack.c.l.b16 %v3125
      %v3185 = vunpack.c.l.b16 %v3129
      %v3186 = vunpack.c.l.b16 %v3132
      %v3187 = vunpack.c.l.b16 %v3136
      %v3188 = vunpack.c.l.b16 %v3139
      %v3189 = vpack.c.b16 %v3158, %v3157
      %v3190 = vpack.c.b16 %v3160, %v3159
      %v3191 = vpack.c.b16 %v3162, %v3161
      %v3192 = vpack.c.b16 %v3164, %v3163
      %v3193 = vpack.c.b16 %v3166, %v3165
      %v3194 = vpack.c.b16 %v3168, %v3167
      %v3195 = vpack.c.b16 %v3170, %v3169
      %v3196 = vpack.c.b16 %v3172, %v3171
      %v3197 = vpack.c.b16 %v3174, %v3173
      %v3198 = vpack.c.b16 %v3176, %v3175
      %v3199 = vpack.c.b16 %v3178, %v3177
      %v3200 = vpack.c.b16 %v3180, %v3179
      %v3201 = vpack.c.b16 %v3182, %v3181
      %v3202 = vpack.c.b16 %v3184, %v3183
      %v3203 = vpack.c.b16 %v3186, %v3185
      %v3204 = vpack.c.b16 %v3188, %v3187
      %v3237 = vunpack.c.l.b16 %v3141
      %v3238 = vunpack.c.l.b16 %v3142
      %v3239 = vunpack.c.l.b16 %v3143
      %v3240 = vunpack.c.l.b16 %v3144
      %v3241 = vunpack.c.l.b16 %v3145
      %v3242 = vunpack.c.l.b16 %v3146
      %v3243 = vunpack.c.l.b16 %v3147
      %v3244 = vunpack.c.l.b16 %v3148
      %v3245 = vunpack.c.l.b16 %v3149
      %v3246 = vunpack.c.l.b16 %v3150
      %v3247 = vunpack.c.l.b16 %v3151
      %v3248 = vunpack.c.l.b16 %v3152
      %v3249 = vunpack.c.l.b16 %v3153
      %v3250 = vunpack.c.l.b16 %v3154
      %v3251 = vunpack.c.l.b16 %v3155
      %v3252 = vunpack.c.l.b16 %v3156
      %v3253 = vpack.c.b16 %v3238, %v3237
      %v3254 = vpack.c.b16 %v3240, %v3239
      %v3255 = vpack.c.b16 %v3242, %v3241
      %v3256 = vpack.c.b16 %v3244, %v3243
      %v3257 = vpack.c.b16 %v3246, %v3245
      %v3258 = vpack.c.b16 %v3248, %v3247
      %v3259 = vpack.c.b16 %v3250, %v3249
      %v3260 = vpack.c.b16 %v3252, %v3251
      %3269 = vmatprep.subr.bf16.mxu0 0
      %3270 = vmatpush1.bf16.msra.mxu0 %v3253
      %3271 = vmatprep.subr.bf16.mxu0 0
      %3272 = vmatpush1.bf16.msra.mxu0 %v3254
      %3273 = vmatprep.subr.bf16.mxu0 0
      %3274 = vmatpush1.bf16.msra.mxu0 %v3255
      %3275 = vmatprep.subr.bf16.mxu0 0
      %3276 = vmatpush1.bf16.msra.mxu0 %v3256
      %3277 = vmatprep.subr.bf16.mxu0 0
      %3278 = vmatpush1.bf16.msra.mxu0 %v3257
      %3279 = vmatprep.subr.bf16.mxu0 0
      %3280 = vmatpush1.bf16.msra.mxu0 %v3258
      %3281 = vmatprep.subr.bf16.mxu0 0
      %3282 = vmatpush1.bf16.msra.mxu0 %v3259
      %3283 = vmatprep.subr.bf16.mxu0 0
      %3284 = vmatpush1.bf16.msra.mxu0 %v3260
      %3285 = vmatprep.subr.bf16.mxu0 0
      %3286 = vmatpush1.bf16.msra.mxu0 0
      %3287 = vmatprep.subr.bf16.mxu0 0
      %3288 = vmatpush1.bf16.msra.mxu0 0
      %3289 = vmatprep.subr.bf16.mxu0 0
      %3290 = vmatpush1.bf16.msra.mxu0 0
      %3291 = vmatprep.subr.bf16.mxu0 0
      %3292 = vmatpush1.bf16.msra.mxu0 0
      %3293 = vmatprep.subr.bf16.mxu0 0
      %3294 = vmatpush1.bf16.msra.mxu0 0
      %3295 = vmatprep.subr.bf16.mxu0 0
      %3296 = vmatpush1.bf16.msra.mxu0 0
      %3297 = vmatprep.subr.bf16.mxu0 0
      %3298 = vmatpush1.bf16.msra.mxu0 0
      %3299 = vmatprep.subr.bf16.mxu0 0
      %3300 = vmatpush1.bf16.msra.mxu0 0
      %3301 = vmatprep.mubr.bf16.mxu0 0
      %3302 = vmatmul.mubr.bf16.gmra.mrb[0].mxu0 %v3189
      %v3303 = vpop.f32.mrb[0].mxu0
      %v3304 = vadd.f32 0.0, %v3303
      %v3305 = vpop.f32.mrb[0].mxu0
      %v3306 = vpop.f32.mrb[0].mxu0
      %v3307 = vadd.f32 0.0, %v3306
      %v3308 = vpop.f32.mrb[0].mxu0
      %3309 = vmatprep.mubr.bf16.mxu0 0
      %3310 = vmatmul.mubr.bf16.gmra.mrb[0].mxu0 %v3190
      %v3311 = vpop.f32.mrb[0].mxu0
      %v3312 = vadd.f32 0.0, %v3311
      %v3313 = vpop.f32.mrb[0].mxu0
      %v3314 = vpop.f32.mrb[0].mxu0
      %v3315 = vadd.f32 0.0, %v3314
      %v3316 = vpop.f32.mrb[0].mxu0
      %3317 = vmatprep.mubr.bf16.mxu0 0
      %3318 = vmatmul.mubr.bf16.gmra.mrb[0].mxu0 %v3191
      %v3319 = vpop.f32.mrb[0].mxu0
      %v3320 = vadd.f32 0.0, %v3319
      %v3321 = vpop.f32.mrb[0].mxu0
      %v3322 = vpop.f32.mrb[0].mxu0
      %v3323 = vadd.f32 0.0, %v3322
      %v3324 = vpop.f32.mrb[0].mxu0
      %3325 = vmatprep.mubr.bf16.mxu0 0
      %3326 = vmatmul.mubr.bf16.gmra.mrb[0].mxu0 %v3192
      %v3327 = vpop.f32.mrb[0].mxu0
      %v3328 = vadd.f32 0.0, %v3327
      %v3329 = vpop.f32.mrb[0].mxu0
      %v3330 = vpop.f32.mrb[0].mxu0
      %v3331 = vadd.f32 0.0, %v3330
      %v3332 = vpop.f32.mrb[0].mxu0
      %3333 = vmatprep.mubr.bf16.mxu0 0
      %3334 = vmatmul.mubr.bf16.gmra.mrb[0].mxu0 %v3193
      %v3335 = vpop.f32.mrb[0].mxu0
      %v3336 = vadd.f32 0.0, %v3335
      %v3337 = vpop.f32.mrb[0].mxu0
      %v3338 = vpop.f32.mrb[0].mxu0
      %v3339 = vadd.f32 0.0, %v3338
      %v3340 = vpop.f32.mrb[0].mxu0
      %3341 = vmatprep.mubr.bf16.mxu0 0
      %3342 = vmatmul.mubr.bf16.gmra.mrb[0].mxu0 %v3194
      %v3343 = vpop.f32.mrb[0].mxu0
      %v3344 = vadd.f32 0.0, %v3343
      %v3345 = vpop.f32.mrb[0].mxu0
      %v3346 = vpop.f32.mrb[0].mxu0
      %v3347 = vadd.f32 0.0, %v3346
      %v3348 = vpop.f32.mrb[0].mxu0
      %3349 = vmatprep.mubr.bf16.mxu0 0
      %3350 = vmatmul.mubr.bf16.gmra.mrb[0].mxu0 %v3195
      %v3351 = vpop.f32.mrb[0].mxu0
      %v3352 = vadd.f32 0.0, %v3351
      %v3353 = vpop.f32.mrb[0].mxu0
      %v3354 = vpop.f32.mrb[0].mxu0
      %v3355 = vadd.f32 0.0, %v3354
      %v3356 = vpop.f32.mrb[0].mxu0
      %3357 = vmatprep.mubr.bf16.mxu0 0
      %3358 = vmatmul.mubr.bf16.gmra.mrb[0].mxu0 %v3196
      %v3359 = vpop.f32.mrb[0].mxu0
      %v3360 = vadd.f32 0.0, %v3359
      %v3361 = vpop.f32.mrb[0].mxu0
      %v3362 = vpop.f32.mrb[0].mxu0
      %v3363 = vadd.f32 0.0, %v3362
      %v3364 = vpop.f32.mrb[0].mxu0
      %3365 = vmatprep.mubr.bf16.mxu0 0
      %3366 = vmatmul.mubr.bf16.gmra.mrb[0].mxu0 %v3197
      %v3367 = vpop.f32.mrb[0].mxu0
      %v3368 = vadd.f32 0.0, %v3367
      %v3369 = vpop.f32.mrb[0].mxu0
      %v3370 = vpop.f32.mrb[0].mxu0
      %v3371 = vadd.f32 0.0, %v3370
      %v3372 = vpop.f32.mrb[0].mxu0
      %3373 = vmatprep.mubr.bf16.mxu0 0
      %3374 = vmatmul.mubr.bf16.gmra.mrb[0].mxu0 %v3198
      %v3375 = vpop.f32.mrb[0].mxu0
      %v3376 = vadd.f32 0.0, %v3375
      %v3377 = vpop.f32.mrb[0].mxu0
      %v3378 = vpop.f32.mrb[0].mxu0
      %v3379 = vadd.f32 0.0, %v3378
      %v3380 = vpop.f32.mrb[0].mxu0
      %3381 = vmatprep.mubr.bf16.mxu0 0
      %3382 = vmatmul.mubr.bf16.gmra.mrb[0].mxu0 %v3199
      %v3383 = vpop.f32.mrb[0].mxu0
      %v3384 = vadd.f32 0.0, %v3383
      %v3385 = vpop.f32.mrb[0].mxu0
      %v3386 = vpop.f32.mrb[0].mxu0
      %v3387 = vadd.f32 0.0, %v3386
      %v3388 = vpop.f32.mrb[0].mxu0
      %3389 = vmatprep.mubr.bf16.mxu0 0
      %3390 = vmatmul.mubr.bf16.gmra.mrb[0].mxu0 %v3200
      %v3391 = vpop.f32.mrb[0].mxu0
      %v3392 = vadd.f32 0.0, %v3391
      %v3393 = vpop.f32.mrb[0].mxu0
      %v3394 = vpop.f32.mrb[0].mxu0
      %v3395 = vadd.f32 0.0, %v3394
      %v3396 = vpop.f32.mrb[0].mxu0
      %3397 = vmatprep.mubr.bf16.mxu0 0
      %3398 = vmatmul.mubr.bf16.gmra.mrb[0].mxu0 %v3201
      %v3399 = vpop.f32.mrb[0].mxu0
      %v3400 = vadd.f32 0.0, %v3399
      %v3401 = vpop.f32.mrb[0].mxu0
      %v3402 = vpop.f32.mrb[0].mxu0
      %v3403 = vadd.f32 0.0, %v3402
      %v3404 = vpop.f32.mrb[0].mxu0
      %3405 = vmatprep.mubr.bf16.mxu0 0
      %3406 = vmatmul.mubr.bf16.gmra.mrb[0].mxu0 %v3202
      %v3407 = vpop.f32.mrb[0].mxu0
      %v3408 = vadd.f32 0.0, %v3407
      %v3409 = vpop.f32.mrb[0].mxu0
      %v3410 = vpop.f32.mrb[0].mxu0
      %v3411 = vadd.f32 0.0, %v3410
      %v3412 = vpop.f32.mrb[0].mxu0
      %3413 = vmatprep.mubr.bf16.mxu0 0
      %3414 = vmatmul.mubr.bf16.gmra.mrb[0].mxu0 %v3203
      %v3415 = vpop.f32.mrb[0].mxu0
      %v3416 = vadd.f32 0.0, %v3415
      %v3417 = vpop.f32.mrb[0].mxu0
      %v3418 = vpop.f32.mrb[0].mxu0
      %v3419 = vadd.f32 0.0, %v3418
      %v3420 = vpop.f32.mrb[0].mxu0
      %3421 = vmatprep.mubr.bf16.mxu0 0
      %3422 = vmatmul.mubr.bf16.gmra.mrb[0].mxu0 %v3204
      %v3423 = vpop.f32.mrb[0].mxu0
      %v3424 = vadd.f32 0.0, %v3423
      %v3425 = vpop.f32.mrb[0].mxu0
      %v3426 = vpop.f32.mrb[0].mxu0
      %v3427 = vadd.f32 0.0, %v3426
      %v3428 = vpop.f32.mrb[0].mxu0
      %3429 = vdwg.mxu0
      %v3430 = vadd.f32 %v2932, %v3304
      %v3431 = vadd.f32 %v2933, %v3307
      %v3432 = vadd.f32 %v2934, %v3312
      %v3433 = vadd.f32 %v2935, %v3315
      %v3434 = vadd.f32 %v2936, %v3320
      %v3435 = vadd.f32 %v2937, %v3323
      %v3436 = vadd.f32 %v2938, %v3328
      %v3437 = vadd.f32 %v2939, %v3331
      %v3438 = vadd.f32 %v2940, %v3336
      %v3439 = vadd.f32 %v2941, %v3339
      %v3440 = vadd.f32 %v2942, %v3344
      %v3441 = vadd.f32 %v2943, %v3347
      %v3442 = vadd.f32 %v2944, %v3352
      %v3443 = vadd.f32 %v2945, %v3355
      %v3444 = vadd.f32 %v2946, %v3360
      %v3445 = vadd.f32 %v2947, %v3363
      %v3446 = vadd.f32 %v2948, %v3368
      %v3447 = vadd.f32 %v2949, %v3371
      %v3448 = vadd.f32 %v2950, %v3376
      %v3449 = vadd.f32 %v2951, %v3379
      %v3450 = vadd.f32 %v2952, %v3384
      %v3451 = vadd.f32 %v2953, %v3387
      %v3452 = vadd.f32 %v2954, %v3392
      %v3453 = vadd.f32 %v2955, %v3395
      %v3454 = vadd.f32 %v2956, %v3400
      %v3455 = vadd.f32 %v2957, %v3403
      %v3456 = vadd.f32 %v2958, %v3408
      %v3457 = vadd.f32 %v2959, %v3411
      %v3458 = vadd.f32 %v2960, %v3416
      %v3459 = vadd.f32 %v2961, %v3419
      %v3460 = vadd.f32 %v2962, %v3424
      %v3461 = vadd.f32 %v2963, %v3427
      %v3462 = vld [vmem:[%s280] sm:$0xf]
      %v3463 = vld [vmem:[%s280 + $0x4] sm:$0xf]
      %v3464 = vld [vmem:[%s280 + $0xc] sm:$0xf]
      %v3465 = vld [vmem:[%s280 + $0x10] sm:$0xf]
      %v3466 = vld [vmem:[%s280 + $0x18] sm:$0xf]
      %v3467 = vld [vmem:[%s280 + $0x1c] sm:$0xf]
      %v3468 = vld [vmem:[%s280 + $0x24] sm:$0xf]
      %v3469 = vld [vmem:[%s280 + $0x28] sm:$0xf]
      %v3470 = vld [vmem:[%s280 + $0x30] sm:$0xf]
      %v3471 = vld [vmem:[%s280 + $0x34] sm:$0xf]
      %v3472 = vld [vmem:[%s280 + $0x3c] sm:$0xf]
      %v3473 = vld [vmem:[%s280 + $0x40] sm:$0xf]
      %v3474 = vld [vmem:[%s280 + $0x48] sm:$0xf]
      %v3475 = vld [vmem:[%s280 + $0x4c] sm:$0xf]
      %v3476 = vld [vmem:[%s280 + $0x54] sm:$0xf]
      %v3477 = vld [vmem:[%s280 + $0x58] sm:$0xf]
      %v3478 = vld [vmem:[%s280 + $0x60] sm:$0xf]
      %v3479 = vld [vmem:[%s280 + $0x64] sm:$0xf]
      %v3480 = vld [vmem:[%s280 + $0x6c] sm:$0xf]
      %v3481 = vld [vmem:[%s280 + $0x70] sm:$0xf]
      %v3482 = vld [vmem:[%s280 + $0x78] sm:$0xf]
      %v3483 = vld [vmem:[%s280 + $0x7c] sm:$0xf]
      %v3484 = vld [vmem:[%s280 + $0x84] sm:$0xf]
      %v3485 = vld [vmem:[%s280 + $0x88] sm:$0xf]
      %v3486 = vld [vmem:[%s280 + $0x90] sm:$0xf]
      %v3487 = vld [vmem:[%s280 + $0x94] sm:$0xf]
      %v3488 = vld [vmem:[%s280 + $0x9c] sm:$0xf]
      %v3489 = vld [vmem:[%s280 + $0xa0] sm:$0xf]
      %v3490 = vld [vmem:[%s280 + $0xa8] sm:$0xf]
      %v3491 = vld [vmem:[%s280 + $0xac] sm:$0xf]
      %v3492 = vld [vmem:[%s280 + $0xb4] sm:$0xf]
      %v3493 = vld [vmem:[%s280 + $0xb8] sm:$0xf]
      %s3494 = scalar_lea.vmem %s3, 384
      %v3495 = vld [vmem:[%s3494] sm:$0xf]
      %v3496 = vld [vmem:[%s3494 + $0x4] sm:$0xf]
      %v3497 = vld [vmem:[%s3494 + $0x8] sm:$0xf]
      %v3498 = vld [vmem:[%s3494 + $0xc] sm:$0xf]
      %v3499 = vld [vmem:[%s3494 + $0x10] sm:$0xf]
      %v3500 = vld [vmem:[%s3494 + $0x14] sm:$0xf]
      %v3501 = vld [vmem:[%s3494 + $0x18] sm:$0xf]
      %v3502 = vld [vmem:[%s3494 + $0x1c] sm:$0xf]
      %v3503 = vld [vmem:[%s3494 + $0x20] sm:$0xf]
      %v3504 = vld [vmem:[%s3494 + $0x24] sm:$0xf]
      %v3505 = vld [vmem:[%s3494 + $0x28] sm:$0xf]
      %v3506 = vld [vmem:[%s3494 + $0x2c] sm:$0xf]
      %v3507 = vld [vmem:[%s3494 + $0x30] sm:$0xf]
      %v3508 = vld [vmem:[%s3494 + $0x34] sm:$0xf]
      %v3509 = vld [vmem:[%s3494 + $0x38] sm:$0xf]
      %v3510 = vld [vmem:[%s3494 + $0x3c] sm:$0xf]
      %v3543 = vunpack.c.l.b16 %v3462
      %v3544 = vunpack.c.l.b16 %v3463
      %v3545 = vunpack.c.l.b16 %v3464
      %v3546 = vunpack.c.l.b16 %v3465
      %v3547 = vunpack.c.l.b16 %v3466
      %v3548 = vunpack.c.l.b16 %v3467
      %v3549 = vunpack.c.l.b16 %v3468
      %v3550 = vunpack.c.l.b16 %v3469
      %v3551 = vunpack.c.l.b16 %v3470
      %v3552 = vunpack.c.l.b16 %v3471
      %v3553 = vunpack.c.l.b16 %v3472
      %v3554 = vunpack.c.l.b16 %v3473
      %v3555 = vunpack.c.l.b16 %v3474
      %v3556 = vunpack.c.l.b16 %v3475
      %v3557 = vunpack.c.l.b16 %v3476
      %v3558 = vunpack.c.l.b16 %v3477
      %v3559 = vunpack.c.l.b16 %v3478
      %v3560 = vunpack.c.l.b16 %v3479
      %v3561 = vunpack.c.l.b16 %v3480
      %v3562 = vunpack.c.l.b16 %v3481
      %v3563 = vunpack.c.l.b16 %v3482
      %v3564 = vunpack.c.l.b16 %v3483
      %v3565 = vunpack.c.l.b16 %v3484
      %v3566 = vunpack.c.l.b16 %v3485
      %v3567 = vunpack.c.l.b16 %v3486
      %v3568 = vunpack.c.l.b16 %v3487
      %v3569 = vunpack.c.l.b16 %v3488
      %v3570 = vunpack.c.l.b16 %v3489
      %v3571 = vunpack.c.l.b16 %v3490
      %v3572 = vunpack.c.l.b16 %v3491
      %v3573 = vunpack.c.l.b16 %v3492
      %v3574 = vunpack.c.l.b16 %v3493
      %v3575 = vpack.c.b16 %v3544, %v3543
      %v3576 = vpack.c.b16 %v3546, %v3545
      %v3577 = vpack.c.b16 %v3548, %v3547
      %v3578 = vpack.c.b16 %v3550, %v3549
      %v3579 = vpack.c.b16 %v3552, %v3551
      %v3580 = vpack.c.b16 %v3554, %v3553
      %v3581 = vpack.c.b16 %v3556, %v3555
      %v3582 = vpack.c.b16 %v3558, %v3557
      %v3583 = vpack.c.b16 %v3560, %v3559
      %v3584 = vpack.c.b16 %v3562, %v3561
      %v3585 = vpack.c.b16 %v3564, %v3563
      %v3586 = vpack.c.b16 %v3566, %v3565
      %v3587 = vpack.c.b16 %v3568, %v3567
      %v3588 = vpack.c.b16 %v3570, %v3569
      %v3589 = vpack.c.b16 %v3572, %v3571
      %v3590 = vpack.c.b16 %v3574, %v3573
      %v3623 = vunpack.c.l.b16 %v3495
      %v3624 = vunpack.c.l.b16 %v3496
      %v3625 = vunpack.c.l.b16 %v3497
      %v3626 = vunpack.c.l.b16 %v3498
      %v3627 = vunpack.c.l.b16 %v3499
      %v3628 = vunpack.c.l.b16 %v3500
      %v3629 = vunpack.c.l.b16 %v3501
      %v3630 = vunpack.c.l.b16 %v3502
      %v3631 = vunpack.c.l.b16 %v3503
      %v3632 = vunpack.c.l.b16 %v3504
      %v3633 = vunpack.c.l.b16 %v3505
      %v3634 = vunpack.c.l.b16 %v3506
      %v3635 = vunpack.c.l.b16 %v3507
      %v3636 = vunpack.c.l.b16 %v3508
      %v3637 = vunpack.c.l.b16 %v3509
      %v3638 = vunpack.c.l.b16 %v3510
      %v3639 = vpack.c.b16 %v3624, %v3623
      %v3640 = vpack.c.b16 %v3626, %v3625
      %v3641 = vpack.c.b16 %v3628, %v3627
      %v3642 = vpack.c.b16 %v3630, %v3629
      %v3643 = vpack.c.b16 %v3632, %v3631
      %v3644 = vpack.c.b16 %v3634, %v3633
      %v3645 = vpack.c.b16 %v3636, %v3635
      %v3646 = vpack.c.b16 %v3638, %v3637
      %3655 = vmatprep.subr.bf16.mxu0 0
      %3656 = vmatpush1.bf16.msra.mxu0 %v3639
      %3657 = vmatprep.subr.bf16.mxu0 0
      %3658 = vmatpush1.bf16.msra.mxu0 %v3640
      %3659 = vmatprep.subr.bf16.mxu0 0
      %3660 = vmatpush1.bf16.msra.mxu0 %v3641
      %3661 = vmatprep.subr.bf16.mxu0 0
      %3662 = vmatpush1.bf16.msra.mxu0 %v3642
      %3663 = vmatprep.subr.bf16.mxu0 0
      %3664 = vmatpush1.bf16.msra.mxu0 %v3643
      %3665 = vmatprep.subr.bf16.mxu0 0
      %3666 = vmatpush1.bf16.msra.mxu0 %v3644
      %3667 = vmatprep.subr.bf16.mxu0 0
      %3668 = vmatpush1.bf16.msra.mxu0 %v3645
      %3669 = vmatprep.subr.bf16.mxu0 0
      %3670 = vmatpush1.bf16.msra.mxu0 %v3646
      %3671 = vmatprep.subr.bf16.mxu0 0
      %3672 = vmatpush1.bf16.msra.mxu0 0
      %3673 = vmatprep.subr.bf16.mxu0 0
      %3674 = vmatpush1.bf16.msra.mxu0 0
      %3675 = vmatprep.subr.bf16.mxu0 0
      %3676 = vmatpush1.bf16.msra.mxu0 0
      %3677 = vmatprep.subr.bf16.mxu0 0
      %3678 = vmatpush1.bf16.msra.mxu0 0
      %3679 = vmatprep.subr.bf16.mxu0 0
      %3680 = vmatpush1.bf16.msra.mxu0 0
      %3681 = vmatprep.subr.bf16.mxu0 0
      %3682 = vmatpush1.bf16.msra.mxu0 0
      %3683 = vmatprep.subr.bf16.mxu0 0
      %3684 = vmatpush1.bf16.msra.mxu0 0
      %3685 = vmatprep.subr.bf16.mxu0 0
      %3686 = vmatpush1.bf16.msra.mxu0 0
      %3687 = vmatprep.mubr.bf16.mxu0 0
      %3688 = vmatmul.mubr.bf16.gmra.mrb[0].mxu0 %v3575
      %v3689 = vpop.f32.mrb[0].mxu0
      %v3690 = vadd.f32 0.0, %v3689
      %v3691 = vpop.f32.mrb[0].mxu0
      %v3692 = vpop.f32.mrb[0].mxu0
      %v3693 = vadd.f32 0.0, %v3692
      %v3694 = vpop.f32.mrb[0].mxu0
      %3695 = vmatprep.mubr.bf16.mxu0 0
      %3696 = vmatmul.mubr.bf16.gmra.mrb[0].mxu0 %v3576
      %v3697 = vpop.f32.mrb[0].mxu0
      %v3698 = vadd.f32 0.0, %v3697
      %v3699 = vpop.f32.mrb[0].mxu0
      %v3700 = vpop.f32.mrb[0].mxu0
      %v3701 = vadd.f32 0.0, %v3700
      %v3702 = vpop.f32.mrb[0].mxu0
      %3703 = vmatprep.mubr.bf16.mxu0 0
      %3704 = vmatmul.mubr.bf16.gmra.mrb[0].mxu0 %v3577
      %v3705 = vpop.f32.mrb[0].mxu0
      %v3706 = vadd.f32 0.0, %v3705
      %v3707 = vpop.f32.mrb[0].mxu0
      %v3708 = vpop.f32.mrb[0].mxu0
      %v3709 = vadd.f32 0.0, %v3708
      %v3710 = vpop.f32.mrb[0].mxu0
      %3711 = vmatprep.mubr.bf16.mxu0 0
      %3712 = vmatmul.mubr.bf16.gmra.mrb[0].mxu0 %v3578
      %v3713 = vpop.f32.mrb[0].mxu0
      %v3714 = vadd.f32 0.0, %v3713
      %v3715 = vpop.f32.mrb[0].mxu0
      %v3716 = vpop.f32.mrb[0].mxu0
      %v3717 = vadd.f32 0.0, %v3716
      %v3718 = vpop.f32.mrb[0].mxu0
      %3719 = vmatprep.mubr.bf16.mxu0 0
      %3720 = vmatmul.mubr.bf16.gmra.mrb[0].mxu0 %v3579
      %v3721 = vpop.f32.mrb[0].mxu0
      %v3722 = vadd.f32 0.0, %v3721
      %v3723 = vpop.f32.mrb[0].mxu0
      %v3724 = vpop.f32.mrb[0].mxu0
      %v3725 = vadd.f32 0.0, %v3724
      %v3726 = vpop.f32.mrb[0].mxu0
      %3727 = vmatprep.mubr.bf16.mxu0 0
      %3728 = vmatmul.mubr.bf16.gmra.mrb[0].mxu0 %v3580
      %v3729 = vpop.f32.mrb[0].mxu0
      %v3730 = vadd.f32 0.0, %v3729
      %v3731 = vpop.f32.mrb[0].mxu0
      %v3732 = vpop.f32.mrb[0].mxu0
      %v3733 = vadd.f32 0.0, %v3732
      %v3734 = vpop.f32.mrb[0].mxu0
      %3735 = vmatprep.mubr.bf16.mxu0 0
      %3736 = vmatmul.mubr.bf16.gmra.mrb[0].mxu0 %v3581
      %v3737 = vpop.f32.mrb[0].mxu0
      %v3738 = vadd.f32 0.0, %v3737
      %v3739 = vpop.f32.mrb[0].mxu0
      %v3740 = vpop.f32.mrb[0].mxu0
      %v3741 = vadd.f32 0.0, %v3740
      %v3742 = vpop.f32.mrb[0].mxu0
      %3743 = vmatprep.mubr.bf16.mxu0 0
      %3744 = vmatmul.mubr.bf16.gmra.mrb[0].mxu0 %v3582
      %v3745 = vpop.f32.mrb[0].mxu0
      %v3746 = vadd.f32 0.0, %v3745
      %v3747 = vpop.f32.mrb[0].mxu0
      %v3748 = vpop.f32.mrb[0].mxu0
      %v3749 = vadd.f32 0.0, %v3748
      %v3750 = vpop.f32.mrb[0].mxu0
      %3751 = vmatprep.mubr.bf16.mxu0 0
      %3752 = vmatmul.mubr.bf16.gmra.mrb[0].mxu0 %v3583
      %v3753 = vpop.f32.mrb[0].mxu0
      %v3754 = vadd.f32 0.0, %v3753
      %v3755 = vpop.f32.mrb[0].mxu0
      %v3756 = vpop.f32.mrb[0].mxu0
      %v3757 = vadd.f32 0.0, %v3756
      %v3758 = vpop.f32.mrb[0].mxu0
      %3759 = vmatprep.mubr.bf16.mxu0 0
      %3760 = vmatmul.mubr.bf16.gmra.mrb[0].mxu0 %v3584
      %v3761 = vpop.f32.mrb[0].mxu0
      %v3762 = vadd.f32 0.0, %v3761
      %v3763 = vpop.f32.mrb[0].mxu0
      %v3764 = vpop.f32.mrb[0].mxu0
      %v3765 = vadd.f32 0.0, %v3764
      %v3766 = vpop.f32.mrb[0].mxu0
      %3767 = vmatprep.mubr.bf16.mxu0 0
      %3768 = vmatmul.mubr.bf16.gmra.mrb[0].mxu0 %v3585
      %v3769 = vpop.f32.mrb[0].mxu0
      %v3770 = vadd.f32 0.0, %v3769
      %v3771 = vpop.f32.mrb[0].mxu0
      %v3772 = vpop.f32.mrb[0].mxu0
      %v3773 = vadd.f32 0.0, %v3772
      %v3774 = vpop.f32.mrb[0].mxu0
      %3775 = vmatprep.mubr.bf16.mxu0 0
      %3776 = vmatmul.mubr.bf16.gmra.mrb[0].mxu0 %v3586
      %v3777 = vpop.f32.mrb[0].mxu0
      %v3778 = vadd.f32 0.0, %v3777
      %v3779 = vpop.f32.mrb[0].mxu0
      %v3780 = vpop.f32.mrb[0].mxu0
      %v3781 = vadd.f32 0.0, %v3780
      %v3782 = vpop.f32.mrb[0].mxu0
      %3783 = vmatprep.mubr.bf16.mxu0 0
      %3784 = vmatmul.mubr.bf16.gmra.mrb[0].mxu0 %v3587
      %v3785 = vpop.f32.mrb[0].mxu0
      %v3786 = vadd.f32 0.0, %v3785
      %v3787 = vpop.f32.mrb[0].mxu0
      %v3788 = vpop.f32.mrb[0].mxu0
      %v3789 = vadd.f32 0.0, %v3788
      %v3790 = vpop.f32.mrb[0].mxu0
      %3791 = vmatprep.mubr.bf16.mxu0 0
      %3792 = vmatmul.mubr.bf16.gmra.mrb[0].mxu0 %v3588
      %v3793 = vpop.f32.mrb[0].mxu0
      %v3794 = vadd.f32 0.0, %v3793
      %v3795 = vpop.f32.mrb[0].mxu0
      %v3796 = vpop.f32.mrb[0].mxu0
      %v3797 = vadd.f32 0.0, %v3796
      %v3798 = vpop.f32.mrb[0].mxu0
      %3799 = vmatprep.mubr.bf16.mxu0 0
      %3800 = vmatmul.mubr.bf16.gmra.mrb[0].mxu0 %v3589
      %v3801 = vpop.f32.mrb[0].mxu0
      %v3802 = vadd.f32 0.0, %v3801
      %v3803 = vpop.f32.mrb[0].mxu0
      %v3804 = vpop.f32.mrb[0].mxu0
      %v3805 = vadd.f32 0.0, %v3804
      %v3806 = vpop.f32.mrb[0].mxu0
      %3807 = vmatprep.mubr.bf16.mxu0 0
      %3808 = vmatmul.mubr.bf16.gmra.mrb[0].mxu0 %v3590
      %v3809 = vpop.f32.mrb[0].mxu0
      %v3810 = vadd.f32 0.0, %v3809
      %v3811 = vpop.f32.mrb[0].mxu0
      %v3812 = vpop.f32.mrb[0].mxu0
      %v3813 = vadd.f32 0.0, %v3812
      %v3814 = vpop.f32.mrb[0].mxu0
      %3815 = vdwg.mxu0
      %v3816 = vadd.f32 %v3430, %v3690
      %v3817 = vadd.f32 %v3431, %v3693
      %v3818 = vadd.f32 %v3432, %v3698
      %v3819 = vadd.f32 %v3433, %v3701
      %v3820 = vadd.f32 %v3434, %v3706
      %v3821 = vadd.f32 %v3435, %v3709
      %v3822 = vadd.f32 %v3436, %v3714
      %v3823 = vadd.f32 %v3437, %v3717
      %v3824 = vadd.f32 %v3438, %v3722
      %v3825 = vadd.f32 %v3439, %v3725
      %v3826 = vadd.f32 %v3440, %v3730
      %v3827 = vadd.f32 %v3441, %v3733
      %v3828 = vadd.f32 %v3442, %v3738
      %v3829 = vadd.f32 %v3443, %v3741
      %v3830 = vadd.f32 %v3444, %v3746
      %v3831 = vadd.f32 %v3445, %v3749
      %v3832 = vadd.f32 %v3446, %v3754
      %v3833 = vadd.f32 %v3447, %v3757
      %v3834 = vadd.f32 %v3448, %v3762
      %v3835 = vadd.f32 %v3449, %v3765
      %v3836 = vadd.f32 %v3450, %v3770
      %v3837 = vadd.f32 %v3451, %v3773
      %v3838 = vadd.f32 %v3452, %v3778
      %v3839 = vadd.f32 %v3453, %v3781
      %v3840 = vadd.f32 %v3454, %v3786
      %v3841 = vadd.f32 %v3455, %v3789
      %v3842 = vadd.f32 %v3456, %v3794
      %v3843 = vadd.f32 %v3457, %v3797
      %v3844 = vadd.f32 %v3458, %v3802
      %v3845 = vadd.f32 %v3459, %v3805
      %v3846 = vadd.f32 %v3460, %v3810
      %v3847 = vadd.f32 %v3461, %v3813
      %v3848 = vld [vmem:[%s280] sm:$0xf]
      %v3849 = vld [vmem:[%s280 + $0x4] sm:$0xf]
      %v3850 = vld [vmem:[%s280 + $0x8] sm:$0x1]
      %v3851 = vld [vmem:[%s280 + $0xc] sm:$0xf]
      %v3852 = vld [vmem:[%s280 + $0x10] sm:$0xf]
      %v3853 = vld [vmem:[%s280 + $0x14] sm:$0x1]
      %v3854 = vld [vmem:[%s280 + $0x18] sm:$0xf]
      %v3855 = vld [vmem:[%s280 + $0x1c] sm:$0xf]
      %v3856 = vld [vmem:[%s280 + $0x20] sm:$0x1]
      %v3857 = vld [vmem:[%s280 + $0x24] sm:$0xf]
      %v3858 = vld [vmem:[%s280 + $0x28] sm:$0xf]
      %v3859 = vld [vmem:[%s280 + $0x2c] sm:$0x1]
      %v3860 = vld [vmem:[%s280 + $0x30] sm:$0xf]
      %v3861 = vld [vmem:[%s280 + $0x34] sm:$0xf]
      %v3862 = vld [vmem:[%s280 + $0x38] sm:$0x1]
      %v3863 = vld [vmem:[%s280 + $0x3c] sm:$0xf]
      %v3864 = vld [vmem:[%s280 + $0x40] sm:$0xf]
      %v3865 = vld [vmem:[%s280 + $0x44] sm:$0x1]
      %v3866 = vld [vmem:[%s280 + $0x48] sm:$0xf]
      %v3867 = vld [vmem:[%s280 + $0x4c] sm:$0xf]
      %v3868 = vld [vmem:[%s280 + $0x50] sm:$0x1]
      %v3869 = vld [vmem:[%s280 + $0x54] sm:$0xf]
      %v3870 = vld [vmem:[%s280 + $0x58] sm:$0xf]
      %v3871 = vld [vmem:[%s280 + $0x5c] sm:$0x1]
      %v3872 = vld [vmem:[%s280 + $0x60] sm:$0xf]
      %v3873 = vld [vmem:[%s280 + $0x64] sm:$0xf]
      %v3874 = vld [vmem:[%s280 + $0x68] sm:$0x1]
      %v3875 = vld [vmem:[%s280 + $0x6c] sm:$0xf]
      %v3876 = vld [vmem:[%s280 + $0x70] sm:$0xf]
      %v3877 = vld [vmem:[%s280 + $0x74] sm:$0x1]
      %v3878 = vld [vmem:[%s280 + $0x78] sm:$0xf]
      %v3879 = vld [vmem:[%s280 + $0x7c] sm:$0xf]
      %v3880 = vld [vmem:[%s280 + $0x80] sm:$0x1]
      %v3881 = vld [vmem:[%s280 + $0x84] sm:$0xf]
      %v3882 = vld [vmem:[%s280 + $0x88] sm:$0xf]
      %v3883 = vld [vmem:[%s280 + $0x8c] sm:$0x1]
      %v3884 = vld [vmem:[%s280 + $0x90] sm:$0xf]
      %v3885 = vld [vmem:[%s280 + $0x94] sm:$0xf]
      %v3886 = vld [vmem:[%s280 + $0x98] sm:$0x1]
      %v3887 = vld [vmem:[%s280 + $0x9c] sm:$0xf]
      %v3888 = vld [vmem:[%s280 + $0xa0] sm:$0xf]
      %v3889 = vld [vmem:[%s280 + $0xa4] sm:$0x1]
      %v3890 = vld [vmem:[%s280 + $0xa8] sm:$0xf]
      %v3891 = vld [vmem:[%s280 + $0xac] sm:$0xf]
      %v3892 = vld [vmem:[%s280 + $0xb0] sm:$0x1]
      %v3893 = vld [vmem:[%s280 + $0xb4] sm:$0xf]
      %v3894 = vld [vmem:[%s280 + $0xb8] sm:$0xf]
      %v3895 = vld [vmem:[%s280 + $0xbc] sm:$0x1]
      %v3897 = vshrl.u32 %v3848, 16
      %v3899 = vrot.slane %v3897, 4
      %v3900 = vshll.u32 %v3848, 16
      %v3902 = vrot.slane %v3900, 5
      %v3903 = vor.u32 %v3899, %v3902
      %v3904 = vrot.slane %v3903, 4
      %v3906 = vshll.u32 %v3849, 16
      %v3908 = vrot.slane %v3906, 5
      %v3909 = vsel %vm359, %v3904, %v3908
      %v3910 = vshrl.u32 %v3849, 16
      %v3912 = vrot.slane %v3910, 4
      %v3913 = vor.u32 %v3912, %v3908
      %v3914 = vrot.slane %v3913, 4
      %v3916 = vshll.u32 %v3850, 16
      %v3918 = vrot.slane %v3916, 5
      %v3919 = vsel %vm359, %v3914, %v3918
      %v3921 = vshrl.u32 %v3851, 16
      %v3923 = vrot.slane %v3921, 4
      %v3924 = vshll.u32 %v3851, 16
      %v3926 = vrot.slane %v3924, 5
      %v3927 = vor.u32 %v3923, %v3926
      %v3928 = vrot.slane %v3927, 4
      %v3930 = vshll.u32 %v3852, 16
      %v3932 = vrot.slane %v3930, 5
      %v3933 = vsel %vm359, %v3928, %v3932
      %v3934 = vshrl.u32 %v3852, 16
      %v3936 = vrot.slane %v3934, 4
      %v3937 = vor.u32 %v3936, %v3932
      %v3938 = vrot.slane %v3937, 4
      %v3940 = vshll.u32 %v3853, 16
      %v3942 = vrot.slane %v3940, 5
      %v3943 = vsel %vm359, %v3938, %v3942
      %v3945 = vshrl.u32 %v3854, 16
      %v3947 = vrot.slane %v3945, 4
      %v3948 = vshll.u32 %v3854, 16
      %v3950 = vrot.slane %v3948, 5
      %v3951 = vor.u32 %v3947, %v3950
      %v3952 = vrot.slane %v3951, 4
      %v3954 = vshll.u32 %v3855, 16
      %v3956 = vrot.slane %v3954, 5
      %v3957 = vsel %vm359, %v3952, %v3956
      %v3958 = vshrl.u32 %v3855, 16
      %v3960 = vrot.slane %v3958, 4
      %v3961 = vor.u32 %v3960, %v3956
      %v3962 = vrot.slane %v3961, 4
      %v3964 = vshll.u32 %v3856, 16
      %v3966 = vrot.slane %v3964, 5
      %v3967 = vsel %vm359, %v3962, %v3966
      %v3969 = vshrl.u32 %v3857, 16
      %v3971 = vrot.slane %v3969, 4
      %v3972 = vshll.u32 %v3857, 16
      %v3974 = vrot.slane %v3972, 5
      %v3975 = vor.u32 %v3971, %v3974
      %v3976 = vrot.slane %v3975, 4
      %v3978 = vshll.u32 %v3858, 16
      %v3980 = vrot.slane %v3978, 5
      %v3981 = vsel %vm359, %v3976, %v3980
      %v3982 = vshrl.u32 %v3858, 16
      %v3984 = vrot.slane %v3982, 4
      %v3985 = vor.u32 %v3984, %v3980
      %v3986 = vrot.slane %v3985, 4
      %v3988 = vshll.u32 %v3859, 16
      %v3990 = vrot.slane %v3988, 5
      %v3991 = vsel %vm359, %v3986, %v3990
      %v3993 = vshrl.u32 %v3860, 16
      %v3995 = vrot.slane %v3993, 4
      %v3996 = vshll.u32 %v3860, 16
      %v3998 = vrot.slane %v3996, 5
      %v3999 = vor.u32 %v3995, %v3998
      %v4000 = vrot.slane %v3999, 4
      %v4002 = vshll.u32 %v3861, 16
      %v4004 = vrot.slane %v4002, 5
      %v4005 = vsel %vm359, %v4000, %v4004
      %v4006 = vshrl.u32 %v3861, 16
      %v4008 = vrot.slane %v4006, 4
      %v4009 = vor.u32 %v4008, %v4004
      %v4010 = vrot.slane %v4009, 4
      %v4012 = vshll.u32 %v3862, 16
      %v4014 = vrot.slane %v4012, 5
      %v4015 = vsel %vm359, %v4010, %v4014
      %v4017 = vshrl.u32 %v3863, 16
      %v4019 = vrot.slane %v4017, 4
      %v4020 = vshll.u32 %v3863, 16
      %v4022 = vrot.slane %v4020, 5
      %v4023 = vor.u32 %v4019, %v4022
      %v4024 = vrot.slane %v4023, 4
      %v4026 = vshll.u32 %v3864, 16
      %v4028 = vrot.slane %v4026, 5
      %v4029 = vsel %vm359, %v4024, %v4028
      %v4030 = vshrl.u32 %v3864, 16
      %v4032 = vrot.slane %v4030, 4
      %v4033 = vor.u32 %v4032, %v4028
      %v4034 = vrot.slane %v4033, 4
      %v4036 = vshll.u32 %v3865, 16
      %v4038 = vrot.slane %v4036, 5
      %v4039 = vsel %vm359, %v4034, %v4038
      %v4041 = vshrl.u32 %v3866, 16
      %v4043 = vrot.slane %v4041, 4
      %v4044 = vshll.u32 %v3866, 16
      %v4046 = vrot.slane %v4044, 5
      %v4047 = vor.u32 %v4043, %v4046
      %v4048 = vrot.slane %v4047, 4
      %v4050 = vshll.u32 %v3867, 16
      %v4052 = vrot.slane %v4050, 5
      %v4053 = vsel %vm359, %v4048, %v4052
      %v4054 = vshrl.u32 %v3867, 16
      %v4056 = vrot.slane %v4054, 4
      %v4057 = vor.u32 %v4056, %v4052
      %v4058 = vrot.slane %v4057, 4
      %v4060 = vshll.u32 %v3868, 16
      %v4062 = vrot.slane %v4060, 5
      %v4063 = vsel %vm359, %v4058, %v4062
      %v4065 = vshrl.u32 %v3869, 16
      %v4067 = vrot.slane %v4065, 4
      %v4068 = vshll.u32 %v3869, 16
      %v4070 = vrot.slane %v4068, 5
      %v4071 = vor.u32 %v4067, %v4070
      %v4072 = vrot.slane %v4071, 4
      %v4074 = vshll.u32 %v3870, 16
      %v4076 = vrot.slane %v4074, 5
      %v4077 = vsel %vm359, %v4072, %v4076
      %v4078 = vshrl.u32 %v3870, 16
      %v4080 = vrot.slane %v4078, 4
      %v4081 = vor.u32 %v4080, %v4076
      %v4082 = vrot.slane %v4081, 4
      %v4084 = vshll.u32 %v3871, 16
      %v4086 = vrot.slane %v4084, 5
      %v4087 = vsel %vm359, %v4082, %v4086
      %v4089 = vshrl.u32 %v3872, 16
      %v4091 = vrot.slane %v4089, 4
      %v4092 = vshll.u32 %v3872, 16
      %v4094 = vrot.slane %v4092, 5
      %v4095 = vor.u32 %v4091, %v4094
      %v4096 = vrot.slane %v4095, 4
      %v4098 = vshll.u32 %v3873, 16
      %v4100 = vrot.slane %v4098, 5
      %v4101 = vsel %vm359, %v4096, %v4100
      %v4102 = vshrl.u32 %v3873, 16
      %v4104 = vrot.slane %v4102, 4
      %v4105 = vor.u32 %v4104, %v4100
      %v4106 = vrot.slane %v4105, 4
      %v4108 = vshll.u32 %v3874, 16
      %v4110 = vrot.slane %v4108, 5
      %v4111 = vsel %vm359, %v4106, %v4110
      %v4113 = vshrl.u32 %v3875, 16
      %v4115 = vrot.slane %v4113, 4
      %v4116 = vshll.u32 %v3875, 16
      %v4118 = vrot.slane %v4116, 5
      %v4119 = vor.u32 %v4115, %v4118
      %v4120 = vrot.slane %v4119, 4
      %v4122 = vshll.u32 %v3876, 16
      %v4124 = vrot.slane %v4122, 5
      %v4125 = vsel %vm359, %v4120, %v4124
      %v4126 = vshrl.u32 %v3876, 16
      %v4128 = vrot.slane %v4126, 4
      %v4129 = vor.u32 %v4128, %v4124
      %v4130 = vrot.slane %v4129, 4
      %v4132 = vshll.u32 %v3877, 16
      %v4134 = vrot.slane %v4132, 5
      %v4135 = vsel %vm359, %v4130, %v4134
      %v4137 = vshrl.u32 %v3878, 16
      %v4139 = vrot.slane %v4137, 4
      %v4140 = vshll.u32 %v3878, 16
      %v4142 = vrot.slane %v4140, 5
      %v4143 = vor.u32 %v4139, %v4142
      %v4144 = vrot.slane %v4143, 4
      %v4146 = vshll.u32 %v3879, 16
      %v4148 = vrot.slane %v4146, 5
      %v4149 = vsel %vm359, %v4144, %v4148
      %v4150 = vshrl.u32 %v3879, 16
      %v4152 = vrot.slane %v4150, 4
      %v4153 = vor.u32 %v4152, %v4148
      %v4154 = vrot.slane %v4153, 4
      %v4156 = vshll.u32 %v3880, 16
      %v4158 = vrot.slane %v4156, 5
      %v4159 = vsel %vm359, %v4154, %v4158
      %v4161 = vshrl.u32 %v3881, 16
      %v4163 = vrot.slane %v4161, 4
      %v4164 = vshll.u32 %v3881, 16
      %v4166 = vrot.slane %v4164, 5
      %v4167 = vor.u32 %v4163, %v4166
      %v4168 = vrot.slane %v4167, 4
      %v4170 = vshll.u32 %v3882, 16
      %v4172 = vrot.slane %v4170, 5
      %v4173 = vsel %vm359, %v4168, %v4172
      %v4174 = vshrl.u32 %v3882, 16
      %v4176 = vrot.slane %v4174, 4
      %v4177 = vor.u32 %v4176, %v4172
      %v4178 = vrot.slane %v4177, 4
      %v4180 = vshll.u32 %v3883, 16
      %v4182 = vrot.slane %v4180, 5
      %v4183 = vsel %vm359, %v4178, %v4182
      %v4185 = vshrl.u32 %v3884, 16
      %v4187 = vrot.slane %v4185, 4
      %v4188 = vshll.u32 %v3884, 16
      %v4190 = vrot.slane %v4188, 5
      %v4191 = vor.u32 %v4187, %v4190
      %v4192 = vrot.slane %v4191, 4
      %v4194 = vshll.u32 %v3885, 16
      %v4196 = vrot.slane %v4194, 5
      %v4197 = vsel %vm359, %v4192, %v4196
      %v4198 = vshrl.u32 %v3885, 16
      %v4200 = vrot.slane %v4198, 4
      %v4201 = vor.u32 %v4200, %v4196
      %v4202 = vrot.slane %v4201, 4
      %v4204 = vshll.u32 %v3886, 16
      %v4206 = vrot.slane %v4204, 5
      %v4207 = vsel %vm359, %v4202, %v4206
      %v4209 = vshrl.u32 %v3887, 16
      %v4211 = vrot.slane %v4209, 4
      %v4212 = vshll.u32 %v3887, 16
      %v4214 = vrot.slane %v4212, 5
      %v4215 = vor.u32 %v4211, %v4214
      %v4216 = vrot.slane %v4215, 4
      %v4218 = vshll.u32 %v3888, 16
      %v4220 = vrot.slane %v4218, 5
      %v4221 = vsel %vm359, %v4216, %v4220
      %v4222 = vshrl.u32 %v3888, 16
      %v4224 = vrot.slane %v4222, 4
      %v4225 = vor.u32 %v4224, %v4220
      %v4226 = vrot.slane %v4225, 4
      %v4228 = vshll.u32 %v3889, 16
      %v4230 = vrot.slane %v4228, 5
      %v4231 = vsel %vm359, %v4226, %v4230
      %v4233 = vshrl.u32 %v3890, 16
      %v4235 = vrot.slane %v4233, 4
      %v4236 = vshll.u32 %v3890, 16
      %v4238 = vrot.slane %v4236, 5
      %v4239 = vor.u32 %v4235, %v4238
      %v4240 = vrot.slane %v4239, 4
      %v4242 = vshll.u32 %v3891, 16
      %v4244 = vrot.slane %v4242, 5
      %v4245 = vsel %vm359, %v4240, %v4244
      %v4246 = vshrl.u32 %v3891, 16
      %v4248 = vrot.slane %v4246, 4
      %v4249 = vor.u32 %v4248, %v4244
      %v4250 = vrot.slane %v4249, 4
      %v4252 = vshll.u32 %v3892, 16
      %v4254 = vrot.slane %v4252, 5
      %v4255 = vsel %vm359, %v4250, %v4254
      %v4257 = vshrl.u32 %v3893, 16
      %v4259 = vrot.slane %v4257, 4
      %v4260 = vshll.u32 %v3893, 16
      %v4262 = vrot.slane %v4260, 5
      %v4263 = vor.u32 %v4259, %v4262
      %v4264 = vrot.slane %v4263, 4
      %v4266 = vshll.u32 %v3894, 16
      %v4268 = vrot.slane %v4266, 5
      %v4269 = vsel %vm359, %v4264, %v4268
      %v4270 = vshrl.u32 %v3894, 16
      %v4272 = vrot.slane %v4270, 4
      %v4273 = vor.u32 %v4272, %v4268
      %v4274 = vrot.slane %v4273, 4
      %v4276 = vshll.u32 %v3895, 16
      %v4278 = vrot.slane %v4276, 5
      %v4279 = vsel %vm359, %v4274, %v4278
      %s4280 = scalar_lea.vmem %s3, 448
      %v4281 = vld [vmem:[%s4280] sm:$0xf]
      %v4282 = vld [vmem:[%s4280 + $0x4] sm:$0xf]
      %v4283 = vld [vmem:[%s4280 + $0x8] sm:$0xf]
      %v4284 = vld [vmem:[%s4280 + $0xc] sm:$0xf]
      %v4285 = vld [vmem:[%s4280 + $0x10] sm:$0xf]
      %v4286 = vld [vmem:[%s4280 + $0x14] sm:$0xf]
      %v4287 = vld [vmem:[%s4280 + $0x18] sm:$0xf]
      %v4288 = vld [vmem:[%s4280 + $0x1c] sm:$0xf]
      %v4289 = vld [vmem:[%s4280 + $0x20] sm:$0xf]
      %v4290 = vld [vmem:[%s4280 + $0x24] sm:$0xf]
      %v4291 = vld [vmem:[%s4280 + $0x28] sm:$0xf]
      %v4292 = vld [vmem:[%s4280 + $0x2c] sm:$0xf]
      %v4293 = vld [vmem:[%s4280 + $0x30] sm:$0xf]
      %v4294 = vld [vmem:[%s4280 + $0x34] sm:$0xf]
      %v4295 = vld [vmem:[%s4280 + $0x38] sm:$0xf]
      %v4296 = vld [vmem:[%s4280 + $0x3c] sm:$0xf]
      %v4297 = vunpack.c.l.b16 %v3909
      %v4298 = vunpack.c.l.b16 %v3919
      %v4299 = vunpack.c.l.b16 %v3933
      %v4300 = vunpack.c.l.b16 %v3943
      %v4301 = vunpack.c.l.b16 %v3957
      %v4302 = vunpack.c.l.b16 %v3967
      %v4303 = vunpack.c.l.b16 %v3981
      %v4304 = vunpack.c.l.b16 %v3991
      %v4305 = vunpack.c.l.b16 %v4005
      %v4306 = vunpack.c.l.b16 %v4015
      %v4307 = vunpack.c.l.b16 %v4029
      %v4308 = vunpack.c.l.b16 %v4039
      %v4309 = vunpack.c.l.b16 %v4053
      %v4310 = vunpack.c.l.b16 %v4063
      %v4311 = vunpack.c.l.b16 %v4077
      %v4312 = vunpack.c.l.b16 %v4087
      %v4313 = vunpack.c.l.b16 %v4101
      %v4314 = vunpack.c.l.b16 %v4111
      %v4315 = vunpack.c.l.b16 %v4125
      %v4316 = vunpack.c.l.b16 %v4135
      %v4317 = vunpack.c.l.b16 %v4149
      %v4318 = vunpack.c.l.b16 %v4159
      %v4319 = vunpack.c.l.b16 %v4173
      %v4320 = vunpack.c.l.b16 %v4183
      %v4321 = vunpack.c.l.b16 %v4197
      %v4322 = vunpack.c.l.b16 %v4207
      %v4323 = vunpack.c.l.b16 %v4221
      %v4324 = vunpack.c.l.b16 %v4231
      %v4325 = vunpack.c.l.b16 %v4245
      %v4326 = vunpack.c.l.b16 %v4255
      %v4327 = vunpack.c.l.b16 %v4269
      %v4328 = vunpack.c.l.b16 %v4279
      %v4329 = vpack.c.b16 %v4298, %v4297
      %v4330 = vpack.c.b16 %v4300, %v4299
      %v4331 = vpack.c.b16 %v4302, %v4301
      %v4332 = vpack.c.b16 %v4304, %v4303
      %v4333 = vpack.c.b16 %v4306, %v4305
      %v4334 = vpack.c.b16 %v4308, %v4307
      %v4335 = vpack.c.b16 %v4310, %v4309
      %v4336 = vpack.c.b16 %v4312, %v4311
      %v4337 = vpack.c.b16 %v4314, %v4313
      %v4338 = vpack.c.b16 %v4316, %v4315
      %v4339 = vpack.c.b16 %v4318, %v4317
      %v4340 = vpack.c.b16 %v4320, %v4319
      %v4341 = vpack.c.b16 %v4322, %v4321
      %v4342 = vpack.c.b16 %v4324, %v4323
      %v4343 = vpack.c.b16 %v4326, %v4325
      %v4344 = vpack.c.b16 %v4328, %v4327
      %v4377 = vunpack.c.l.b16 %v4281
      %v4378 = vunpack.c.l.b16 %v4282
      %v4379 = vunpack.c.l.b16 %v4283
      %v4380 = vunpack.c.l.b16 %v4284
      %v4381 = vunpack.c.l.b16 %v4285
      %v4382 = vunpack.c.l.b16 %v4286
      %v4383 = vunpack.c.l.b16 %v4287
      %v4384 = vunpack.c.l.b16 %v4288
      %v4385 = vunpack.c.l.b16 %v4289
      %v4386 = vunpack.c.l.b16 %v4290
      %v4387 = vunpack.c.l.b16 %v4291
      %v4388 = vunpack.c.l.b16 %v4292
      %v4389 = vunpack.c.l.b16 %v4293
      %v4390 = vunpack.c.l.b16 %v4294
      %v4391 = vunpack.c.l.b16 %v4295
      %v4392 = vunpack.c.l.b16 %v4296
      %v4393 = vpack.c.b16 %v4378, %v4377
      %v4394 = vpack.c.b16 %v4380, %v4379
      %v4395 = vpack.c.b16 %v4382, %v4381
      %v4396 = vpack.c.b16 %v4384, %v4383
      %v4397 = vpack.c.b16 %v4386, %v4385
      %v4398 = vpack.c.b16 %v4388, %v4387
      %v4399 = vpack.c.b16 %v4390, %v4389
      %v4400 = vpack.c.b16 %v4392, %v4391
      %4409 = vmatprep.subr.bf16.mxu0 0
      %4410 = vmatpush1.bf16.msra.mxu0 %v4393
      %4411 = vmatprep.subr.bf16.mxu0 0
      %4412 = vmatpush1.bf16.msra.mxu0 %v4394
      %4413 = vmatprep.subr.bf16.mxu0 0
      %4414 = vmatpush1.bf16.msra.mxu0 %v4395
      %4415 = vmatprep.subr.bf16.mxu0 0
      %4416 = vmatpush1.bf16.msra.mxu0 %v4396
      %4417 = vmatprep.subr.bf16.mxu0 0
      %4418 = vmatpush1.bf16.msra.mxu0 %v4397
      %4419 = vmatprep.subr.bf16.mxu0 0
      %4420 = vmatpush1.bf16.msra.mxu0 %v4398
      %4421 = vmatprep.subr.bf16.mxu0 0
      %4422 = vmatpush1.bf16.msra.mxu0 %v4399
      %4423 = vmatprep.subr.bf16.mxu0 0
      %4424 = vmatpush1.bf16.msra.mxu0 %v4400
      %4425 = vmatprep.subr.bf16.mxu0 0
      %4426 = vmatpush1.bf16.msra.mxu0 0
      %4427 = vmatprep.subr.bf16.mxu0 0
      %4428 = vmatpush1.bf16.msra.mxu0 0
      %4429 = vmatprep.subr.bf16.mxu0 0
      %4430 = vmatpush1.bf16.msra.mxu0 0
      %4431 = vmatprep.subr.bf16.mxu0 0
      %4432 = vmatpush1.bf16.msra.mxu0 0
      %4433 = vmatprep.subr.bf16.mxu0 0
      %4434 = vmatpush1.bf16.msra.mxu0 0
      %4435 = vmatprep.subr.bf16.mxu0 0
      %4436 = vmatpush1.bf16.msra.mxu0 0
      %4437 = vmatprep.subr.bf16.mxu0 0
      %4438 = vmatpush1.bf16.msra.mxu0 0
      %4439 = vmatprep.subr.bf16.mxu0 0
      %4440 = vmatpush1.bf16.msra.mxu0 0
      %4441 = vmatprep.mubr.bf16.mxu0 0
      %4442 = vmatmul.mubr.bf16.gmra.mrb[0].mxu0 %v4329
      %v4443 = vpop.f32.mrb[0].mxu0
      %v4444 = vadd.f32 0.0, %v4443
      %v4445 = vpop.f32.mrb[0].mxu0
      %v4446 = vpop.f32.mrb[0].mxu0
      %v4447 = vadd.f32 0.0, %v4446
      %v4448 = vpop.f32.mrb[0].mxu0
      %4449 = vmatprep.mubr.bf16.mxu0 0
      %4450 = vmatmul.mubr.bf16.gmra.mrb[0].mxu0 %v4330
      %v4451 = vpop.f32.mrb[0].mxu0
      %v4452 = vadd.f32 0.0, %v4451
      %v4453 = vpop.f32.mrb[0].mxu0
      %v4454 = vpop.f32.mrb[0].mxu0
      %v4455 = vadd.f32 0.0, %v4454
      %v4456 = vpop.f32.mrb[0].mxu0
      %4457 = vmatprep.mubr.bf16.mxu0 0
      %4458 = vmatmul.mubr.bf16.gmra.mrb[0].mxu0 %v4331
      %v4459 = vpop.f32.mrb[0].mxu0
      %v4460 = vadd.f32 0.0, %v4459
      %v4461 = vpop.f32.mrb[0].mxu0
      %v4462 = vpop.f32.mrb[0].mxu0
      %v4463 = vadd.f32 0.0, %v4462
      %v4464 = vpop.f32.mrb[0].mxu0
      %4465 = vmatprep.mubr.bf16.mxu0 0
      %4466 = vmatmul.mubr.bf16.gmra.mrb[0].mxu0 %v4332
      %v4467 = vpop.f32.mrb[0].mxu0
      %v4468 = vadd.f32 0.0, %v4467
      %v4469 = vpop.f32.mrb[0].mxu0
      %v4470 = vpop.f32.mrb[0].mxu0
      %v4471 = vadd.f32 0.0, %v4470
      %v4472 = vpop.f32.mrb[0].mxu0
      %4473 = vmatprep.mubr.bf16.mxu0 0
      %4474 = vmatmul.mubr.bf16.gmra.mrb[0].mxu0 %v4333
      %v4475 = vpop.f32.mrb[0].mxu0
      %v4476 = vadd.f32 0.0, %v4475
      %v4477 = vpop.f32.mrb[0].mxu0
      %v4478 = vpop.f32.mrb[0].mxu0
      %v4479 = vadd.f32 0.0, %v4478
      %v4480 = vpop.f32.mrb[0].mxu0
      %4481 = vmatprep.mubr.bf16.mxu0 0
      %4482 = vmatmul.mubr.bf16.gmra.mrb[0].mxu0 %v4334
      %v4483 = vpop.f32.mrb[0].mxu0
      %v4484 = vadd.f32 0.0, %v4483
      %v4485 = vpop.f32.mrb[0].mxu0
      %v4486 = vpop.f32.mrb[0].mxu0
      %v4487 = vadd.f32 0.0, %v4486
      %v4488 = vpop.f32.mrb[0].mxu0
      %4489 = vmatprep.mubr.bf16.mxu0 0
      %4490 = vmatmul.mubr.bf16.gmra.mrb[0].mxu0 %v4335
      %v4491 = vpop.f32.mrb[0].mxu0
      %v4492 = vadd.f32 0.0, %v4491
      %v4493 = vpop.f32.mrb[0].mxu0
      %v4494 = vpop.f32.mrb[0].mxu0
      %v4495 = vadd.f32 0.0, %v4494
      %v4496 = vpop.f32.mrb[0].mxu0
      %4497 = vmatprep.mubr.bf16.mxu0 0
      %4498 = vmatmul.mubr.bf16.gmra.mrb[0].mxu0 %v4336
      %v4499 = vpop.f32.mrb[0].mxu0
      %v4500 = vadd.f32 0.0, %v4499
      %v4501 = vpop.f32.mrb[0].mxu0
      %v4502 = vpop.f32.mrb[0].mxu0
      %v4503 = vadd.f32 0.0, %v4502
      %v4504 = vpop.f32.mrb[0].mxu0
      %4505 = vmatprep.mubr.bf16.mxu0 0
      %4506 = vmatmul.mubr.bf16.gmra.mrb[0].mxu0 %v4337
      %v4507 = vpop.f32.mrb[0].mxu0
      %v4508 = vadd.f32 0.0, %v4507
      %v4509 = vpop.f32.mrb[0].mxu0
      %v4510 = vpop.f32.mrb[0].mxu0
      %v4511 = vadd.f32 0.0, %v4510
      %v4512 = vpop.f32.mrb[0].mxu0
      %4513 = vmatprep.mubr.bf16.mxu0 0
      %4514 = vmatmul.mubr.bf16.gmra.mrb[0].mxu0 %v4338
      %v4515 = vpop.f32.mrb[0].mxu0
      %v4516 = vadd.f32 0.0, %v4515
      %v4517 = vpop.f32.mrb[0].mxu0
      %v4518 = vpop.f32.mrb[0].mxu0
      %v4519 = vadd.f32 0.0, %v4518
      %v4520 = vpop.f32.mrb[0].mxu0
      %4521 = vmatprep.mubr.bf16.mxu0 0
      %4522 = vmatmul.mubr.bf16.gmra.mrb[0].mxu0 %v4339
      %v4523 = vpop.f32.mrb[0].mxu0
      %v4524 = vadd.f32 0.0, %v4523
      %v4525 = vpop.f32.mrb[0].mxu0
      %v4526 = vpop.f32.mrb[0].mxu0
      %v4527 = vadd.f32 0.0, %v4526
      %v4528 = vpop.f32.mrb[0].mxu0
      %4529 = vmatprep.mubr.bf16.mxu0 0
      %4530 = vmatmul.mubr.bf16.gmra.mrb[0].mxu0 %v4340
      %v4531 = vpop.f32.mrb[0].mxu0
      %v4532 = vadd.f32 0.0, %v4531
      %v4533 = vpop.f32.mrb[0].mxu0
      %v4534 = vpop.f32.mrb[0].mxu0
      %v4535 = vadd.f32 0.0, %v4534
      %v4536 = vpop.f32.mrb[0].mxu0
      %4537 = vmatprep.mubr.bf16.mxu0 0
      %4538 = vmatmul.mubr.bf16.gmra.mrb[0].mxu0 %v4341
      %v4539 = vpop.f32.mrb[0].mxu0
      %v4540 = vadd.f32 0.0, %v4539
      %v4541 = vpop.f32.mrb[0].mxu0
      %v4542 = vpop.f32.mrb[0].mxu0
      %v4543 = vadd.f32 0.0, %v4542
      %v4544 = vpop.f32.mrb[0].mxu0
      %4545 = vmatprep.mubr.bf16.mxu0 0
      %4546 = vmatmul.mubr.bf16.gmra.mrb[0].mxu0 %v4342
      %v4547 = vpop.f32.mrb[0].mxu0
      %v4548 = vadd.f32 0.0, %v4547
      %v4549 = vpop.f32.mrb[0].mxu0
      %v4550 = vpop.f32.mrb[0].mxu0
      %v4551 = vadd.f32 0.0, %v4550
      %v4552 = vpop.f32.mrb[0].mxu0
      %4553 = vmatprep.mubr.bf16.mxu0 0
      %4554 = vmatmul.mubr.bf16.gmra.mrb[0].mxu0 %v4343
      %v4555 = vpop.f32.mrb[0].mxu0
      %v4556 = vadd.f32 0.0, %v4555
      %v4557 = vpop.f32.mrb[0].mxu0
      %v4558 = vpop.f32.mrb[0].mxu0
      %v4559 = vadd.f32 0.0, %v4558
      %v4560 = vpop.f32.mrb[0].mxu0
      %4561 = vmatprep.mubr.bf16.mxu0 0
      %4562 = vmatmul.mubr.bf16.gmra.mrb[0].mxu0 %v4344
      %v4563 = vpop.f32.mrb[0].mxu0
      %v4564 = vadd.f32 0.0, %v4563
      %v4565 = vpop.f32.mrb[0].mxu0
      %v4566 = vpop.f32.mrb[0].mxu0
      %v4567 = vadd.f32 0.0, %v4566
      %v4568 = vpop.f32.mrb[0].mxu0
      %4569 = vdwg.mxu0
      %v4570 = vadd.f32 %v3816, %v4444
      %v4571 = vadd.f32 %v3817, %v4447
      %v4572 = vadd.f32 %v3818, %v4452
      %v4573 = vadd.f32 %v3819, %v4455
      %v4574 = vadd.f32 %v3820, %v4460
      %v4575 = vadd.f32 %v3821, %v4463
      %v4576 = vadd.f32 %v3822, %v4468
      %v4577 = vadd.f32 %v3823, %v4471
      %v4578 = vadd.f32 %v3824, %v4476
      %v4579 = vadd.f32 %v3825, %v4479
      %v4580 = vadd.f32 %v3826, %v4484
      %v4581 = vadd.f32 %v3827, %v4487
      %v4582 = vadd.f32 %v3828, %v4492
      %v4583 = vadd.f32 %v3829, %v4495
      %v4584 = vadd.f32 %v3830, %v4500
      %v4585 = vadd.f32 %v3831, %v4503
      %v4586 = vadd.f32 %v3832, %v4508
      %v4587 = vadd.f32 %v3833, %v4511
      %v4588 = vadd.f32 %v3834, %v4516
      %v4589 = vadd.f32 %v3835, %v4519
      %v4590 = vadd.f32 %v3836, %v4524
      %v4591 = vadd.f32 %v3837, %v4527
      %v4592 = vadd.f32 %v3838, %v4532
      %v4593 = vadd.f32 %v3839, %v4535
      %v4594 = vadd.f32 %v3840, %v4540
      %v4595 = vadd.f32 %v3841, %v4543
      %v4596 = vadd.f32 %v3842, %v4548
      %v4597 = vadd.f32 %v3843, %v4551
      %v4598 = vadd.f32 %v3844, %v4556
      %v4599 = vadd.f32 %v3845, %v4559
      %v4600 = vadd.f32 %v3846, %v4564
      %v4601 = vadd.f32 %v3847, %v4567
      %v4602 = vld [vmem:[%s280] sm:$0xe]
      %v4603 = vld [vmem:[%s280 + $0xc] sm:$0xe]
      %v4604 = vld [vmem:[%s280 + $0x18] sm:$0xe]
      %v4605 = vld [vmem:[%s280 + $0x24] sm:$0xe]
      %v4606 = vld [vmem:[%s280 + $0x30] sm:$0xe]
      %v4607 = vld [vmem:[%s280 + $0x3c] sm:$0xe]
      %v4608 = vld [vmem:[%s280 + $0x48] sm:$0xe]
      %v4609 = vld [vmem:[%s280 + $0x54] sm:$0xe]
      %v4610 = vld [vmem:[%s280 + $0x60] sm:$0xe]
      %v4611 = vld [vmem:[%s280 + $0x6c] sm:$0xe]
      %v4612 = vld [vmem:[%s280 + $0x78] sm:$0xe]
      %v4613 = vld [vmem:[%s280 + $0x84] sm:$0xe]
      %v4614 = vld [vmem:[%s280 + $0x90] sm:$0xe]
      %v4615 = vld [vmem:[%s280 + $0x9c] sm:$0xe]
      %v4616 = vld [vmem:[%s280 + $0xa8] sm:$0xe]
      %v4617 = vld [vmem:[%s280 + $0xb4] sm:$0xe]
      %v4666 = vrot.slane %v4602, 5
      %v4667 = vrot.slane %v4666, 4
      %v4668 = vrot.slane %v3849, 5
      %v4669 = vsel %vm1389, %v4667, %v4668
      %v4670 = vrot.slane %v4668, 4
      %v4671 = vrot.slane %v3850, 5
      %v4672 = vsel %vm1389, %v4670, %v4671
      %v4673 = vrot.slane %v4603, 5
      %v4674 = vrot.slane %v4673, 4
      %v4675 = vrot.slane %v3852, 5
      %v4676 = vsel %vm1389, %v4674, %v4675
      %v4677 = vrot.slane %v4675, 4
      %v4678 = vrot.slane %v3853, 5
      %v4679 = vsel %vm1389, %v4677, %v4678
      %v4680 = vrot.slane %v4604, 5
      %v4681 = vrot.slane %v4680, 4
      %v4682 = vrot.slane %v3855, 5
      %v4683 = vsel %vm1389, %v4681, %v4682
      %v4684 = vrot.slane %v4682, 4
      %v4685 = vrot.slane %v3856, 5
      %v4686 = vsel %vm1389, %v4684, %v4685
      %v4687 = vrot.slane %v4605, 5
      %v4688 = vrot.slane %v4687, 4
      %v4689 = vrot.slane %v3858, 5
      %v4690 = vsel %vm1389, %v4688, %v4689
      %v4691 = vrot.slane %v4689, 4
      %v4692 = vrot.slane %v3859, 5
      %v4693 = vsel %vm1389, %v4691, %v4692
      %v4694 = vrot.slane %v4606, 5
      %v4695 = vrot.slane %v4694, 4
      %v4696 = vrot.slane %v3861, 5
      %v4697 = vsel %vm1389, %v4695, %v4696
      %v4698 = vrot.slane %v4696, 4
      %v4699 = vrot.slane %v3862, 5
      %v4700 = vsel %vm1389, %v4698, %v4699
      %v4701 = vrot.slane %v4607, 5
      %v4702 = vrot.slane %v4701, 4
      %v4703 = vrot.slane %v3864, 5
      %v4704 = vsel %vm1389, %v4702, %v4703
      %v4705 = vrot.slane %v4703, 4
      %v4706 = vrot.slane %v3865, 5
      %v4707 = vsel %vm1389, %v4705, %v4706
      %v4708 = vrot.slane %v4608, 5
      %v4709 = vrot.slane %v4708, 4
      %v4710 = vrot.slane %v3867, 5
      %v4711 = vsel %vm1389, %v4709, %v4710
      %v4712 = vrot.slane %v4710, 4
      %v4713 = vrot.slane %v3868, 5
      %v4714 = vsel %vm1389, %v4712, %v4713
      %v4715 = vrot.slane %v4609, 5
      %v4716 = vrot.slane %v4715, 4
      %v4717 = vrot.slane %v3870, 5
      %v4718 = vsel %vm1389, %v4716, %v4717
      %v4719 = vrot.slane %v4717, 4
      %v4720 = vrot.slane %v3871, 5
      %v4721 = vsel %vm1389, %v4719, %v4720
      %v4722 = vrot.slane %v4610, 5
      %v4723 = vrot.slane %v4722, 4
      %v4724 = vrot.slane %v3873, 5
      %v4725 = vsel %vm1389, %v4723, %v4724
      %v4726 = vrot.slane %v4724, 4
      %v4727 = vrot.slane %v3874, 5
      %v4728 = vsel %vm1389, %v4726, %v4727
      %v4729 = vrot.slane %v4611, 5
      %v4730 = vrot.slane %v4729, 4
      %v4731 = vrot.slane %v3876, 5
      %v4732 = vsel %vm1389, %v4730, %v4731
      %v4733 = vrot.slane %v4731, 4
      %v4734 = vrot.slane %v3877, 5
      %v4735 = vsel %vm1389, %v4733, %v4734
      %v4736 = vrot.slane %v4612, 5
      %v4737 = vrot.slane %v4736, 4
      %v4738 = vrot.slane %v3879, 5
      %v4739 = vsel %vm1389, %v4737, %v4738
      %v4740 = vrot.slane %v4738, 4
      %v4741 = vrot.slane %v3880, 5
      %v4742 = vsel %vm1389, %v4740, %v4741
      %v4743 = vrot.slane %v4613, 5
      %v4744 = vrot.slane %v4743, 4
      %v4745 = vrot.slane %v3882, 5
      %v4746 = vsel %vm1389, %v4744, %v4745
      %v4747 = vrot.slane %v4745, 4
      %v4748 = vrot.slane %v3883, 5
      %v4749 = vsel %vm1389, %v4747, %v4748
      %v4750 = vrot.slane %v4614, 5
      %v4751 = vrot.slane %v4750, 4
      %v4752 = vrot.slane %v3885, 5
      %v4753 = vsel %vm1389, %v4751, %v4752
      %v4754 = vrot.slane %v4752, 4
      %v4755 = vrot.slane %v3886, 5
      %v4756 = vsel %vm1389, %v4754, %v4755
      %v4757 = vrot.slane %v4615, 5
      %v4758 = vrot.slane %v4757, 4
      %v4759 = vrot.slane %v3888, 5
      %v4760 = vsel %vm1389, %v4758, %v4759
      %v4761 = vrot.slane %v4759, 4
      %v4762 = vrot.slane %v3889, 5
      %v4763 = vsel %vm1389, %v4761, %v4762
      %v4764 = vrot.slane %v4616, 5
      %v4765 = vrot.slane %v4764, 4
      %v4766 = vrot.slane %v3891, 5
      %v4767 = vsel %vm1389, %v4765, %v4766
      %v4768 = vrot.slane %v4766, 4
      %v4769 = vrot.slane %v3892, 5
      %v4770 = vsel %vm1389, %v4768, %v4769
      %v4771 = vrot.slane %v4617, 5
      %v4772 = vrot.slane %v4771, 4
      %v4773 = vrot.slane %v3894, 5
      %v4774 = vsel %vm1389, %v4772, %v4773
      %v4775 = vrot.slane %v4773, 4
      %v4776 = vrot.slane %v3895, 5
      %v4777 = vsel %vm1389, %v4775, %v4776
      %s4778 = scalar_lea.vmem %s3, 512
      %v4779 = vld [vmem:[%s4778] sm:$0xf]
      %v4780 = vld [vmem:[%s4778 + $0x4] sm:$0xf]
      %v4781 = vld [vmem:[%s4778 + $0x8] sm:$0xf]
      %v4782 = vld [vmem:[%s4778 + $0xc] sm:$0xf]
      %v4783 = vld [vmem:[%s4778 + $0x10] sm:$0xf]
      %v4784 = vld [vmem:[%s4778 + $0x14] sm:$0xf]
      %v4785 = vld [vmem:[%s4778 + $0x18] sm:$0xf]
      %v4786 = vld [vmem:[%s4778 + $0x1c] sm:$0xf]
      %v4787 = vld [vmem:[%s4778 + $0x20] sm:$0xf]
      %v4788 = vld [vmem:[%s4778 + $0x24] sm:$0xf]
      %v4789 = vld [vmem:[%s4778 + $0x28] sm:$0xf]
      %v4790 = vld [vmem:[%s4778 + $0x2c] sm:$0xf]
      %v4791 = vld [vmem:[%s4778 + $0x30] sm:$0xf]
      %v4792 = vld [vmem:[%s4778 + $0x34] sm:$0xf]
      %v4793 = vld [vmem:[%s4778 + $0x38] sm:$0xf]
      %v4794 = vld [vmem:[%s4778 + $0x3c] sm:$0xf]
      %v4795 = vunpack.c.l.b16 %v4669
      %v4796 = vunpack.c.l.b16 %v4672
      %v4797 = vunpack.c.l.b16 %v4676
      %v4798 = vunpack.c.l.b16 %v4679
      %v4799 = vunpack.c.l.b16 %v4683
      %v4800 = vunpack.c.l.b16 %v4686
      %v4801 = vunpack.c.l.b16 %v4690
      %v4802 = vunpack.c.l.b16 %v4693
      %v4803 = vunpack.c.l.b16 %v4697
      %v4804 = vunpack.c.l.b16 %v4700
      %v4805 = vunpack.c.l.b16 %v4704
      %v4806 = vunpack.c.l.b16 %v4707
      %v4807 = vunpack.c.l.b16 %v4711
      %v4808 = vunpack.c.l.b16 %v4714
      %v4809 = vunpack.c.l.b16 %v4718
      %v4810 = vunpack.c.l.b16 %v4721
      %v4811 = vunpack.c.l.b16 %v4725
      %v4812 = vunpack.c.l.b16 %v4728
      %v4813 = vunpack.c.l.b16 %v4732
      %v4814 = vunpack.c.l.b16 %v4735
      %v4815 = vunpack.c.l.b16 %v4739
      %v4816 = vunpack.c.l.b16 %v4742
      %v4817 = vunpack.c.l.b16 %v4746
      %v4818 = vunpack.c.l.b16 %v4749
      %v4819 = vunpack.c.l.b16 %v4753
      %v4820 = vunpack.c.l.b16 %v4756
      %v4821 = vunpack.c.l.b16 %v4760
      %v4822 = vunpack.c.l.b16 %v4763
      %v4823 = vunpack.c.l.b16 %v4767
      %v4824 = vunpack.c.l.b16 %v4770
      %v4825 = vunpack.c.l.b16 %v4774
      %v4826 = vunpack.c.l.b16 %v4777
      %v4827 = vpack.c.b16 %v4796, %v4795
      %v4828 = vpack.c.b16 %v4798, %v4797
      %v4829 = vpack.c.b16 %v4800, %v4799
      %v4830 = vpack.c.b16 %v4802, %v4801
      %v4831 = vpack.c.b16 %v4804, %v4803
      %v4832 = vpack.c.b16 %v4806, %v4805
      %v4833 = vpack.c.b16 %v4808, %v4807
      %v4834 = vpack.c.b16 %v4810, %v4809
      %v4835 = vpack.c.b16 %v4812, %v4811
      %v4836 = vpack.c.b16 %v4814, %v4813
      %v4837 = vpack.c.b16 %v4816, %v4815
      %v4838 = vpack.c.b16 %v4818, %v4817
      %v4839 = vpack.c.b16 %v4820, %v4819
      %v4840 = vpack.c.b16 %v4822, %v4821
      %v4841 = vpack.c.b16 %v4824, %v4823
      %v4842 = vpack.c.b16 %v4826, %v4825
      %v4875 = vunpack.c.l.b16 %v4779
      %v4876 = vunpack.c.l.b16 %v4780
      %v4877 = vunpack.c.l.b16 %v4781
      %v4878 = vunpack.c.l.b16 %v4782
      %v4879 = vunpack.c.l.b16 %v4783
      %v4880 = vunpack.c.l.b16 %v4784
      %v4881 = vunpack.c.l.b16 %v4785
      %v4882 = vunpack.c.l.b16 %v4786
      %v4883 = vunpack.c.l.b16 %v4787
      %v4884 = vunpack.c.l.b16 %v4788
      %v4885 = vunpack.c.l.b16 %v4789
      %v4886 = vunpack.c.l.b16 %v4790
      %v4887 = vunpack.c.l.b16 %v4791
      %v4888 = vunpack.c.l.b16 %v4792
      %v4889 = vunpack.c.l.b16 %v4793
      %v4890 = vunpack.c.l.b16 %v4794
      %v4891 = vpack.c.b16 %v4876, %v4875
      %v4892 = vpack.c.b16 %v4878, %v4877
      %v4893 = vpack.c.b16 %v4880, %v4879
      %v4894 = vpack.c.b16 %v4882, %v4881
      %v4895 = vpack.c.b16 %v4884, %v4883
      %v4896 = vpack.c.b16 %v4886, %v4885
      %v4897 = vpack.c.b16 %v4888, %v4887
      %v4898 = vpack.c.b16 %v4890, %v4889
      %4907 = vmatprep.subr.bf16.mxu0 0
      %4908 = vmatpush1.bf16.msra.mxu0 %v4891
      %4909 = vmatprep.subr.bf16.mxu0 0
      %4910 = vmatpush1.bf16.msra.mxu0 %v4892
      %4911 = vmatprep.subr.bf16.mxu0 0
      %4912 = vmatpush1.bf16.msra.mxu0 %v4893
      %4913 = vmatprep.subr.bf16.mxu0 0
      %4914 = vmatpush1.bf16.msra.mxu0 %v4894
      %4915 = vmatprep.subr.bf16.mxu0 0
      %4916 = vmatpush1.bf16.msra.mxu0 %v4895
      %4917 = vmatprep.subr.bf16.mxu0 0
      %4918 = vmatpush1.bf16.msra.mxu0 %v4896
      %4919 = vmatprep.subr.bf16.mxu0 0
      %4920 = vmatpush1.bf16.msra.mxu0 %v4897
      %4921 = vmatprep.subr.bf16.mxu0 0
      %4922 = vmatpush1.bf16.msra.mxu0 %v4898
      %4923 = vmatprep.subr.bf16.mxu0 0
      %4924 = vmatpush1.bf16.msra.mxu0 0
      %4925 = vmatprep.subr.bf16.mxu0 0
      %4926 = vmatpush1.bf16.msra.mxu0 0
      %4927 = vmatprep.subr.bf16.mxu0 0
      %4928 = vmatpush1.bf16.msra.mxu0 0
      %4929 = vmatprep.subr.bf16.mxu0 0
      %4930 = vmatpush1.bf16.msra.mxu0 0
      %4931 = vmatprep.subr.bf16.mxu0 0
      %4932 = vmatpush1.bf16.msra.mxu0 0
      %4933 = vmatprep.subr.bf16.mxu0 0
      %4934 = vmatpush1.bf16.msra.mxu0 0
      %4935 = vmatprep.subr.bf16.mxu0 0
      %4936 = vmatpush1.bf16.msra.mxu0 0
      %4937 = vmatprep.subr.bf16.mxu0 0
      %4938 = vmatpush1.bf16.msra.mxu0 0
      %4939 = vmatprep.mubr.bf16.mxu0 0
      %4940 = vmatmul.mubr.bf16.gmra.mrb[0].mxu0 %v4827
      %v4941 = vpop.f32.mrb[0].mxu0
      %v4942 = vadd.f32 0.0, %v4941
      %v4943 = vpop.f32.mrb[0].mxu0
      %v4944 = vpop.f32.mrb[0].mxu0
      %v4945 = vadd.f32 0.0, %v4944
      %v4946 = vpop.f32.mrb[0].mxu0
      %4947 = vmatprep.mubr.bf16.mxu0 0
      %4948 = vmatmul.mubr.bf16.gmra.mrb[0].mxu0 %v4828
      %v4949 = vpop.f32.mrb[0].mxu0
      %v4950 = vadd.f32 0.0, %v4949
      %v4951 = vpop.f32.mrb[0].mxu0
      %v4952 = vpop.f32.mrb[0].mxu0
      %v4953 = vadd.f32 0.0, %v4952
      %v4954 = vpop.f32.mrb[0].mxu0
      %4955 = vmatprep.mubr.bf16.mxu0 0
      %4956 = vmatmul.mubr.bf16.gmra.mrb[0].mxu0 %v4829
      %v4957 = vpop.f32.mrb[0].mxu0
      %v4958 = vadd.f32 0.0, %v4957
      %v4959 = vpop.f32.mrb[0].mxu0
      %v4960 = vpop.f32.mrb[0].mxu0
      %v4961 = vadd.f32 0.0, %v4960
      %v4962 = vpop.f32.mrb[0].mxu0
      %4963 = vmatprep.mubr.bf16.mxu0 0
      %4964 = vmatmul.mubr.bf16.gmra.mrb[0].mxu0 %v4830
      %v4965 = vpop.f32.mrb[0].mxu0
      %v4966 = vadd.f32 0.0, %v4965
      %v4967 = vpop.f32.mrb[0].mxu0
      %v4968 = vpop.f32.mrb[0].mxu0
      %v4969 = vadd.f32 0.0, %v4968
      %v4970 = vpop.f32.mrb[0].mxu0
      %4971 = vmatprep.mubr.bf16.mxu0 0
      %4972 = vmatmul.mubr.bf16.gmra.mrb[0].mxu0 %v4831
      %v4973 = vpop.f32.mrb[0].mxu0
      %v4974 = vadd.f32 0.0, %v4973
      %v4975 = vpop.f32.mrb[0].mxu0
      %v4976 = vpop.f32.mrb[0].mxu0
      %v4977 = vadd.f32 0.0, %v4976
      %v4978 = vpop.f32.mrb[0].mxu0
      %4979 = vmatprep.mubr.bf16.mxu0 0
      %4980 = vmatmul.mubr.bf16.gmra.mrb[0].mxu0 %v4832
      %v4981 = vpop.f32.mrb[0].mxu0
      %v4982 = vadd.f32 0.0, %v4981
      %v4983 = vpop.f32.mrb[0].mxu0
      %v4984 = vpop.f32.mrb[0].mxu0
      %v4985 = vadd.f32 0.0, %v4984
      %v4986 = vpop.f32.mrb[0].mxu0
      %4987 = vmatprep.mubr.bf16.mxu0 0
      %4988 = vmatmul.mubr.bf16.gmra.mrb[0].mxu0 %v4833
      %v4989 = vpop.f32.mrb[0].mxu0
      %v4990 = vadd.f32 0.0, %v4989
      %v4991 = vpop.f32.mrb[0].mxu0
      %v4992 = vpop.f32.mrb[0].mxu0
      %v4993 = vadd.f32 0.0, %v4992
      %v4994 = vpop.f32.mrb[0].mxu0
      %4995 = vmatprep.mubr.bf16.mxu0 0
      %4996 = vmatmul.mubr.bf16.gmra.mrb[0].mxu0 %v4834
      %v4997 = vpop.f32.mrb[0].mxu0
      %v4998 = vadd.f32 0.0, %v4997
      %v4999 = vpop.f32.mrb[0].mxu0
      %v5000 = vpop.f32.mrb[0].mxu0
      %v5001 = vadd.f32 0.0, %v5000
      %v5002 = vpop.f32.mrb[0].mxu0
      %5003 = vmatprep.mubr.bf16.mxu0 0
      %5004 = vmatmul.mubr.bf16.gmra.mrb[0].mxu0 %v4835
      %v5005 = vpop.f32.mrb[0].mxu0
      %v5006 = vadd.f32 0.0, %v5005
      %v5007 = vpop.f32.mrb[0].mxu0
      %v5008 = vpop.f32.mrb[0].mxu0
      %v5009 = vadd.f32 0.0, %v5008
      %v5010 = vpop.f32.mrb[0].mxu0
      %5011 = vmatprep.mubr.bf16.mxu0 0
      %5012 = vmatmul.mubr.bf16.gmra.mrb[0].mxu0 %v4836
      %v5013 = vpop.f32.mrb[0].mxu0
      %v5014 = vadd.f32 0.0, %v5013
      %v5015 = vpop.f32.mrb[0].mxu0
      %v5016 = vpop.f32.mrb[0].mxu0
      %v5017 = vadd.f32 0.0, %v5016
      %v5018 = vpop.f32.mrb[0].mxu0
      %5019 = vmatprep.mubr.bf16.mxu0 0
      %5020 = vmatmul.mubr.bf16.gmra.mrb[0].mxu0 %v4837
      %v5021 = vpop.f32.mrb[0].mxu0
      %v5022 = vadd.f32 0.0, %v5021
      %v5023 = vpop.f32.mrb[0].mxu0
      %v5024 = vpop.f32.mrb[0].mxu0
      %v5025 = vadd.f32 0.0, %v5024
      %v5026 = vpop.f32.mrb[0].mxu0
      %5027 = vmatprep.mubr.bf16.mxu0 0
      %5028 = vmatmul.mubr.bf16.gmra.mrb[0].mxu0 %v4838
      %v5029 = vpop.f32.mrb[0].mxu0
      %v5030 = vadd.f32 0.0, %v5029
      %v5031 = vpop.f32.mrb[0].mxu0
      %v5032 = vpop.f32.mrb[0].mxu0
      %v5033 = vadd.f32 0.0, %v5032
      %v5034 = vpop.f32.mrb[0].mxu0
      %5035 = vmatprep.mubr.bf16.mxu0 0
      %5036 = vmatmul.mubr.bf16.gmra.mrb[0].mxu0 %v4839
      %v5037 = vpop.f32.mrb[0].mxu0
      %v5038 = vadd.f32 0.0, %v5037
      %v5039 = vpop.f32.mrb[0].mxu0
      %v5040 = vpop.f32.mrb[0].mxu0
      %v5041 = vadd.f32 0.0, %v5040
      %v5042 = vpop.f32.mrb[0].mxu0
      %5043 = vmatprep.mubr.bf16.mxu0 0
      %5044 = vmatmul.mubr.bf16.gmra.mrb[0].mxu0 %v4840
      %v5045 = vpop.f32.mrb[0].mxu0
      %v5046 = vadd.f32 0.0, %v5045
      %v5047 = vpop.f32.mrb[0].mxu0
      %v5048 = vpop.f32.mrb[0].mxu0
      %v5049 = vadd.f32 0.0, %v5048
      %v5050 = vpop.f32.mrb[0].mxu0
      %5051 = vmatprep.mubr.bf16.mxu0 0
      %5052 = vmatmul.mubr.bf16.gmra.mrb[0].mxu0 %v4841
      %v5053 = vpop.f32.mrb[0].mxu0
      %v5054 = vadd.f32 0.0, %v5053
      %v5055 = vpop.f32.mrb[0].mxu0
      %v5056 = vpop.f32.mrb[0].mxu0
      %v5057 = vadd.f32 0.0, %v5056
      %v5058 = vpop.f32.mrb[0].mxu0
      %5059 = vmatprep.mubr.bf16.mxu0 0
      %5060 = vmatmul.mubr.bf16.gmra.mrb[0].mxu0 %v4842
      %v5061 = vpop.f32.mrb[0].mxu0
      %v5062 = vadd.f32 0.0, %v5061
      %v5063 = vpop.f32.mrb[0].mxu0
      %v5064 = vpop.f32.mrb[0].mxu0
      %v5065 = vadd.f32 0.0, %v5064
      %v5066 = vpop.f32.mrb[0].mxu0
      %5067 = vdwg.mxu0
      %v5068 = vadd.f32 %v4570, %v4942
      %v5069 = vadd.f32 %v4571, %v4945
      %v5070 = vadd.f32 %v4572, %v4950
      %v5071 = vadd.f32 %v4573, %v4953
      %v5072 = vadd.f32 %v4574, %v4958
      %v5073 = vadd.f32 %v4575, %v4961
      %v5074 = vadd.f32 %v4576, %v4966
      %v5075 = vadd.f32 %v4577, %v4969
      %v5076 = vadd.f32 %v4578, %v4974
      %v5077 = vadd.f32 %v4579, %v4977
      %v5078 = vadd.f32 %v4580, %v4982
      %v5079 = vadd.f32 %v4581, %v4985
      %v5080 = vadd.f32 %v4582, %v4990
      %v5081 = vadd.f32 %v4583, %v4993
      %v5082 = vadd.f32 %v4584, %v4998
      %v5083 = vadd.f32 %v4585, %v5001
      %v5084 = vadd.f32 %v4586, %v5006
      %v5085 = vadd.f32 %v4587, %v5009
      %v5086 = vadd.f32 %v4588, %v5014
      %v5087 = vadd.f32 %v4589, %v5017
      %v5088 = vadd.f32 %v4590, %v5022
      %v5089 = vadd.f32 %v4591, %v5025
      %v5090 = vadd.f32 %v4592, %v5030
      %v5091 = vadd.f32 %v4593, %v5033
      %v5092 = vadd.f32 %v4594, %v5038
      %v5093 = vadd.f32 %v4595, %v5041
      %v5094 = vadd.f32 %v4596, %v5046
      %v5095 = vadd.f32 %v4597, %v5049
      %v5096 = vadd.f32 %v4598, %v5054
      %v5097 = vadd.f32 %v4599, %v5057
      %v5098 = vadd.f32 %v4600, %v5062
      %v5099 = vadd.f32 %v4601, %v5065
      %v5100 = vpack.c.bf16 %v5069, %v5068
      %v5101 = vpack.c.bf16 %v5071, %v5070
      %v5102 = vpack.c.bf16 %v5073, %v5072
      %v5103 = vpack.c.bf16 %v5075, %v5074
      %v5104 = vpack.c.bf16 %v5077, %v5076
      %v5105 = vpack.c.bf16 %v5079, %v5078
      %v5106 = vpack.c.bf16 %v5081, %v5080
      %v5107 = vpack.c.bf16 %v5083, %v5082
      %v5108 = vpack.c.bf16 %v5085, %v5084
      %v5109 = vpack.c.bf16 %v5087, %v5086
      %v5110 = vpack.c.bf16 %v5089, %v5088
      %v5111 = vpack.c.bf16 %v5091, %v5090
      %v5112 = vpack.c.bf16 %v5093, %v5092
      %v5113 = vpack.c.bf16 %v5095, %v5094
      %v5114 = vpack.c.bf16 %v5097, %v5096
      %v5115 = vpack.c.bf16 %v5099, %v5098
      %v5132 = vunpack.c.l.b16 %v5100
      %v5133 = vunpack.c.h.b16 %v5100
      %v5134 = vunpack.c.l.b16 %v5101
      %v5135 = vunpack.c.h.b16 %v5101
      %v5136 = vunpack.c.l.b16 %v5102
      %v5137 = vunpack.c.h.b16 %v5102
      %v5138 = vunpack.c.l.b16 %v5103
      %v5139 = vunpack.c.h.b16 %v5103
      %v5140 = vunpack.c.l.b16 %v5104
      %v5141 = vunpack.c.h.b16 %v5104
      %v5142 = vunpack.c.l.b16 %v5105
      %v5143 = vunpack.c.h.b16 %v5105
      %v5144 = vunpack.c.l.b16 %v5106
      %v5145 = vunpack.c.h.b16 %v5106
      %v5146 = vunpack.c.l.b16 %v5107
      %v5147 = vunpack.c.h.b16 %v5107
      %v5148 = vunpack.c.l.b16 %v5108
      %v5149 = vunpack.c.h.b16 %v5108
      %v5150 = vunpack.c.l.b16 %v5109
      %v5151 = vunpack.c.h.b16 %v5109
      %v5152 = vunpack.c.l.b16 %v5110
      %v5153 = vunpack.c.h.b16 %v5110
      %v5154 = vunpack.c.l.b16 %v5111
      %v5155 = vunpack.c.h.b16 %v5111
      %v5156 = vunpack.c.l.b16 %v5112
      %v5157 = vunpack.c.h.b16 %v5112
      %v5158 = vunpack.c.l.b16 %v5113
      %v5159 = vunpack.c.h.b16 %v5113
      %v5160 = vunpack.c.l.b16 %v5114
      %v5161 = vunpack.c.h.b16 %v5114
      %v5162 = vunpack.c.l.b16 %v5115
      %v5163 = vunpack.c.h.b16 %v5115
      %v5164 = vpack.c.b16 %v5132, %v5132
      %v5165 = vpack.c.b16 %v5133, %v5133
      %v5166 = vpack.c.b16 %v5134, %v5134
      %v5167 = vpack.c.b16 %v5135, %v5135
      %v5168 = vpack.c.b16 %v5136, %v5136
      %v5169 = vpack.c.b16 %v5137, %v5137
      %v5170 = vpack.c.b16 %v5138, %v5138
      %v5171 = vpack.c.b16 %v5139, %v5139
      %v5172 = vpack.c.b16 %v5140, %v5140
      %v5173 = vpack.c.b16 %v5141, %v5141
      %v5174 = vpack.c.b16 %v5142, %v5142
      %v5175 = vpack.c.b16 %v5143, %v5143
      %v5176 = vpack.c.b16 %v5144, %v5144
      %v5177 = vpack.c.b16 %v5145, %v5145
      %v5178 = vpack.c.b16 %v5146, %v5146
      %v5179 = vpack.c.b16 %v5147, %v5147
      %v5180 = vpack.c.b16 %v5148, %v5148
      %v5181 = vpack.c.b16 %v5149, %v5149
      %v5182 = vpack.c.b16 %v5150, %v5150
      %v5183 = vpack.c.b16 %v5151, %v5151
      %v5184 = vpack.c.b16 %v5152, %v5152
      %v5185 = vpack.c.b16 %v5153, %v5153
      %v5186 = vpack.c.b16 %v5154, %v5154
      %v5187 = vpack.c.b16 %v5155, %v5155
      %v5188 = vpack.c.b16 %v5156, %v5156
      %v5189 = vpack.c.b16 %v5157, %v5157
      %v5190 = vpack.c.b16 %v5158, %v5158
      %v5191 = vpack.c.b16 %v5159, %v5159
      %v5192 = vpack.c.b16 %v5160, %v5160
      %v5193 = vpack.c.b16 %v5161, %v5161
      %v5194 = vpack.c.b16 %v5162, %v5162
      %v5195 = vpack.c.b16 %v5163, %v5163
      %5228 = vst [vmem:[%s286] sm:$0xf] %v5164
      %5229 = vst [vmem:[%s286 + $0x4] sm:$0xf] %v5165
      %5230 = vst [vmem:[%s286 + $0x8] sm:$0xf] %v5166
      %5231 = vst [vmem:[%s286 + $0xc] sm:$0xf] %v5167
      %5232 = vst [vmem:[%s286 + $0x10] sm:$0xf] %v5168
      %5233 = vst [vmem:[%s286 + $0x14] sm:$0xf] %v5169
      %5234 = vst [vmem:[%s286 + $0x18] sm:$0xf] %v5170
      %5235 = vst [vmem:[%s286 + $0x1c] sm:$0xf] %v5171
      %5236 = vst [vmem:[%s286 + $0x20] sm:$0xf] %v5172
      %5237 = vst [vmem:[%s286 + $0x24] sm:$0xf] %v5173
      %5238 = vst [vmem:[%s286 + $0x28] sm:$0xf] %v5174
      %5239 = vst [vmem:[%s286 + $0x2c] sm:$0xf] %v5175
      %5240 = vst [vmem:[%s286 + $0x30] sm:$0xf] %v5176
      %5241 = vst [vmem:[%s286 + $0x34] sm:$0xf] %v5177
      %5242 = vst [vmem:[%s286 + $0x38] sm:$0xf] %v5178
      %5243 = vst [vmem:[%s286 + $0x3c] sm:$0xf] %v5179
      %5244 = vst [vmem:[%s286 + $0x40] sm:$0xf] %v5180
      %5245 = vst [vmem:[%s286 + $0x44] sm:$0xf] %v5181
      %5246 = vst [vmem:[%s286 + $0x48] sm:$0xf] %v5182
      %5247 = vst [vmem:[%s286 + $0x4c] sm:$0xf] %v5183
      %5248 = vst [vmem:[%s286 + $0x50] sm:$0xf] %v5184
      %5249 = vst [vmem:[%s286 + $0x54] sm:$0xf] %v5185
      %5250 = vst [vmem:[%s286 + $0x58] sm:$0xf] %v5186
      %5251 = vst [vmem:[%s286 + $0x5c] sm:$0xf] %v5187
      %5252 = vst [vmem:[%s286 + $0x60] sm:$0xf] %v5188
      %5253 = vst [vmem:[%s286 + $0x64] sm:$0xf] %v5189
      %5254 = vst [vmem:[%s286 + $0x68] sm:$0xf] %v5190
      %5255 = vst [vmem:[%s286 + $0x6c] sm:$0xf] %v5191
      %5256 = vst [vmem:[%s286 + $0x70] sm:$0xf] %v5192
      %5257 = vst [vmem:[%s286 + $0x74] sm:$0xf] %v5193
      %5258 = vst [vmem:[%s286 + $0x78] sm:$0xf] %v5194
      %5259 = vst [vmem:[%s286 + $0x7c] sm:$0xf] %v5195
      %v5260 = vadd.f32 %v5068, %v5069
      %v5261 = vadd.f32 %v5260, %v5070
      %v5262 = vadd.f32 %v5261, %v5071
      %v5263 = vadd.f32 %v5262, %v5072
      %v5264 = vadd.f32 %v5263, %v5073
      %v5265 = vadd.f32 %v5264, %v5074
      %v5266 = vadd.f32 %v5265, %v5075
      %v5267 = vadd.f32 %v5266, %v5076
      %v5268 = vadd.f32 %v5267, %v5077
      %v5269 = vadd.f32 %v5268, %v5078
      %v5270 = vadd.f32 %v5269, %v5079
      %v5271 = vadd.f32 %v5270, %v5080
      %v5272 = vadd.f32 %v5271, %v5081
      %v5273 = vadd.f32 %v5272, %v5082
      %v5274 = vadd.f32 %v5273, %v5083
      %v5275 = vadd.f32 %v5274, %v5084
      %v5276 = vadd.f32 %v5275, %v5085
      %v5277 = vadd.f32 %v5276, %v5086
      %v5278 = vadd.f32 %v5277, %v5087
      %v5279 = vadd.f32 %v5278, %v5088
      %v5280 = vadd.f32 %v5279, %v5089
      %v5281 = vadd.f32 %v5280, %v5090
      %v5282 = vadd.f32 %v5281, %v5091
      %v5283 = vadd.f32 %v5282, %v5092
      %v5284 = vadd.f32 %v5283, %v5093
      %v5285 = vadd.f32 %v5284, %v5094
      %v5286 = vadd.f32 %v5285, %v5095
      %v5287 = vadd.f32 %v5286, %v5096
      %v5288 = vadd.f32 %v5287, %v5097
      %v5289 = vadd.f32 %v5288, %v5098
      %v5290 = vadd.f32 %v5289, %v5099
      %v5291 = vrot.slane %v5290, 4
      %v5292 = vadd.f32 %v5290, %v5291
      %v5293 = vrot.slane %v5292, 2
      %v5294 = vadd.f32 %v5292, %v5293
      %v5295 = vrot.slane %v5294, 1
      %v5296 = vadd.f32 %v5294, %v5295
      %5297 = vst [vmem:[%s291] sm:$0x1] %v5296
      %v5298 = vmul.f32 %v5068, %v5068
      %v5299 = vmul.f32 %v5069, %v5069
      %v5300 = vmul.f32 %v5070, %v5070
      %v5301 = vmul.f32 %v5071, %v5071
      %v5302 = vmul.f32 %v5072, %v5072
      %v5303 = vmul.f32 %v5073, %v5073
      %v5304 = vmul.f32 %v5074, %v5074
      %v5305 = vmul.f32 %v5075, %v5075
      %v5306 = vmul.f32 %v5076, %v5076
      %v5307 = vmul.f32 %v5077, %v5077
      %v5308 = vmul.f32 %v5078, %v5078
      %v5309 = vmul.f32 %v5079, %v5079
      %v5310 = vmul.f32 %v5080, %v5080
      %v5311 = vmul.f32 %v5081, %v5081
      %v5312 = vmul.f32 %v5082, %v5082
      %v5313 = vmul.f32 %v5083, %v5083
      %v5314 = vmul.f32 %v5084, %v5084
      %v5315 = vmul.f32 %v5085, %v5085
      %v5316 = vmul.f32 %v5086, %v5086
      %v5317 = vmul.f32 %v5087, %v5087
      %v5318 = vmul.f32 %v5088, %v5088
      %v5319 = vmul.f32 %v5089, %v5089
      %v5320 = vmul.f32 %v5090, %v5090
      %v5321 = vmul.f32 %v5091, %v5091
      %v5322 = vmul.f32 %v5092, %v5092
      %v5323 = vmul.f32 %v5093, %v5093
      %v5324 = vmul.f32 %v5094, %v5094
      %v5325 = vmul.f32 %v5095, %v5095
      %v5326 = vmul.f32 %v5096, %v5096
      %v5327 = vmul.f32 %v5097, %v5097
      %v5328 = vmul.f32 %v5098, %v5098
      %v5329 = vmul.f32 %v5099, %v5099
      %v5330 = vadd.f32 %v5298, %v5299
      %v5331 = vadd.f32 %v5330, %v5300
      %v5332 = vadd.f32 %v5331, %v5301
      %v5333 = vadd.f32 %v5332, %v5302
      %v5334 = vadd.f32 %v5333, %v5303
      %v5335 = vadd.f32 %v5334, %v5304
      %v5336 = vadd.f32 %v5335, %v5305
      %v5337 = vadd.f32 %v5336, %v5306
      %v5338 = vadd.f32 %v5337, %v5307
      %v5339 = vadd.f32 %v5338, %v5308
      %v5340 = vadd.f32 %v5339, %v5309
      %v5341 = vadd.f32 %v5340, %v5310
      %v5342 = vadd.f32 %v5341, %v5311
      %v5343 = vadd.f32 %v5342, %v5312
      %v5344 = vadd.f32 %v5343, %v5313
      %v5345 = vadd.f32 %v5344, %v5314
      %v5346 = vadd.f32 %v5345, %v5315
      %v5347 = vadd.f32 %v5346, %v5316
      %v5348 = vadd.f32 %v5347, %v5317
      %v5349 = vadd.f32 %v5348, %v5318
      %v5350 = vadd.f32 %v5349, %v5319
      %v5351 = vadd.f32 %v5350, %v5320
      %v5352 = vadd.f32 %v5351, %v5321
      %v5353 = vadd.f32 %v5352, %v5322
      %v5354 = vadd.f32 %v5353, %v5323
      %v5355 = vadd.f32 %v5354, %v5324
      %v5356 = vadd.f32 %v5355, %v5325
      %v5357 = vadd.f32 %v5356, %v5326
      %v5358 = vadd.f32 %v5357, %v5327
      %v5359 = vadd.f32 %v5358, %v5328
      %v5360 = vadd.f32 %v5359, %v5329
      %v5361 = vrot.slane %v5360, 4
      %v5362 = vadd.f32 %v5360, %v5361
      %v5363 = vrot.slane %v5362, 2
      %v5364 = vadd.f32 %v5362, %v5363
      %v5365 = vrot.slane %v5364, 1
      %v5366 = vadd.f32 %v5364, %v5365
      %5367 = vst [vmem:[%s291 + $0x1] sm:$0x1] %v5366
      %s5368 = smul.u32 32, %s17
      %p5369 = scmp.lt.s32.totalorder %s5368, 63
      %s5370 = scalar_select %p5369, %s5368, 63
      %s5371 = smul.addr %s5370, 4
      %s5372 = scalar_lea.vmem %s4, %s5371
      %p5373 = scmp.lt.s32.totalorder %s17, 1
      %s5374 = scalar_select %p5373, %s17, 1
      %s5375 = smul.addr %s5374, 2
      %s5376 = scalar_lea.vmem %s5, %s5375
      // Predicated region
      $region37: #{up_forward.4} parent=35 // pred_check
        %p5377 = pneg %p134
      $region38: #{up_forward.4} parent=35 // pred_check_branch
        %5379 = sbr.rel (%p5377) target = $region40
      $region39: #{up_forward.4} parent=35 // pred_region
        %s5380 = smul.u32 32, %s17
      $region40: #{up_forward.4} parent=35 // pred_fallthru
        _
      // Predicated region
      $region41: #{up_forward.4} parent=35 // pred_check
        %p5381 = pneg %p160
      $region42: #{up_forward.4} parent=35 // pred_check_branch
        %5383 = sbr.rel (%p5381) target = $region44
      $region43: #{up_forward.4} parent=35 // pred_region
        _
      $region44: #{up_forward.4} parent=35 // pred_fallthru
        _
    $region36: #{up_forward.4} parent=5 // pred_fallthru
      _
    %p5384 = scmp.le.s32.totalorder 2, %s12
    // Predicated region
    $region45: #{up_forward.4} parent=5 // pred_check
      %p5385 = pneg %p5384
    $region46: #{up_forward.4} parent=5 // pred_check_branch
      %5387 = sbr.rel (%p5385) target = $region48
    $region47: #{up_forward.4} parent=5 // pred_region
      %s5388 = ssub.s32 %s12, 2
      // Predicated region
      $region49: #{up_forward.4} parent=47 // pred_check
        %p5389 = pneg %p140
      $region50: #{up_forward.4} parent=47 // pred_check_branch
        %5391 = sbr.rel (%p5389) target = $region52
      $region51: #{up_forward.4} parent=47 // pred_region
        %s5392 = smul.u32 32, %s18
        %p5393 = scmp.lt.s32.totalorder %s5392, 63
        %s5394 = scalar_select %p5393, %s5392, 63
        %s5395 = smul.addr %s5394, 4
        %s5396 = scalar_lea.vmem %s4, %s5395
      $region52: #{up_forward.4} parent=47 // pred_fallthru
        _
      // Predicated region
      $region53: #{up_forward.4} parent=47 // pred_check
        %p5397 = pneg %p166
      $region54: #{up_forward.4} parent=47 // pred_check_branch
        %5399 = sbr.rel (%p5397) target = $region56
      $region55: #{up_forward.4} parent=47 // pred_region
        %p5400 = scmp.lt.s32.totalorder %s18, 1
        %s5401 = scalar_select %p5400, %s18, 1
        %s5402 = smul.addr %s5401, 2
        %s5403 = scalar_lea.vmem %s5, %s5402
      $region56: #{up_forward.4} parent=47 // pred_fallthru
        _
    $region48: #{up_forward.4} parent=5 // pred_fallthru
      _
  $region6: #{up_forward.4} parent=0 // loop_footer
    %s16 = sadd.s32 1, %s12
  $region7: #{up_forward.4} parent=0 // loop_footer_branch
    %11 = sbr.rel target = $region3
  $region8: #{up_forward.4} parent=0 // loop_exit
    _

// kernel: up_forward.5
$region0: #{up_forward.5}
  #allocation0 [shape = 'u32[]', space=smem, size = 0x4, offset = 0x4, fixed_abs, tag = 'smem constant byte address 0x4 - core index']
  #allocation1 [shape = 'u32[144,128]{1,0:T(1,128)}', space=vmem, size = 0x12000, scoped, tag = 'internal scratch']
  %s0 = inlined_call_operand.vmem [shape: bf16[512,128], index: 0, kind: input, shape index: {}, may-alias: {0,3}]
  %s1 = inlined_call_operand.vmem [shape: f32[1,128], index: 1, kind: input, shape index: {}]
  %s2 = inlined_call_operand.vmem [shape: f32[1,128], index: 2, kind: input, shape index: {}]
  %s3 = inlined_call_operand.vmem [shape: bf16[512,128], index: 3, kind: output, shape index: {}, may-alias: {0,3}]
  %s4 = sld [smem:[#allocation0]]
  $region45: #{up_forward.5} parent=0
    _
  %s6 = ssub.s32 1, %s4
  %s7 = scalar_select 0, %s6, %s4
  loop: start=0, step=1, limit=4
  $region2: #{up_forward.5} parent=0 // loop_pre_header
    _
  $region3: #{up_forward.5} parent=0 // loop_header
    %s9 = sphi 0, %s13
    %p10 = scmp.ge.s32.totalorder %s9, 4
    %s19 = sphi 0, %s21
    %s22 = sphi 0, %s19
    %s23 = sphi 0, %s22
    %s39 = sphi 0, %s23
    %s43 = sphi 0, %s43
    %s45 = sphi 0, %s43
    %s46 = sphi 0, %s45
    %s60 = sphi 0, %s46
    %s64 = sphi 0, %s64
    %s66 = sphi 0, %s64
    %s67 = sphi 0, %s66
    %s81 = sphi 0, %s67
    %s87 = sphi 0, %s89
    %s90 = sphi 0, %s87
    %s91 = sphi 0, %s90
    %s107 = sphi 0, %s91
  $region4: #{up_forward.5} parent=0 // loop_header_branch
    %12 = sbr.rel (%p10) target = $region8
  $region5: #{up_forward.5} parent=0 // loop_body
    %s14 = ssub.s32 %s9, 1
    %s15 = ssub.s32 %s9, 2
    %s16 = sadd.s32 %s9, 1
    %s17 = ssub.s32 %s9, %s16
    %p18 = scmp.eq.s32.totalorder %s17, 0
    %s20 = sadd.s32 %s19, 1
    %s21 = scalar_select %p18, %s19, %s20
    %p24 = pneg %p18
    %p25 = scmp.eq.s32.totalorder %s9, 1
    %p26 = por %p24, %p25
    %p27 = scmp.ne.s32.totalorder %s19, %s22
    %p28 = scmp.eq.s32.totalorder %s9, 0
    %p29 = por %p27, %p28
    %p30 = scmp.ne.s32.totalorder %s19, %s22
    %p31 = scmp.eq.s32.totalorder %s14, 1
    %p32 = por %p30, %p31
    %p33 = scmp.ne.s32.totalorder %s22, %s23
    %p34 = scmp.eq.s32.totalorder %s14, 0
    %p35 = por %p33, %p34
    %p36 = scmp.ne.s32.totalorder %s22, %s23
    %p37 = scmp.eq.s32.totalorder %s15, 1
    %p38 = por %p36, %p37
    %p40 = scmp.ne.s32.totalorder %s23, %s39
    %p41 = scmp.eq.s32.totalorder %s15, 0
    %p42 = por %p40, %p41
    %s44 = sadd.s32 %s43, 1
    %p47 = scmp.eq.s32.totalorder %s9, 1
    %p48 = scmp.ne.s32.totalorder %s43, %s45
    %p49 = scmp.eq.s32.totalorder %s9, 0
    %p50 = por %p48, %p49
    %p51 = scmp.ne.s32.totalorder %s43, %s45
    %p52 = scmp.eq.s32.totalorder %s14, 1
    %p53 = por %p51, %p52
    %p54 = scmp.ne.s32.totalorder %s45, %s46
    %p55 = scmp.eq.s32.totalorder %s14, 0
    %p56 = por %p54, %p55
    %p57 = scmp.ne.s32.totalorder %s45, %s46
    %p58 = scmp.eq.s32.totalorder %s15, 1
    %p59 = por %p57, %p58
    %p61 = scmp.ne.s32.totalorder %s46, %s60
    %p62 = scmp.eq.s32.totalorder %s15, 0
    %p63 = por %p61, %p62
    %s65 = sadd.s32 %s64, 1
    %p68 = scmp.eq.s32.totalorder %s9, 1
    %p69 = scmp.ne.s32.totalorder %s64, %s66
    %p70 = scmp.eq.s32.totalorder %s9, 0
    %p71 = por %p69, %p70
    %p72 = scmp.ne.s32.totalorder %s64, %s66
    %p73 = scmp.eq.s32.totalorder %s14, 1
    %p74 = por %p72, %p73
    %p75 = scmp.ne.s32.totalorder %s66, %s67
    %p76 = scmp.eq.s32.totalorder %s14, 0
    %p77 = por %p75, %p76
    %p78 = scmp.ne.s32.totalorder %s66, %s67
    %p79 = scmp.eq.s32.totalorder %s15, 1
    %p80 = por %p78, %p79
    %p82 = scmp.ne.s32.totalorder %s67, %s81
    %p83 = scmp.eq.s32.totalorder %s15, 0
    %p84 = por %p82, %p83
    %s85 = ssub.s32 %s9, %s16
    %p86 = scmp.eq.s32.totalorder %s85, 0
    %s88 = sadd.s32 %s87, 1
    %s89 = scalar_select %p86, %s87, %s88
    %p92 = pneg %p86
    %p93 = scmp.eq.s32.totalorder %s9, 1
    %p94 = por %p92, %p93
    %p95 = scmp.ne.s32.totalorder %s87, %s90
    %p96 = scmp.eq.s32.totalorder %s9, 0
    %p97 = por %p95, %p96
    %p98 = scmp.ne.s32.totalorder %s87, %s90
    %p99 = scmp.eq.s32.totalorder %s14, 1
    %p100 = por %p98, %p99
    %p101 = scmp.ne.s32.totalorder %s90, %s91
    %p102 = scmp.eq.s32.totalorder %s14, 0
    %p103 = por %p101, %p102
    %p104 = scmp.ne.s32.totalorder %s90, %s91
    %p105 = scmp.eq.s32.totalorder %s15, 1
    %p106 = por %p104, %p105
    %p108 = scmp.ne.s32.totalorder %s91, %s107
    %p109 = scmp.eq.s32.totalorder %s15, 0
    %p110 = por %p108, %p109
    %p111 = scmp.le.s32.totalorder 1, %s9
    %p112 = scmp.lt.s32.totalorder %s9, 3
    %p113 = pnand %p111, %p112
    %p114 = pneg %p113
    // Predicated region
    $region9: #{up_forward.5} parent=5 // pred_check
      _
    $region10: #{up_forward.5} parent=5 // pred_check_branch
      %116 = sbr.rel (%p113) target = $region12
    $region11: #{up_forward.5} parent=5 // pred_region
      %s117 = ssub.s32 %s9, 1
      // Predicated region
      $region13: #{up_forward.5} parent=11 // pred_check
        %p118 = pneg %p56
      $region14: #{up_forward.5} parent=11 // pred_check_branch
        %120 = sbr.rel (%p118) target = $region16
      $region15: #{up_forward.5} parent=11 // pred_region
        _
      $region16: #{up_forward.5} parent=11 // pred_fallthru
        _
      // Predicated region
      $region17: #{up_forward.5} parent=11 // pred_check
        %p121 = pneg %p77
      $region18: #{up_forward.5} parent=11 // pred_check_branch
        %123 = sbr.rel (%p121) target = $region20
      $region19: #{up_forward.5} parent=11 // pred_region
        _
      $region20: #{up_forward.5} parent=11 // pred_fallthru
        _
    $region12: #{up_forward.5} parent=5 // pred_fallthru
      _
    %p124 = scmp.lt.s32.totalorder %s9, 2
    // Predicated region
    $region21: #{up_forward.5} parent=5 // pred_check
      %p125 = pneg %p124
    $region22: #{up_forward.5} parent=5 // pred_check_branch
      %127 = sbr.rel (%p125) target = $region24
    $region23: #{up_forward.5} parent=5 // pred_region
      // Predicated region
      $region25: #{up_forward.5} parent=23 // pred_check
        %p128 = pneg %p29
      $region26: #{up_forward.5} parent=23 // pred_check_branch
        %130 = sbr.rel (%p128) target = $region28
      $region27: #{up_forward.5} parent=23 // pred_region
        %s131 = smul.u32 32, %s9
        %p132 = scmp.lt.s32.totalorder %s131, 63
        %s133 = scalar_select %p132, %s131, 63
        %s134 = smul.addr %s133, 4
        %s135 = scalar_lea.vmem %s0, %s134
        %s136 = smul.u32 32, %s9
      $region28: #{up_forward.5} parent=23 // pred_fallthru
        _
    $region24: #{up_forward.5} parent=5 // pred_fallthru
      _
    %p137 = scmp.le.s32.totalorder 1, %s9
    %p138 = scmp.lt.s32.totalorder %s9, 3
    %p139 = pnand %p137, %p138
    %p140 = pneg %p139
    // Predicated region
    $region29: #{up_forward.5} parent=5 // pred_check
      _
    $region30: #{up_forward.5} parent=5 // pred_check_branch
      %142 = sbr.rel (%p139) target = $region32
    $region31: #{up_forward.5} parent=5 // pred_region
      %s143 = ssub.s32 %s9, 1
      %s144 = smul.u32 32, %s14
      %p145 = scmp.lt.s32.totalorder %s144, 63
      %s146 = scalar_select %p145, %s144, 63
      %s147 = smul.addr %s146, 4
      %s148 = scalar_lea.vmem %s0, %s147
      %p149 = pneg %p35
      %p150 = pneg %p32
      %p151 = pneg %p56
      %p152 = pneg %p53
      %p153 = pneg %p77
      %p154 = pneg %p74
      %p155 = pneg %p103
      %p156 = pneg %p100
      %s157 = smul.u32 32, %s14
      %p158 = scmp.lt.s32.totalorder %s157, 63
      %s159 = scalar_select %p158, %s157, 63
      %s160 = smul.addr %s159, 4
      %s161 = scalar_lea.vmem %s3, %s160
      %s162 = smul.u32 32, %s14
      %p163 = scmp.lt.s32.totalorder %s162, 63
      %s164 = scalar_select %p163, %s162, 63
      %s165 = smul.addr %s164, 4
      %s166 = scalar_lea.vmem %s0, %s165
      %s167 = smul.u32 32, %s14
      %s168 = smul.u32 32, %s14
      %p169 = scmp.lt.s32.totalorder %s168, 63
      %s170 = scalar_select %p169, %s168, 63
      %s171 = smul.addr %s170, 4
      %s172 = scalar_lea.vmem %s3, %s171
      %s173 = smul.u32 32, %s14
      %v174 = vld [vmem:[%s166] sm:$0xf]
      %v175 = vld [vmem:[%s166 + $0x4] sm:$0xf]
      %v176 = vld [vmem:[%s166 + $0x8] sm:$0xf]
      %v177 = vld [vmem:[%s166 + $0xc] sm:$0xf]
      %v178 = vld [vmem:[%s166 + $0x10] sm:$0xf]
      %v179 = vld [vmem:[%s166 + $0x14] sm:$0xf]
      %v180 = vld [vmem:[%s166 + $0x18] sm:$0xf]
      %v181 = vld [vmem:[%s166 + $0x1c] sm:$0xf]
      %v182 = vld [vmem:[%s166 + $0x20] sm:$0xf]
      %v183 = vld [vmem:[%s166 + $0x24] sm:$0xf]
      %v184 = vld [vmem:[%s166 + $0x28] sm:$0xf]
      %v185 = vld [vmem:[%s166 + $0x2c] sm:$0xf]
      %v186 = vld [vmem:[%s166 + $0x30] sm:$0xf]
      %v187 = vld [vmem:[%s166 + $0x34] sm:$0xf]
      %v188 = vld [vmem:[%s166 + $0x38] sm:$0xf]
      %v189 = vld [vmem:[%s166 + $0x3c] sm:$0xf]
      %v190 = vld [vmem:[%s166 + $0x40] sm:$0xf]
      %v191 = vld [vmem:[%s166 + $0x44] sm:$0xf]
      %v192 = vld [vmem:[%s166 + $0x48] sm:$0xf]
      %v193 = vld [vmem:[%s166 + $0x4c] sm:$0xf]
      %v194 = vld [vmem:[%s166 + $0x50] sm:$0xf]
      %v195 = vld [vmem:[%s166 + $0x54] sm:$0xf]
      %v196 = vld [vmem:[%s166 + $0x58] sm:$0xf]
      %v197 = vld [vmem:[%s166 + $0x5c] sm:$0xf]
      %v198 = vld [vmem:[%s166 + $0x60] sm:$0xf]
      %v199 = vld [vmem:[%s166 + $0x64] sm:$0xf]
      %v200 = vld [vmem:[%s166 + $0x68] sm:$0xf]
      %v201 = vld [vmem:[%s166 + $0x6c] sm:$0xf]
      %v202 = vld [vmem:[%s166 + $0x70] sm:$0xf]
      %v203 = vld [vmem:[%s166 + $0x74] sm:$0xf]
      %v204 = vld [vmem:[%s166 + $0x78] sm:$0xf]
      %v205 = vld [vmem:[%s166 + $0x7c] sm:$0xf]
      %v206 = vunpack.c.l.bf16 %v174
      %v207 = vunpack.c.l.bf16 %v175
      %v208 = vunpack.c.l.bf16 %v176
      %v209 = vunpack.c.l.bf16 %v177
      %v210 = vunpack.c.l.bf16 %v178
      %v211 = vunpack.c.l.bf16 %v179
      %v212 = vunpack.c.l.bf16 %v180
      %v213 = vunpack.c.l.bf16 %v181
      %v214 = vunpack.c.l.bf16 %v182
      %v215 = vunpack.c.l.bf16 %v183
      %v216 = vunpack.c.l.bf16 %v184
      %v217 = vunpack.c.l.bf16 %v185
      %v218 = vunpack.c.l.bf16 %v186
      %v219 = vunpack.c.l.bf16 %v187
      %v220 = vunpack.c.l.bf16 %v188
      %v221 = vunpack.c.l.bf16 %v189
      %v222 = vunpack.c.l.bf16 %v190
      %v223 = vunpack.c.l.bf16 %v191
      %v224 = vunpack.c.l.bf16 %v192
      %v225 = vunpack.c.l.bf16 %v193
      %v226 = vunpack.c.l.bf16 %v194
      %v227 = vunpack.c.l.bf16 %v195
      %v228 = vunpack.c.l.bf16 %v196
      %v229 = vunpack.c.l.bf16 %v197
      %v230 = vunpack.c.l.bf16 %v198
      %v231 = vunpack.c.l.bf16 %v199
      %v232 = vunpack.c.l.bf16 %v200
      %v233 = vunpack.c.l.bf16 %v201
      %v234 = vunpack.c.l.bf16 %v202
      %v235 = vunpack.c.l.bf16 %v203
      %v236 = vunpack.c.l.bf16 %v204
      %v237 = vunpack.c.l.bf16 %v205
      %v238 = vld [vmem:[%s1] sm:$0x1]
      %v240 = vlaneseq
      %v241 = vshrl.u32 %v240, 7
      %v242 = vsub.s32 0, %v241
      %v243 = vrot.slane %v238, %v242
      %v245 = vmul.f32 %v206, %v243
      %v246 = vmul.f32 %v207, %v243
      %v247 = vmul.f32 %v208, %v243
      %v248 = vmul.f32 %v209, %v243
      %v249 = vmul.f32 %v210, %v243
      %v250 = vmul.f32 %v211, %v243
      %v251 = vmul.f32 %v212, %v243
      %v252 = vmul.f32 %v213, %v243
      %v253 = vmul.f32 %v214, %v243
      %v254 = vmul.f32 %v215, %v243
      %v255 = vmul.f32 %v216, %v243
      %v256 = vmul.f32 %v217, %v243
      %v257 = vmul.f32 %v218, %v243
      %v258 = vmul.f32 %v219, %v243
      %v259 = vmul.f32 %v220, %v243
      %v260 = vmul.f32 %v221, %v243
      %v261 = vmul.f32 %v222, %v243
      %v262 = vmul.f32 %v223, %v243
      %v263 = vmul.f32 %v224, %v243
      %v264 = vmul.f32 %v225, %v243
      %v265 = vmul.f32 %v226, %v243
      %v266 = vmul.f32 %v227, %v243
      %v267 = vmul.f32 %v228, %v243
      %v268 = vmul.f32 %v229, %v243
      %v269 = vmul.f32 %v230, %v243
      %v270 = vmul.f32 %v231, %v243
      %v271 = vmul.f32 %v232, %v243
      %v272 = vmul.f32 %v233, %v243
      %v273 = vmul.f32 %v234, %v243
      %v274 = vmul.f32 %v235, %v243
      %v275 = vmul.f32 %v236, %v243
      %v276 = vmul.f32 %v237, %v243
      %v277 = vld [vmem:[%s2] sm:$0x1]
      %v279 = vlaneseq
      %v280 = vshrl.u32 %v279, 7
      %v281 = vsub.s32 0, %v280
      %v282 = vrot.slane %v277, %v281
      %v284 = vadd.f32 %v245, %v282
      %v285 = vadd.f32 %v246, %v282
      %v286 = vadd.f32 %v247, %v282
      %v287 = vadd.f32 %v248, %v282
      %v288 = vadd.f32 %v249, %v282
      %v289 = vadd.f32 %v250, %v282
      %v290 = vadd.f32 %v251, %v282
      %v291 = vadd.f32 %v252, %v282
      %v292 = vadd.f32 %v253, %v282
      %v293 = vadd.f32 %v254, %v282
      %v294 = vadd.f32 %v255, %v282
      %v295 = vadd.f32 %v256, %v282
      %v296 = vadd.f32 %v257, %v282
      %v297 = vadd.f32 %v258, %v282
      %v298 = vadd.f32 %v259, %v282
      %v299 = vadd.f32 %v260, %v282
      %v300 = vadd.f32 %v261, %v282
      %v301 = vadd.f32 %v262, %v282
      %v302 = vadd.f32 %v263, %v282
      %v303 = vadd.f32 %v264, %v282
      %v304 = vadd.f32 %v265, %v282
      %v305 = vadd.f32 %v266, %v282
      %v306 = vadd.f32 %v267, %v282
      %v307 = vadd.f32 %v268, %v282
      %v308 = vadd.f32 %v269, %v282
      %v309 = vadd.f32 %v270, %v282
      %v310 = vadd.f32 %v271, %v282
      %v311 = vadd.f32 %v272, %v282
      %v312 = vadd.f32 %v273, %v282
      %v313 = vadd.f32 %v274, %v282
      %v314 = vadd.f32 %v275, %v282
      %v315 = vadd.f32 %v276, %v282
      %v316 = vmax.f32 %v284, 0.0
      %v317 = vmax.f32 %v285, 0.0
      %v318 = vmax.f32 %v286, 0.0
      %v319 = vmax.f32 %v287, 0.0
      %v320 = vmax.f32 %v288, 0.0
      %v321 = vmax.f32 %v289, 0.0
      %v322 = vmax.f32 %v290, 0.0
      %v323 = vmax.f32 %v291, 0.0
      %v324 = vmax.f32 %v292, 0.0
      %v325 = vmax.f32 %v293, 0.0
      %v326 = vmax.f32 %v294, 0.0
      %v327 = vmax.f32 %v295, 0.0
      %v328 = vmax.f32 %v296, 0.0
      %v329 = vmax.f32 %v297, 0.0
      %v330 = vmax.f32 %v298, 0.0
      %v331 = vmax.f32 %v299, 0.0
      %v332 = vmax.f32 %v300, 0.0
      %v333 = vmax.f32 %v301, 0.0
      %v334 = vmax.f32 %v302, 0.0
      %v335 = vmax.f32 %v303, 0.0
      %v336 = vmax.f32 %v304, 0.0
      %v337 = vmax.f32 %v305, 0.0
      %v338 = vmax.f32 %v306, 0.0
      %v339 = vmax.f32 %v307, 0.0
      %v340 = vmax.f32 %v308, 0.0
      %v341 = vmax.f32 %v309, 0.0
      %v342 = vmax.f32 %v310, 0.0
      %v343 = vmax.f32 %v311, 0.0
      %v344 = vmax.f32 %v312, 0.0
      %v345 = vmax.f32 %v313, 0.0
      %v346 = vmax.f32 %v314, 0.0
      %v347 = vmax.f32 %v315, 0.0
      %v348 = vpack.c.bf16 %v317, %v316
      %v349 = vpack.c.bf16 %v319, %v318
      %v350 = vpack.c.bf16 %v321, %v320
      %v351 = vpack.c.bf16 %v323, %v322
      %v352 = vpack.c.bf16 %v325, %v324
      %v353 = vpack.c.bf16 %v327, %v326
      %v354 = vpack.c.bf16 %v329, %v328
      %v355 = vpack.c.bf16 %v331, %v330
      %v356 = vpack.c.bf16 %v333, %v332
      %v357 = vpack.c.bf16 %v335, %v334
      %v358 = vpack.c.bf16 %v337, %v336
      %v359 = vpack.c.bf16 %v339, %v338
      %v360 = vpack.c.bf16 %v341, %v340
      %v361 = vpack.c.bf16 %v343, %v342
      %v362 = vpack.c.bf16 %v345, %v344
      %v363 = vpack.c.bf16 %v347, %v346
      %v380 = vunpack.c.l.b16 %v348
      %v381 = vunpack.c.h.b16 %v348
      %v382 = vunpack.c.l.b16 %v349
      %v383 = vunpack.c.h.b16 %v349
      %v384 = vunpack.c.l.b16 %v350
      %v385 = vunpack.c.h.b16 %v350
      %v386 = vunpack.c.l.b16 %v351
      %v387 = vunpack.c.h.b16 %v351
      %v388 = vunpack.c.l.b16 %v352
      %v389 = vunpack.c.h.b16 %v352
      %v390 = vunpack.c.l.b16 %v353
      %v391 = vunpack.c.h.b16 %v353
      %v392 = vunpack.c.l.b16 %v354
      %v393 = vunpack.c.h.b16 %v354
      %v394 = vunpack.c.l.b16 %v355
      %v395 = vunpack.c.h.b16 %v355
      %v396 = vunpack.c.l.b16 %v356
      %v397 = vunpack.c.h.b16 %v356
      %v398 = vunpack.c.l.b16 %v357
      %v399 = vunpack.c.h.b16 %v357
      %v400 = vunpack.c.l.b16 %v358
      %v401 = vunpack.c.h.b16 %v358
      %v402 = vunpack.c.l.b16 %v359
      %v403 = vunpack.c.h.b16 %v359
      %v404 = vunpack.c.l.b16 %v360
      %v405 = vunpack.c.h.b16 %v360
      %v406 = vunpack.c.l.b16 %v361
      %v407 = vunpack.c.h.b16 %v361
      %v408 = vunpack.c.l.b16 %v362
      %v409 = vunpack.c.h.b16 %v362
      %v410 = vunpack.c.l.b16 %v363
      %v411 = vunpack.c.h.b16 %v363
      %v412 = vpack.c.b16 %v380, %v380
      %v413 = vpack.c.b16 %v381, %v381
      %v414 = vpack.c.b16 %v382, %v382
      %v415 = vpack.c.b16 %v383, %v383
      %v416 = vpack.c.b16 %v384, %v384
      %v417 = vpack.c.b16 %v385, %v385
      %v418 = vpack.c.b16 %v386, %v386
      %v419 = vpack.c.b16 %v387, %v387
      %v420 = vpack.c.b16 %v388, %v388
      %v421 = vpack.c.b16 %v389, %v389
      %v422 = vpack.c.b16 %v390, %v390
      %v423 = vpack.c.b16 %v391, %v391
      %v424 = vpack.c.b16 %v392, %v392
      %v425 = vpack.c.b16 %v393, %v393
      %v426 = vpack.c.b16 %v394, %v394
      %v427 = vpack.c.b16 %v395, %v395
      %v428 = vpack.c.b16 %v396, %v396
      %v429 = vpack.c.b16 %v397, %v397
      %v430 = vpack.c.b16 %v398, %v398
      %v431 = vpack.c.b16 %v399, %v399
      %v432 = vpack.c.b16 %v400, %v400
      %v433 = vpack.c.b16 %v401, %v401
      %v434 = vpack.c.b16 %v402, %v402
      %v435 = vpack.c.b16 %v403, %v403
      %v436 = vpack.c.b16 %v404, %v404
      %v437 = vpack.c.b16 %v405, %v405
      %v438 = vpack.c.b16 %v406, %v406
      %v439 = vpack.c.b16 %v407, %v407
      %v440 = vpack.c.b16 %v408, %v408
      %v441 = vpack.c.b16 %v409, %v409
      %v442 = vpack.c.b16 %v410, %v410
      %v443 = vpack.c.b16 %v411, %v411
      %476 = vst [vmem:[%s172] sm:$0xf] %v412
      %477 = vst [vmem:[%s172 + $0x4] sm:$0xf] %v413
      %478 = vst [vmem:[%s172 + $0x8] sm:$0xf] %v414
      %479 = vst [vmem:[%s172 + $0xc] sm:$0xf] %v415
      %480 = vst [vmem:[%s172 + $0x10] sm:$0xf] %v416
      %481 = vst [vmem:[%s172 + $0x14] sm:$0xf] %v417
      %482 = vst [vmem:[%s172 + $0x18] sm:$0xf] %v418
      %483 = vst [vmem:[%s172 + $0x1c] sm:$0xf] %v419
      %484 = vst [vmem:[%s172 + $0x20] sm:$0xf] %v420
      %485 = vst [vmem:[%s172 + $0x24] sm:$0xf] %v421
      %486 = vst [vmem:[%s172 + $0x28] sm:$0xf] %v422
      %487 = vst [vmem:[%s172 + $0x2c] sm:$0xf] %v423
      %488 = vst [vmem:[%s172 + $0x30] sm:$0xf] %v424
      %489 = vst [vmem:[%s172 + $0x34] sm:$0xf] %v425
      %490 = vst [vmem:[%s172 + $0x38] sm:$0xf] %v426
      %491 = vst [vmem:[%s172 + $0x3c] sm:$0xf] %v427
      %492 = vst [vmem:[%s172 + $0x40] sm:$0xf] %v428
      %493 = vst [vmem:[%s172 + $0x44] sm:$0xf] %v429
      %494 = vst [vmem:[%s172 + $0x48] sm:$0xf] %v430
      %495 = vst [vmem:[%s172 + $0x4c] sm:$0xf] %v431
      %496 = vst [vmem:[%s172 + $0x50] sm:$0xf] %v432
      %497 = vst [vmem:[%s172 + $0x54] sm:$0xf] %v433
      %498 = vst [vmem:[%s172 + $0x58] sm:$0xf] %v434
      %499 = vst [vmem:[%s172 + $0x5c] sm:$0xf] %v435
      %500 = vst [vmem:[%s172 + $0x60] sm:$0xf] %v436
      %501 = vst [vmem:[%s172 + $0x64] sm:$0xf] %v437
      %502 = vst [vmem:[%s172 + $0x68] sm:$0xf] %v438
      %503 = vst [vmem:[%s172 + $0x6c] sm:$0xf] %v439
      %504 = vst [vmem:[%s172 + $0x70] sm:$0xf] %v440
      %505 = vst [vmem:[%s172 + $0x74] sm:$0xf] %v441
      %506 = vst [vmem:[%s172 + $0x78] sm:$0xf] %v442
      %507 = vst [vmem:[%s172 + $0x7c] sm:$0xf] %v443
      %s508 = smul.u32 32, %s14
      %p509 = scmp.lt.s32.totalorder %s508, 63
      %s510 = scalar_select %p509, %s508, 63
      %s511 = smul.addr %s510, 4
      %s512 = scalar_lea.vmem %s3, %s511
      // Predicated region
      $region33: #{up_forward.5} parent=31 // pred_check
        %p513 = pneg %p100
      $region34: #{up_forward.5} parent=31 // pred_check_branch
        %515 = sbr.rel (%p513) target = $region36
      $region35: #{up_forward.5} parent=31 // pred_region
        %s516 = smul.u32 32, %s14
      $region36: #{up_forward.5} parent=31 // pred_fallthru
        _
    $region32: #{up_forward.5} parent=5 // pred_fallthru
      _
    %p517 = scmp.le.s32.totalorder 2, %s9
    // Predicated region
    $region37: #{up_forward.5} parent=5 // pred_check
      %p518 = pneg %p517
    $region38: #{up_forward.5} parent=5 // pred_check_branch
      %520 = sbr.rel (%p518) target = $region40
    $region39: #{up_forward.5} parent=5 // pred_region
      %s521 = ssub.s32 %s9, 2
      // Predicated region
      $region41: #{up_forward.5} parent=39 // pred_check
        %p522 = pneg %p106
      $region42: #{up_forward.5} parent=39 // pred_check_branch
        %524 = sbr.rel (%p522) target = $region44
      $region43: #{up_forward.5} parent=39 // pred_region
        %s525 = smul.u32 32, %s15
        %p526 = scmp.lt.s32.totalorder %s525, 63
        %s527 = scalar_select %p526, %s525, 63
        %s528 = smul.addr %s527, 4
        %s529 = scalar_lea.vmem %s3, %s528
      $region44: #{up_forward.5} parent=39 // pred_fallthru
        _
    $region40: #{up_forward.5} parent=5 // pred_fallthru
      _
  $region6: #{up_forward.5} parent=0 // loop_footer
    %s13 = sadd.s32 1, %s9
  $region7: #{up_forward.5} parent=0 // loop_footer_branch
    %8 = sbr.rel target = $region3
  $region8: #{up_forward.5} parent=0 // loop_exit
    _

// kernel: up_forward.7
$region0: #{up_forward.7}
  #allocation0 [shape = 'u32[]', space=smem, size = 0x4, offset = 0x4, fixed_abs, tag = 'smem constant byte address 0x4 - core index']
  #allocation1 [shape = 'u32[144,128]{1,0:T(1,128)}', space=vmem, size = 0x12000, scoped, tag = 'internal scratch']
  %s0 = inlined_call_operand.vmem [shape: bf16[512,128], index: 0, kind: input, shape index: {}]
  %s1 = inlined_call_operand.vmem [shape: f32[1,128], index: 1, kind: input, shape index: {}]
  %s2 = inlined_call_operand.vmem [shape: f32[1,128], index: 2, kind: input, shape index: {}]
  %s3 = inlined_call_operand.vmem [shape: f32[512,128], index: 3, kind: output, shape index: {}]
  %s4 = sld [smem:[#allocation0]]
  $region45: #{up_forward.7} parent=0
    _
  %s6 = ssub.s32 1, %s4
  %s7 = scalar_select 0, %s6, %s4
  loop: start=0, step=1, limit=4
  $region2: #{up_forward.7} parent=0 // loop_pre_header
    _
  $region3: #{up_forward.7} parent=0 // loop_header
    %s9 = sphi 0, %s13
    %p10 = scmp.ge.s32.totalorder %s9, 4
    %s19 = sphi 0, %s21
    %s22 = sphi 0, %s19
    %s23 = sphi 0, %s22
    %s39 = sphi 0, %s23
    %s43 = sphi 0, %s43
    %s45 = sphi 0, %s43
    %s46 = sphi 0, %s45
    %s60 = sphi 0, %s46
    %s64 = sphi 0, %s64
    %s66 = sphi 0, %s64
    %s67 = sphi 0, %s66
    %s81 = sphi 0, %s67
    %s87 = sphi 0, %s89
    %s90 = sphi 0, %s87
    %s91 = sphi 0, %s90
    %s107 = sphi 0, %s91
  $region4: #{up_forward.7} parent=0 // loop_header_branch
    %12 = sbr.rel (%p10) target = $region8
  $region5: #{up_forward.7} parent=0 // loop_body
    %s14 = ssub.s32 %s9, 1
    %s15 = ssub.s32 %s9, 2
    %s16 = sadd.s32 %s9, 1
    %s17 = ssub.s32 %s9, %s16
    %p18 = scmp.eq.s32.totalorder %s17, 0
    %s20 = sadd.s32 %s19, 1
    %s21 = scalar_select %p18, %s19, %s20
    %p24 = pneg %p18
    %p25 = scmp.eq.s32.totalorder %s9, 1
    %p26 = por %p24, %p25
    %p27 = scmp.ne.s32.totalorder %s19, %s22
    %p28 = scmp.eq.s32.totalorder %s9, 0
    %p29 = por %p27, %p28
    %p30 = scmp.ne.s32.totalorder %s19, %s22
    %p31 = scmp.eq.s32.totalorder %s14, 1
    %p32 = por %p30, %p31
    %p33 = scmp.ne.s32.totalorder %s22, %s23
    %p34 = scmp.eq.s32.totalorder %s14, 0
    %p35 = por %p33, %p34
    %p36 = scmp.ne.s32.totalorder %s22, %s23
    %p37 = scmp.eq.s32.totalorder %s15, 1
    %p38 = por %p36, %p37
    %p40 = scmp.ne.s32.totalorder %s23, %s39
    %p41 = scmp.eq.s32.totalorder %s15, 0
    %p42 = por %p40, %p41
    %s44 = sadd.s32 %s43, 1
    %p47 = scmp.eq.s32.totalorder %s9, 1
    %p48 = scmp.ne.s32.totalorder %s43, %s45
    %p49 = scmp.eq.s32.totalorder %s9, 0
    %p50 = por %p48, %p49
    %p51 = scmp.ne.s32.totalorder %s43, %s45
    %p52 = scmp.eq.s32.totalorder %s14, 1
    %p53 = por %p51, %p52
    %p54 = scmp.ne.s32.totalorder %s45, %s46
    %p55 = scmp.eq.s32.totalorder %s14, 0
    %p56 = por %p54, %p55
    %p57 = scmp.ne.s32.totalorder %s45, %s46
    %p58 = scmp.eq.s32.totalorder %s15, 1
    %p59 = por %p57, %p58
    %p61 = scmp.ne.s32.totalorder %s46, %s60
    %p62 = scmp.eq.s32.totalorder %s15, 0
    %p63 = por %p61, %p62
    %s65 = sadd.s32 %s64, 1
    %p68 = scmp.eq.s32.totalorder %s9, 1
    %p69 = scmp.ne.s32.totalorder %s64, %s66
    %p70 = scmp.eq.s32.totalorder %s9, 0
    %p71 = por %p69, %p70
    %p72 = scmp.ne.s32.totalorder %s64, %s66
    %p73 = scmp.eq.s32.totalorder %s14, 1
    %p74 = por %p72, %p73
    %p75 = scmp.ne.s32.totalorder %s66, %s67
    %p76 = scmp.eq.s32.totalorder %s14, 0
    %p77 = por %p75, %p76
    %p78 = scmp.ne.s32.totalorder %s66, %s67
    %p79 = scmp.eq.s32.totalorder %s15, 1
    %p80 = por %p78, %p79
    %p82 = scmp.ne.s32.totalorder %s67, %s81
    %p83 = scmp.eq.s32.totalorder %s15, 0
    %p84 = por %p82, %p83
    %s85 = ssub.s32 %s9, %s16
    %p86 = scmp.eq.s32.totalorder %s85, 0
    %s88 = sadd.s32 %s87, 1
    %s89 = scalar_select %p86, %s87, %s88
    %p92 = pneg %p86
    %p93 = scmp.eq.s32.totalorder %s9, 1
    %p94 = por %p92, %p93
    %p95 = scmp.ne.s32.totalorder %s87, %s90
    %p96 = scmp.eq.s32.totalorder %s9, 0
    %p97 = por %p95, %p96
    %p98 = scmp.ne.s32.totalorder %s87, %s90
    %p99 = scmp.eq.s32.totalorder %s14, 1
    %p100 = por %p98, %p99
    %p101 = scmp.ne.s32.totalorder %s90, %s91
    %p102 = scmp.eq.s32.totalorder %s14, 0
    %p103 = por %p101, %p102
    %p104 = scmp.ne.s32.totalorder %s90, %s91
    %p105 = scmp.eq.s32.totalorder %s15, 1
    %p106 = por %p104, %p105
    %p108 = scmp.ne.s32.totalorder %s91, %s107
    %p109 = scmp.eq.s32.totalorder %s15, 0
    %p110 = por %p108, %p109
    %p111 = scmp.le.s32.totalorder 1, %s9
    %p112 = scmp.lt.s32.totalorder %s9, 3
    %p113 = pnand %p111, %p112
    %p114 = pneg %p113
    // Predicated region
    $region9: #{up_forward.7} parent=5 // pred_check
      _
    $region10: #{up_forward.7} parent=5 // pred_check_branch
      %116 = sbr.rel (%p113) target = $region12
    $region11: #{up_forward.7} parent=5 // pred_region
      %s117 = ssub.s32 %s9, 1
      // Predicated region
      $region13: #{up_forward.7} parent=11 // pred_check
        %p118 = pneg %p56
      $region14: #{up_forward.7} parent=11 // pred_check_branch
        %120 = sbr.rel (%p118) target = $region16
      $region15: #{up_forward.7} parent=11 // pred_region
        _
      $region16: #{up_forward.7} parent=11 // pred_fallthru
        _
      // Predicated region
      $region17: #{up_forward.7} parent=11 // pred_check
        %p121 = pneg %p77
      $region18: #{up_forward.7} parent=11 // pred_check_branch
        %123 = sbr.rel (%p121) target = $region20
      $region19: #{up_forward.7} parent=11 // pred_region
        _
      $region20: #{up_forward.7} parent=11 // pred_fallthru
        _
    $region12: #{up_forward.7} parent=5 // pred_fallthru
      _
    %p124 = scmp.lt.s32.totalorder %s9, 2
    // Predicated region
    $region21: #{up_forward.7} parent=5 // pred_check
      %p125 = pneg %p124
    $region22: #{up_forward.7} parent=5 // pred_check_branch
      %127 = sbr.rel (%p125) target = $region24
    $region23: #{up_forward.7} parent=5 // pred_region
      // Predicated region
      $region25: #{up_forward.7} parent=23 // pred_check
        %p128 = pneg %p29
      $region26: #{up_forward.7} parent=23 // pred_check_branch
        %130 = sbr.rel (%p128) target = $region28
      $region27: #{up_forward.7} parent=23 // pred_region
        %s131 = smul.u32 32, %s9
        %p132 = scmp.lt.s32.totalorder %s131, 63
        %s133 = scalar_select %p132, %s131, 63
        %s134 = smul.addr %s133, 4
        %s135 = scalar_lea.vmem %s0, %s134
        %s136 = smul.u32 32, %s9
      $region28: #{up_forward.7} parent=23 // pred_fallthru
        _
    $region24: #{up_forward.7} parent=5 // pred_fallthru
      _
    %p137 = scmp.le.s32.totalorder 1, %s9
    %p138 = scmp.lt.s32.totalorder %s9, 3
    %p139 = pnand %p137, %p138
    %p140 = pneg %p139
    // Predicated region
    $region29: #{up_forward.7} parent=5 // pred_check
      _
    $region30: #{up_forward.7} parent=5 // pred_check_branch
      %142 = sbr.rel (%p139) target = $region32
    $region31: #{up_forward.7} parent=5 // pred_region
      %s143 = ssub.s32 %s9, 1
      %s144 = smul.u32 32, %s14
      %p145 = scmp.lt.s32.totalorder %s144, 63
      %s146 = scalar_select %p145, %s144, 63
      %s147 = smul.addr %s146, 4
      %s148 = scalar_lea.vmem %s0, %s147
      %p149 = pneg %p35
      %p150 = pneg %p32
      %p151 = pneg %p56
      %p152 = pneg %p53
      %p153 = pneg %p77
      %p154 = pneg %p74
      %p155 = pneg %p103
      %p156 = pneg %p100
      %s157 = smul.u32 32, %s14
      %p158 = scmp.lt.s32.totalorder %s157, 63
      %s159 = scalar_select %p158, %s157, 63
      %s160 = smul.addr %s159, 8
      %s161 = scalar_lea.vmem %s3, %s160
      %s162 = smul.u32 32, %s14
      %p163 = scmp.lt.s32.totalorder %s162, 63
      %s164 = scalar_select %p163, %s162, 63
      %s165 = smul.addr %s164, 4
      %s166 = scalar_lea.vmem %s0, %s165
      %s167 = smul.u32 32, %s14
      %s168 = smul.u32 32, %s14
      %p169 = scmp.lt.s32.totalorder %s168, 63
      %s170 = scalar_select %p169, %s168, 63
      %s171 = smul.addr %s170, 8
      %s172 = scalar_lea.vmem %s3, %s171
      %s173 = smul.u32 32, %s14
      %v174 = vld [vmem:[%s166] sm:$0xf]
      %v175 = vld [vmem:[%s166 + $0x4] sm:$0xf]
      %v176 = vld [vmem:[%s166 + $0x8] sm:$0xf]
      %v177 = vld [vmem:[%s166 + $0xc] sm:$0xf]
      %v178 = vld [vmem:[%s166 + $0x10] sm:$0xf]
      %v179 = vld [vmem:[%s166 + $0x14] sm:$0xf]
      %v180 = vld [vmem:[%s166 + $0x18] sm:$0xf]
      %v181 = vld [vmem:[%s166 + $0x1c] sm:$0xf]
      %v182 = vld [vmem:[%s166 + $0x20] sm:$0xf]
      %v183 = vld [vmem:[%s166 + $0x24] sm:$0xf]
      %v184 = vld [vmem:[%s166 + $0x28] sm:$0xf]
      %v185 = vld [vmem:[%s166 + $0x2c] sm:$0xf]
      %v186 = vld [vmem:[%s166 + $0x30] sm:$0xf]
      %v187 = vld [vmem:[%s166 + $0x34] sm:$0xf]
      %v188 = vld [vmem:[%s166 + $0x38] sm:$0xf]
      %v189 = vld [vmem:[%s166 + $0x3c] sm:$0xf]
      %v190 = vld [vmem:[%s166 + $0x40] sm:$0xf]
      %v191 = vld [vmem:[%s166 + $0x44] sm:$0xf]
      %v192 = vld [vmem:[%s166 + $0x48] sm:$0xf]
      %v193 = vld [vmem:[%s166 + $0x4c] sm:$0xf]
      %v194 = vld [vmem:[%s166 + $0x50] sm:$0xf]
      %v195 = vld [vmem:[%s166 + $0x54] sm:$0xf]
      %v196 = vld [vmem:[%s166 + $0x58] sm:$0xf]
      %v197 = vld [vmem:[%s166 + $0x5c] sm:$0xf]
      %v198 = vld [vmem:[%s166 + $0x60] sm:$0xf]
      %v199 = vld [vmem:[%s166 + $0x64] sm:$0xf]
      %v200 = vld [vmem:[%s166 + $0x68] sm:$0xf]
      %v201 = vld [vmem:[%s166 + $0x6c] sm:$0xf]
      %v202 = vld [vmem:[%s166 + $0x70] sm:$0xf]
      %v203 = vld [vmem:[%s166 + $0x74] sm:$0xf]
      %v204 = vld [vmem:[%s166 + $0x78] sm:$0xf]
      %v205 = vld [vmem:[%s166 + $0x7c] sm:$0xf]
      %v206 = vunpack.c.l.bf16 %v174
      %v207 = vunpack.c.l.bf16 %v175
      %v208 = vunpack.c.l.bf16 %v176
      %v209 = vunpack.c.l.bf16 %v177
      %v210 = vunpack.c.l.bf16 %v178
      %v211 = vunpack.c.l.bf16 %v179
      %v212 = vunpack.c.l.bf16 %v180
      %v213 = vunpack.c.l.bf16 %v181
      %v214 = vunpack.c.l.bf16 %v182
      %v215 = vunpack.c.l.bf16 %v183
      %v216 = vunpack.c.l.bf16 %v184
      %v217 = vunpack.c.l.bf16 %v185
      %v218 = vunpack.c.l.bf16 %v186
      %v219 = vunpack.c.l.bf16 %v187
      %v220 = vunpack.c.l.bf16 %v188
      %v221 = vunpack.c.l.bf16 %v189
      %v222 = vunpack.c.l.bf16 %v190
      %v223 = vunpack.c.l.bf16 %v191
      %v224 = vunpack.c.l.bf16 %v192
      %v225 = vunpack.c.l.bf16 %v193
      %v226 = vunpack.c.l.bf16 %v194
      %v227 = vunpack.c.l.bf16 %v195
      %v228 = vunpack.c.l.bf16 %v196
      %v229 = vunpack.c.l.bf16 %v197
      %v230 = vunpack.c.l.bf16 %v198
      %v231 = vunpack.c.l.bf16 %v199
      %v232 = vunpack.c.l.bf16 %v200
      %v233 = vunpack.c.l.bf16 %v201
      %v234 = vunpack.c.l.bf16 %v202
      %v235 = vunpack.c.l.bf16 %v203
      %v236 = vunpack.c.l.bf16 %v204
      %v237 = vunpack.c.l.bf16 %v205
      %v238 = vld [vmem:[%s1] sm:$0x1]
      %v240 = vlaneseq
      %v241 = vshrl.u32 %v240, 7
      %v242 = vsub.s32 0, %v241
      %v243 = vrot.slane %v238, %v242
      %v245 = vmul.f32 %v206, %v243
      %v246 = vmul.f32 %v207, %v243
      %v247 = vmul.f32 %v208, %v243
      %v248 = vmul.f32 %v209, %v243
      %v249 = vmul.f32 %v210, %v243
      %v250 = vmul.f32 %v211, %v243
      %v251 = vmul.f32 %v212, %v243
      %v252 = vmul.f32 %v213, %v243
      %v253 = vmul.f32 %v214, %v243
      %v254 = vmul.f32 %v215, %v243
      %v255 = vmul.f32 %v216, %v243
      %v256 = vmul.f32 %v217, %v243
      %v257 = vmul.f32 %v218, %v243
      %v258 = vmul.f32 %v219, %v243
      %v259 = vmul.f32 %v220, %v243
      %v260 = vmul.f32 %v221, %v243
      %v261 = vmul.f32 %v222, %v243
      %v262 = vmul.f32 %v223, %v243
      %v263 = vmul.f32 %v224, %v243
      %v264 = vmul.f32 %v225, %v243
      %v265 = vmul.f32 %v226, %v243
      %v266 = vmul.f32 %v227, %v243
      %v267 = vmul.f32 %v228, %v243
      %v268 = vmul.f32 %v229, %v243
      %v269 = vmul.f32 %v230, %v243
      %v270 = vmul.f32 %v231, %v243
      %v271 = vmul.f32 %v232, %v243
      %v272 = vmul.f32 %v233, %v243
      %v273 = vmul.f32 %v234, %v243
      %v274 = vmul.f32 %v235, %v243
      %v275 = vmul.f32 %v236, %v243
      %v276 = vmul.f32 %v237, %v243
      %v277 = vld [vmem:[%s2] sm:$0x1]
      %v279 = vlaneseq
      %v280 = vshrl.u32 %v279, 7
      %v281 = vsub.s32 0, %v280
      %v282 = vrot.slane %v277, %v281
      %v284 = vadd.f32 %v245, %v282
      %v285 = vadd.f32 %v246, %v282
      %v286 = vadd.f32 %v247, %v282
      %v287 = vadd.f32 %v248, %v282
      %v288 = vadd.f32 %v249, %v282
      %v289 = vadd.f32 %v250, %v282
      %v290 = vadd.f32 %v251, %v282
      %v291 = vadd.f32 %v252, %v282
      %v292 = vadd.f32 %v253, %v282
      %v293 = vadd.f32 %v254, %v282
      %v294 = vadd.f32 %v255, %v282
      %v295 = vadd.f32 %v256, %v282
      %v296 = vadd.f32 %v257, %v282
      %v297 = vadd.f32 %v258, %v282
      %v298 = vadd.f32 %v259, %v282
      %v299 = vadd.f32 %v260, %v282
      %v300 = vadd.f32 %v261, %v282
      %v301 = vadd.f32 %v262, %v282
      %v302 = vadd.f32 %v263, %v282
      %v303 = vadd.f32 %v264, %v282
      %v304 = vadd.f32 %v265, %v282
      %v305 = vadd.f32 %v266, %v282
      %v306 = vadd.f32 %v267, %v282
      %v307 = vadd.f32 %v268, %v282
      %v308 = vadd.f32 %v269, %v282
      %v309 = vadd.f32 %v270, %v282
      %v310 = vadd.f32 %v271, %v282
      %v311 = vadd.f32 %v272, %v282
      %v312 = vadd.f32 %v273, %v282
      %v313 = vadd.f32 %v274, %v282
      %v314 = vadd.f32 %v275, %v282
      %v315 = vadd.f32 %v276, %v282
      %v316 = vmax.f32 %v284, 0.0
      %v317 = vmax.f32 %v285, 0.0
      %v318 = vmax.f32 %v286, 0.0
      %v319 = vmax.f32 %v287, 0.0
      %v320 = vmax.f32 %v288, 0.0
      %v321 = vmax.f32 %v289, 0.0
      %v322 = vmax.f32 %v290, 0.0
      %v323 = vmax.f32 %v291, 0.0
      %v324 = vmax.f32 %v292, 0.0
      %v325 = vmax.f32 %v293, 0.0
      %v326 = vmax.f32 %v294, 0.0
      %v327 = vmax.f32 %v295, 0.0
      %v328 = vmax.f32 %v296, 0.0
      %v329 = vmax.f32 %v297, 0.0
      %v330 = vmax.f32 %v298, 0.0
      %v331 = vmax.f32 %v299, 0.0
      %v332 = vmax.f32 %v300, 0.0
      %v333 = vmax.f32 %v301, 0.0
      %v334 = vmax.f32 %v302, 0.0
      %v335 = vmax.f32 %v303, 0.0
      %v336 = vmax.f32 %v304, 0.0
      %v337 = vmax.f32 %v305, 0.0
      %v338 = vmax.f32 %v306, 0.0
      %v339 = vmax.f32 %v307, 0.0
      %v340 = vmax.f32 %v308, 0.0
      %v341 = vmax.f32 %v309, 0.0
      %v342 = vmax.f32 %v310, 0.0
      %v343 = vmax.f32 %v311, 0.0
      %v344 = vmax.f32 %v312, 0.0
      %v345 = vmax.f32 %v313, 0.0
      %v346 = vmax.f32 %v314, 0.0
      %v347 = vmax.f32 %v315, 0.0
      %348 = vst [vmem:[%s172] sm:$0xff] %v316
      %349 = vst [vmem:[%s172 + $0x8] sm:$0xff] %v317
      %350 = vst [vmem:[%s172 + $0x10] sm:$0xff] %v318
      %351 = vst [vmem:[%s172 + $0x18] sm:$0xff] %v319
      %352 = vst [vmem:[%s172 + $0x20] sm:$0xff] %v320
      %353 = vst [vmem:[%s172 + $0x28] sm:$0xff] %v321
      %354 = vst [vmem:[%s172 + $0x30] sm:$0xff] %v322
      %355 = vst [vmem:[%s172 + $0x38] sm:$0xff] %v323
      %356 = vst [vmem:[%s172 + $0x40] sm:$0xff] %v324
      %357 = vst [vmem:[%s172 + $0x48] sm:$0xff] %v325
      %358 = vst [vmem:[%s172 + $0x50] sm:$0xff] %v326
      %359 = vst [vmem:[%s172 + $0x58] sm:$0xff] %v327
      %360 = vst [vmem:[%s172 + $0x60] sm:$0xff] %v328
      %361 = vst [vmem:[%s172 + $0x68] sm:$0xff] %v329
      %362 = vst [vmem:[%s172 + $0x70] sm:$0xff] %v330
      %363 = vst [vmem:[%s172 + $0x78] sm:$0xff] %v331
      %364 = vst [vmem:[%s172 + $0x80] sm:$0xff] %v332
      %365 = vst [vmem:[%s172 + $0x88] sm:$0xff] %v333
      %366 = vst [vmem:[%s172 + $0x90] sm:$0xff] %v334
      %367 = vst [vmem:[%s172 + $0x98] sm:$0xff] %v335
      %368 = vst [vmem:[%s172 + $0xa0] sm:$0xff] %v336
      %369 = vst [vmem:[%s172 + $0xa8] sm:$0xff] %v337
      %370 = vst [vmem:[%s172 + $0xb0] sm:$0xff] %v338
      %371 = vst [vmem:[%s172 + $0xb8] sm:$0xff] %v339
      %372 = vst [vmem:[%s172 + $0xc0] sm:$0xff] %v340
      %373 = vst [vmem:[%s172 + $0xc8] sm:$0xff] %v341
      %374 = vst [vmem:[%s172 + $0xd0] sm:$0xff] %v342
      %375 = vst [vmem:[%s172 + $0xd8] sm:$0xff] %v343
      %376 = vst [vmem:[%s172 + $0xe0] sm:$0xff] %v344
      %377 = vst [vmem:[%s172 + $0xe8] sm:$0xff] %v345
      %378 = vst [vmem:[%s172 + $0xf0] sm:$0xff] %v346
      %379 = vst [vmem:[%s172 + $0xf8] sm:$0xff] %v347
      %s380 = smul.u32 32, %s14
      %p381 = scmp.lt.s32.totalorder %s380, 63
      %s382 = scalar_select %p381, %s380, 63
      %s383 = smul.addr %s382, 8
      %s384 = scalar_lea.vmem %s3, %s383
      // Predicated region
      $region33: #{up_forward.7} parent=31 // pred_check
        %p385 = pneg %p100
      $region34: #{up_forward.7} parent=31 // pred_check_branch
        %387 = sbr.rel (%p385) target = $region36
      $region35: #{up_forward.7} parent=31 // pred_region
        %s388 = smul.u32 32, %s14
      $region36: #{up_forward.7} parent=31 // pred_fallthru
        _
    $region32: #{up_forward.7} parent=5 // pred_fallthru
      _
    %p389 = scmp.le.s32.totalorder 2, %s9
    // Predicated region
    $region37: #{up_forward.7} parent=5 // pred_check
      %p390 = pneg %p389
    $region38: #{up_forward.7} parent=5 // pred_check_branch
      %392 = sbr.rel (%p390) target = $region40
    $region39: #{up_forward.7} parent=5 // pred_region
      %s393 = ssub.s32 %s9, 2
      // Predicated region
      $region41: #{up_forward.7} parent=39 // pred_check
        %p394 = pneg %p106
      $region42: #{up_forward.7} parent=39 // pred_check_branch
        %396 = sbr.rel (%p394) target = $region44
      $region43: #{up_forward.7} parent=39 // pred_region
        %s397 = smul.u32 32, %s15
        %p398 = scmp.lt.s32.totalorder %s397, 63
        %s399 = scalar_select %p398, %s397, 63
        %s400 = smul.addr %s399, 8
        %s401 = scalar_lea.vmem %s3, %s400
      $region44: #{up_forward.7} parent=39 // pred_fallthru
        _
    $region40: #{up_forward.7} parent=5 // pred_fallthru
      _
  $region6: #{up_forward.7} parent=0 // loop_footer
    %s13 = sadd.s32 1, %s9
  $region7: #{up_forward.7} parent=0 // loop_footer_branch
    %8 = sbr.rel target = $region3
  $region8: #{up_forward.7} parent=0 // loop_exit
    _

</llo_original>
